<compile_context>
chip_gen: v7x
topology: tpu7x:2x2x1
jax: 0.10.0
libtpu: 0.0.40
codegen_flags: <defaults>
</compile_context>

<pallas_src>
import functools

import jax
import jax.numpy as jnp
from jax.experimental import pallas as pl
from jax.experimental.pallas import tpu as pltpu

NUM_SUBNETWORKS = 3   # subnetwork=3
NUM_TFCM_LAYERS = 6   # tfcm_layer=6

# Per-layer parameter-table column order (channels on rows of the table):
#   0:B1  1:A1  2:DW0(shift 2d)  3:DW1(shift d)  4:DW2(center)  5:BDW  6:A2  7:B2
_NVEC = 8


def _mff_kernel(x_ref, wbd_ref, vec_ref, wf_ref, out_ref,
                *, n_sub, n_layers, B, C, T, F_):
    TF = T * F_
    SC = n_sub * C
    LW = B * TF                                     # total lane width

    # Pack the batch along the lane axis: (C, B*TF).
    xb = jnp.concatenate([x_ref[b] for b in range(B)], axis=1)
    # Stack the parallel subnetwork branches along the channel (sublane) axis.
    h = jnp.concatenate([xb] * n_sub, axis=0)       # (SC, B*TF)

    # Hoisted within-batch lane index for the causal-shift masks.
    lane_idx = jax.lax.broadcasted_iota(jnp.int32, (SC, LW), 1)
    lane_mod = lane_idx % TF                        # TF is a power of two here

    mask_cache = {}

    def shift_time(v, s):
        # Causal shift by s frames: lane roll by s*F_ (XLU slot) + masked
        # select that also kills any cross-batch wraparound at lane boundaries.
        k = s * F_
        if k not in mask_cache:
            mask_cache[k] = lane_mod >= k
        rolled = pltpu.roll(v, shift=k, axis=1)
        return jnp.where(mask_cache[k], rolled, 0.0)

    def col(l, j, rows=SC):
        # Per-channel parameter column, broadcastable over lanes: (rows, 1).
        c = l * _NVEC + j
        return vec_ref[0:rows, c:c + 1]

    def prelu(v, a):
        return jnp.where(v >= 0, v, v * a)

    for l in range(n_layers):                       # TFCM stack (unrolled)
        d = 2 ** l                                  # dilation
        # Pointwise conv 1: block-diagonal over branches -> one MXU matmul.
        y = jnp.dot(wbd_ref[l, 0], h, preferred_element_type=jnp.float32)
        y = prelu(y + col(l, 0), col(l, 1))
        # Causal dilated depthwise conv over time, kernel=3, taps at (2d, d, 0).
        # Taps with shift >= T are identically zero -> dropped at trace time.
        acc = y * col(l, 4)
        if d < T:
            acc = acc + shift_time(y, d) * col(l, 3)
        if 2 * d < T:
            acc = acc + shift_time(y, 2 * d) * col(l, 2)
        y = prelu(acc + col(l, 5), col(l, 6))
        # Pointwise conv 2 (block-diagonal) + residual.
        y = jnp.dot(wbd_ref[l, 1], y, preferred_element_type=jnp.float32)
        h = h + y + col(l, 7)

    # Sum-fuse the branch outputs (static, sublane-aligned slices).
    fused = h[0:C]
    for s in range(1, n_sub):
        fused = fused + h[s * C:(s + 1) * C]
    out = jnp.dot(wf_ref[...], fused, preferred_element_type=jnp.float32)
    out = out + vec_ref[0:C, n_layers * _NVEC:n_layers * _NVEC + 1]   # final bias

    for b in range(B):                              # lane-dense (C, TF) stores
        out_ref[b] = out[:, b * TF:(b + 1) * TF].astype(out_ref.dtype)


def pack_params(params, n_sub=NUM_SUBNETWORKS, n_layers=NUM_TFCM_LAYERS):
    """One-time repack: block-diagonal pointwise weights (one matmul per layer)
    and a single lane-major per-channel parameter table (one compact DMA)."""
    W1, B1, A1, DW, BDW, A2, W2, B2, WF, BF = [
        jnp.asarray(p, jnp.float32) for p in params]
    S, L, C, _ = W1.shape
    SC = S * C

    def blockdiag_t(W):
        # (S, L, C_in, C_out) -> (L, SC, SC) block-diag of per-branch W^T.
        out = jnp.zeros((L, SC, SC), jnp.float32)
        for s in range(S):
            out = out.at[:, s * C:(s + 1) * C, s * C:(s + 1) * C].set(
                jnp.transpose(W[s], (0, 2, 1)))
        return out

    wbd = jnp.stack([blockdiag_t(W1), blockdiag_t(W2)], axis=1)  # (L,2,SC,SC)

    def chan_mat(v):
        # (S, L, C) -> (SC, L): row s*C + c holds v[s, :, c].
        return jnp.transpose(v, (0, 2, 1)).reshape(SC, L)

    cols = [chan_mat(B1), chan_mat(A1),
            chan_mat(DW[:, :, 0]), chan_mat(DW[:, :, 1]), chan_mat(DW[:, :, 2]),
            chan_mat(BDW), chan_mat(A2), chan_mat(B2)]
    vec = jnp.stack(cols, axis=-1).reshape(SC, L * _NVEC)        # (SC, 8L)
    bf_col = jnp.zeros((SC, 1), jnp.float32).at[0:C, 0].set(BF.reshape(C))
    vec = jnp.concatenate([vec, bf_col], axis=1)                 # (SC, 8L+1)

    return wbd, vec, WF.T                                        # WF^T: (C, C)


@jax.jit
def mff_forward_pallas(x_nchw, packed):
    """x_nchw: (B, C, T, F) float32.  `packed` = pack_params(params)."""
    x = x_nchw.astype(jnp.float32)
    B, C, T, F_ = x.shape
    TF = T * F_
    SC = NUM_SUBNETWORKS * C
    wbd, vec, wft = packed

    # Free reshape (merges contiguous trailing dims) — channels on sublanes,
    # time*freq on lanes; no HBM transpose anywhere.
    x2 = x.reshape(B, C, TF)

    kernel = functools.partial(
        _mff_kernel, n_sub=NUM_SUBNETWORKS, n_layers=NUM_TFCM_LAYERS,
        B=B, C=C, T=T, F_=F_)

    flops = int(2 * (NUM_TFCM_LAYERS * 2 * SC * SC + C * C) * B * TF)
    bytes_accessed = int(4 * (2 * x2.size + wbd.size + vec.size + wft.size))

    out = pl.pallas_call(
        kernel,
        out_shape=jax.ShapeDtypeStruct((B, C, TF), jnp.float32),
        grid=(1,),
        in_specs=[
            pl.BlockSpec((B, C, TF), lambda i: (0, 0, 0)),
            pl.BlockSpec(wbd.shape, lambda i: (0, 0, 0, 0)),
            pl.BlockSpec(vec.shape, lambda i: (0, 0)),
            pl.BlockSpec(wft.shape, lambda i: (0, 0)),
        ],
        out_specs=pl.BlockSpec((B, C, TF), lambda i: (0, 0, 0)),
        compiler_params=pltpu.CompilerParams(
            dimension_semantics=("arbitrary",)),
        cost_estimate=pl.CostEstimate(
            flops=flops, transcendentals=0, bytes_accessed=bytes_accessed),
    )(x2, wbd, vec, wft)
    return out.reshape(B, C, T, F_)                 # free reshape back to NCHW


def mff_reference(x_nchw, params):
    """Pure-JAX reference with identical semantics (for verification)."""
    x = jnp.transpose(x_nchw, (0, 2, 3, 1)).astype(jnp.float32)
    W1, B1, A1, DW, BDW, A2, W2, B2, WF, BF = params
    B, T, F_, C = x.shape

    def prelu(v, a):
        return jnp.where(v >= 0, v, v * a)

    def shift(v, s):
        if s == 0:
            return v
        if s >= T:
            return jnp.zeros_like(v)
        return jnp.concatenate(
            [jnp.zeros((B, s, F_, C), v.dtype), v[:, :T - s]], axis=1)

    acc = jnp.zeros_like(x)
    for s in range(NUM_SUBNETWORKS):
        h = x
        for l in range(NUM_TFCM_LAYERS):
            d = 2 ** l
            res = h
            y = prelu(jnp.einsum('btfc,cd->btfd', h, W1[s, l]) + B1[s, l],
                      A1[s, l])
            y = (shift(y, 2 * d) * DW[s, l, 0]
                 + shift(y, d) * DW[s, l, 1]
                 + y * DW[s, l, 2]) + BDW[s, l]
            y = prelu(y, A2[s, l])
            y = jnp.einsum('btfc,cd->btfd', y, W2[s, l]) + B2[s, l]
            h = res + y
        acc = acc + h
    out = jnp.einsum('btfc,cd->btfd', acc, WF) + BF[0]
    return jnp.transpose(out, (0, 3, 1, 2))


def make_params(key, C):
    S, L = NUM_SUBNETWORKS, NUM_TFCM_LAYERS
    ks = jax.random.split(key, 10)
    scale = 0.1
    W1 = scale * jax.random.normal(ks[0], (S, L, C, C), jnp.float32)
    B1 = scale * jax.random.normal(ks[1], (S, L, C), jnp.float32)
    A1 = jnp.full((S, L, C), 0.25, jnp.float32)          # PReLU slopes
    DW = scale * jax.random.normal(ks[2], (S, L, 3, C), jnp.float32)
    BDW = scale * jax.random.normal(ks[3], (S, L, C), jnp.float32)
    A2 = jnp.full((S, L, C), 0.25, jnp.float32)
    W2 = scale * jax.random.normal(ks[4], (S, L, C, C), jnp.float32)
    B2 = scale * jax.random.normal(ks[5], (S, L, C), jnp.float32)
    WF = scale * jax.random.normal(ks[6], (C, C), jnp.float32)
    BF = scale * jax.random.normal(ks[7], (1, C), jnp.float32)
    return (W1, B1, A1, DW, BDW, A2, W2, B2, WF, BF)


if __name__ == "__main__":
    key = jax.random.PRNGKey(0)
    kx, kp = jax.random.split(key)

    B, C, T, F_ = 2, 16, 8, 16           # (B, C, T, F) spectrogram features
    x = jax.random.normal(kx, (B, C, T, F_), jnp.float32)
    params = make_params(kp, C)

    packed = pack_params(params)         # one-time, outside the hot path
    out = mff_forward_pallas(x, packed)
    out = jax.block_until_ready(out)

    ref = mff_reference(x, params)
    assert out.shape == (B, C, T, F_)
    assert jnp.allclose(out, ref, rtol=1e-4, atol=1e-4), "mismatch vs reference"

    print("KERNEL_OK")
</pallas_src>

<mosaic_0001>
module attributes {stable_mosaic.version = 11 : i64} {
  func.func @_mff_kernel(%arg0: i32, %arg1: memref<2x16x128xf32, #tpu.memory_space<vmem>>, %arg2: memref<6x2x48x48xf32, #tpu.memory_space<vmem>>, %arg3: memref<48x49xf32, #tpu.memory_space<vmem>>, %arg4: memref<16x16xf32, #tpu.memory_space<vmem>>, %arg5: memref<2x16x128xf32, #tpu.memory_space<vmem>>) attributes {dimension_semantics = [#tpu.dimension_semantics<arbitrary>], iteration_bounds = array<i64: 1>, scalar_prefetch = 0 : i64, scratch_operands = 0 : i64, tpu.core_type = #tpu.core_type<tc>, window_params = [{pipeline_mode = #tpu.pipeline_mode<synchronous>, transform_indices = @transform_0, window_bounds = array<i64: 2, 16, 128>}, {pipeline_mode = #tpu.pipeline_mode<synchronous>, transform_indices = @transform_1, window_bounds = array<i64: 6, 2, 48, 48>}, {pipeline_mode = #tpu.pipeline_mode<synchronous>, transform_indices = @transform_2, window_bounds = array<i64: 48, 49>}, {pipeline_mode = #tpu.pipeline_mode<synchronous>, transform_indices = @transform_3, window_bounds = array<i64: 16, 16>}, {pipeline_mode = #tpu.pipeline_mode<synchronous>, transform_indices = @transform_4, window_bounds = array<i64: 2, 16, 128>}]} {
    %c0 = arith.constant 0 : index
    %c0_0 = arith.constant 0 : index
    %c0_1 = arith.constant 0 : index
    %0 = vector.load %arg1[%c0, %c0_0, %c0_1] : memref<2x16x128xf32, #tpu.memory_space<vmem>>, vector<1x16x128xf32>
    %1 = vector.shape_cast %0 : vector<1x16x128xf32> to vector<16x128xf32>
    %c1 = arith.constant 1 : index
    %c0_2 = arith.constant 0 : index
    %c0_3 = arith.constant 0 : index
    %2 = vector.load %arg1[%c1, %c0_2, %c0_3] : memref<2x16x128xf32, #tpu.memory_space<vmem>>, vector<1x16x128xf32>
    %3 = vector.shape_cast %2 : vector<1x16x128xf32> to vector<16x128xf32>
    %4 = tpu.concatenate %1, %3 in 1 : vector<16x128xf32>, vector<16x128xf32> -> vector<16x256xf32>
    %5 = tpu.concatenate %4, %4, %4 in 0 : vector<16x256xf32>, vector<16x256xf32>, vector<16x256xf32> -> vector<48x256xf32>
    %6 = tpu.iota {dimensions = array<i32: 1>} : vector<48x256xi32>
    %c128_i32 = arith.constant 128 : i32
    %c0_i32 = arith.constant 0 : i32
    %7 = arith.cmpi eq, %c128_i32, %c0_i32 : i32
    %c1_i32 = arith.constant 1 : i32
    %8 = arith.select %7, %c1_i32, %c128_i32 : i32
    %9 = vector.broadcast %8 : i32 to vector<48x256xi32>
    %10 = arith.remsi %6, %9 : vector<48x256xi32>
    %c0_i32_4 = arith.constant 0 : i32
    %11 = vector.broadcast %c0_i32_4 : i32 to vector<48x256xi32>
    %12 = arith.cmpi ne, %10, %11 : vector<48x256xi32>
    %c0_i32_5 = arith.constant 0 : i32
    %13 = vector.broadcast %c0_i32_5 : i32 to vector<48x256xi32>
    %14 = arith.cmpi slt, %10, %13 : vector<48x256xi32>
    %c0_i32_6 = arith.constant 0 : i32
    %15 = arith.cmpi slt, %8, %c0_i32_6 : i32
    %16 = vector.broadcast %15 : i1 to vector<48x256xi1>
    %17 = vector.broadcast %16 : vector<48x256xi1> to vector<48x256xi1>
    %18 = arith.xori %14, %17 : vector<48x256xi1>
    %19 = arith.andi %18, %12 : vector<48x256xi1>
    %20 = vector.broadcast %8 : i32 to vector<48x256xi32>
    %21 = arith.addi %10, %20 : vector<48x256xi32>
    %22 = arith.select %19, %21, %10 : vector<48x256xi1>, vector<48x256xi32>
    %c0_7 = arith.constant 0 : index
    %c0_8 = arith.constant 0 : index
    %c0_9 = arith.constant 0 : index
    %c0_10 = arith.constant 0 : index
    %23 = vector.load %arg2[%c0_7, %c0_8, %c0_9, %c0_10] : memref<6x2x48x48xf32, #tpu.memory_space<vmem>>, vector<1x1x48x48xf32>
    %24 = vector.shape_cast %23 : vector<1x1x48x48xf32> to vector<48x48xf32>
    %cst = arith.constant dense<0.000000e+00> : vector<48x256xf32>
    %25 = tpu.matmul %24, %5, %cst {dimension_numbers = #tpu.dot_dimension_numbers<[1], [0], [0], [1], [0, 0, 1, 1], [], []>} : vector<48x48xf32>, vector<48x256xf32>, vector<48x256xf32> -> vector<48x256xf32>
    %c0_11 = arith.constant 0 : index
    %c0_12 = arith.constant 0 : index
    %26 = vector.load %arg3[%c0_11, %c0_12] : memref<48x49xf32, #tpu.memory_space<vmem>>, vector<48x1xf32>
    %27 = vector.broadcast %26 : vector<48x1xf32> to vector<48x256xf32>
    %28 = arith.addf %25, %27 : vector<48x256xf32>
    %c0_13 = arith.constant 0 : index
    %c1_14 = arith.constant 1 : index
    %29 = vector.load %arg3[%c0_13, %c1_14] : memref<48x49xf32, #tpu.memory_space<vmem>>, vector<48x1xf32>
    %cst_15 = arith.constant 0.000000e+00 : f32
    %30 = vector.broadcast %cst_15 : f32 to vector<48x256xf32>
    %31 = arith.cmpf oge, %28, %30 : vector<48x256xf32>
    %32 = vector.broadcast %29 : vector<48x1xf32> to vector<48x256xf32>
    %33 = arith.mulf %28, %32 : vector<48x256xf32>
    %34 = arith.select %31, %28, %33 : vector<48x256xi1>, vector<48x256xf32>
    %c0_16 = arith.constant 0 : index
    %c4 = arith.constant 4 : index
    %35 = vector.load %arg3[%c0_16, %c4] : memref<48x49xf32, #tpu.memory_space<vmem>>, vector<48x1xf32>
    %36 = vector.broadcast %35 : vector<48x1xf32> to vector<48x256xf32>
    %37 = arith.mulf %34, %36 : vector<48x256xf32>
    %c16_i32 = arith.constant 16 : i32
    %38 = vector.broadcast %c16_i32 : i32 to vector<48x256xi32>
    %39 = arith.cmpi sge, %22, %38 : vector<48x256xi32>
    %c16_i32_17 = arith.constant 16 : i32
    %40 = tpu.dynamic_rotate %34 by %c16_i32_17 dim 1 : vector<48x256xf32>, i32 -> vector<48x256xf32>
    %cst_18 = arith.constant 0.000000e+00 : f32
    %41 = vector.broadcast %cst_18 : f32 to vector<48x256xf32>
    %42 = arith.select %39, %40, %41 : vector<48x256xi1>, vector<48x256xf32>
    %c0_19 = arith.constant 0 : index
    %c3 = arith.constant 3 : index
    %43 = vector.load %arg3[%c0_19, %c3] : memref<48x49xf32, #tpu.memory_space<vmem>>, vector<48x1xf32>
    %44 = vector.broadcast %43 : vector<48x1xf32> to vector<48x256xf32>
    %45 = arith.mulf %42, %44 : vector<48x256xf32>
    %46 = arith.addf %37, %45 : vector<48x256xf32>
    %c32_i32 = arith.constant 32 : i32
    %47 = vector.broadcast %c32_i32 : i32 to vector<48x256xi32>
    %48 = arith.cmpi sge, %22, %47 : vector<48x256xi32>
    %c32_i32_20 = arith.constant 32 : i32
    %49 = tpu.dynamic_rotate %34 by %c32_i32_20 dim 1 : vector<48x256xf32>, i32 -> vector<48x256xf32>
    %cst_21 = arith.constant 0.000000e+00 : f32
    %50 = vector.broadcast %cst_21 : f32 to vector<48x256xf32>
    %51 = arith.select %48, %49, %50 : vector<48x256xi1>, vector<48x256xf32>
    %c0_22 = arith.constant 0 : index
    %c2 = arith.constant 2 : index
    %52 = vector.load %arg3[%c0_22, %c2] : memref<48x49xf32, #tpu.memory_space<vmem>>, vector<48x1xf32>
    %53 = vector.broadcast %52 : vector<48x1xf32> to vector<48x256xf32>
    %54 = arith.mulf %51, %53 : vector<48x256xf32>
    %55 = arith.addf %46, %54 : vector<48x256xf32>
    %c0_23 = arith.constant 0 : index
    %c5 = arith.constant 5 : index
    %56 = vector.load %arg3[%c0_23, %c5] : memref<48x49xf32, #tpu.memory_space<vmem>>, vector<48x1xf32>
    %57 = vector.broadcast %56 : vector<48x1xf32> to vector<48x256xf32>
    %58 = arith.addf %55, %57 : vector<48x256xf32>
    %c0_24 = arith.constant 0 : index
    %c6 = arith.constant 6 : index
    %59 = vector.load %arg3[%c0_24, %c6] : memref<48x49xf32, #tpu.memory_space<vmem>>, vector<48x1xf32>
    %cst_25 = arith.constant 0.000000e+00 : f32
    %60 = vector.broadcast %cst_25 : f32 to vector<48x256xf32>
    %61 = arith.cmpf oge, %58, %60 : vector<48x256xf32>
    %62 = vector.broadcast %59 : vector<48x1xf32> to vector<48x256xf32>
    %63 = arith.mulf %58, %62 : vector<48x256xf32>
    %64 = arith.select %61, %58, %63 : vector<48x256xi1>, vector<48x256xf32>
    %c0_26 = arith.constant 0 : index
    %c1_27 = arith.constant 1 : index
    %c0_28 = arith.constant 0 : index
    %c0_29 = arith.constant 0 : index
    %65 = vector.load %arg2[%c0_26, %c1_27, %c0_28, %c0_29] : memref<6x2x48x48xf32, #tpu.memory_space<vmem>>, vector<1x1x48x48xf32>
    %66 = vector.shape_cast %65 : vector<1x1x48x48xf32> to vector<48x48xf32>
    %cst_30 = arith.constant dense<0.000000e+00> : vector<48x256xf32>
    %67 = tpu.matmul %66, %64, %cst_30 {dimension_numbers = #tpu.dot_dimension_numbers<[1], [0], [0], [1], [0, 0, 1, 1], [], []>} : vector<48x48xf32>, vector<48x256xf32>, vector<48x256xf32> -> vector<48x256xf32>
    %68 = arith.addf %5, %67 : vector<48x256xf32>
    %c0_31 = arith.constant 0 : index
    %c7 = arith.constant 7 : index
    %69 = vector.load %arg3[%c0_31, %c7] : memref<48x49xf32, #tpu.memory_space<vmem>>, vector<48x1xf32>
    %70 = vector.broadcast %69 : vector<48x1xf32> to vector<48x256xf32>
    %71 = arith.addf %68, %70 : vector<48x256xf32>
    %c1_32 = arith.constant 1 : index
    %c0_33 = arith.constant 0 : index
    %c0_34 = arith.constant 0 : index
    %c0_35 = arith.constant 0 : index
    %72 = vector.load %arg2[%c1_32, %c0_33, %c0_34, %c0_35] : memref<6x2x48x48xf32, #tpu.memory_space<vmem>>, vector<1x1x48x48xf32>
    %73 = vector.shape_cast %72 : vector<1x1x48x48xf32> to vector<48x48xf32>
    %cst_36 = arith.constant dense<0.000000e+00> : vector<48x256xf32>
    %74 = tpu.matmul %73, %71, %cst_36 {dimension_numbers = #tpu.dot_dimension_numbers<[1], [0], [0], [1], [0, 0, 1, 1], [], []>} : vector<48x48xf32>, vector<48x256xf32>, vector<48x256xf32> -> vector<48x256xf32>
    %c0_37 = arith.constant 0 : index
    %c8 = arith.constant 8 : index
    %75 = vector.load %arg3[%c0_37, %c8] : memref<48x49xf32, #tpu.memory_space<vmem>>, vector<48x1xf32>
    %76 = vector.broadcast %75 : vector<48x1xf32> to vector<48x256xf32>
    %77 = arith.addf %74, %76 : vector<48x256xf32>
    %c0_38 = arith.constant 0 : index
    %c9 = arith.constant 9 : index
    %78 = vector.load %arg3[%c0_38, %c9] : memref<48x49xf32, #tpu.memory_space<vmem>>, vector<48x1xf32>
    %cst_39 = arith.constant 0.000000e+00 : f32
    %79 = vector.broadcast %cst_39 : f32 to vector<48x256xf32>
    %80 = arith.cmpf oge, %77, %79 : vector<48x256xf32>
    %81 = vector.broadcast %78 : vector<48x1xf32> to vector<48x256xf32>
    %82 = arith.mulf %77, %81 : vector<48x256xf32>
    %83 = arith.select %80, %77, %82 : vector<48x256xi1>, vector<48x256xf32>
    %c0_40 = arith.constant 0 : index
    %c12 = arith.constant 12 : index
    %84 = vector.load %arg3[%c0_40, %c12] : memref<48x49xf32, #tpu.memory_space<vmem>>, vector<48x1xf32>
    %85 = vector.broadcast %84 : vector<48x1xf32> to vector<48x256xf32>
    %86 = arith.mulf %83, %85 : vector<48x256xf32>
    %c32_i32_41 = arith.constant 32 : i32
    %87 = tpu.dynamic_rotate %83 by %c32_i32_41 dim 1 : vector<48x256xf32>, i32 -> vector<48x256xf32>
    %cst_42 = arith.constant 0.000000e+00 : f32
    %88 = vector.broadcast %cst_42 : f32 to vector<48x256xf32>
    %89 = arith.select %48, %87, %88 : vector<48x256xi1>, vector<48x256xf32>
    %c0_43 = arith.constant 0 : index
    %c11 = arith.constant 11 : index
    %90 = vector.load %arg3[%c0_43, %c11] : memref<48x49xf32, #tpu.memory_space<vmem>>, vector<48x1xf32>
    %91 = vector.broadcast %90 : vector<48x1xf32> to vector<48x256xf32>
    %92 = arith.mulf %89, %91 : vector<48x256xf32>
    %93 = arith.addf %86, %92 : vector<48x256xf32>
    %c64_i32 = arith.constant 64 : i32
    %94 = vector.broadcast %c64_i32 : i32 to vector<48x256xi32>
    %95 = arith.cmpi sge, %22, %94 : vector<48x256xi32>
    %c64_i32_44 = arith.constant 64 : i32
    %96 = tpu.dynamic_rotate %83 by %c64_i32_44 dim 1 : vector<48x256xf32>, i32 -> vector<48x256xf32>
    %cst_45 = arith.constant 0.000000e+00 : f32
    %97 = vector.broadcast %cst_45 : f32 to vector<48x256xf32>
    %98 = arith.select %95, %96, %97 : vector<48x256xi1>, vector<48x256xf32>
    %c0_46 = arith.constant 0 : index
    %c10 = arith.constant 10 : index
    %99 = vector.load %arg3[%c0_46, %c10] : memref<48x49xf32, #tpu.memory_space<vmem>>, vector<48x1xf32>
    %100 = vector.broadcast %99 : vector<48x1xf32> to vector<48x256xf32>
    %101 = arith.mulf %98, %100 : vector<48x256xf32>
    %102 = arith.addf %93, %101 : vector<48x256xf32>
    %c0_47 = arith.constant 0 : index
    %c13 = arith.constant 13 : index
    %103 = vector.load %arg3[%c0_47, %c13] : memref<48x49xf32, #tpu.memory_space<vmem>>, vector<48x1xf32>
    %104 = vector.broadcast %103 : vector<48x1xf32> to vector<48x256xf32>
    %105 = arith.addf %102, %104 : vector<48x256xf32>
    %c0_48 = arith.constant 0 : index
    %c14 = arith.constant 14 : index
    %106 = vector.load %arg3[%c0_48, %c14] : memref<48x49xf32, #tpu.memory_space<vmem>>, vector<48x1xf32>
    %cst_49 = arith.constant 0.000000e+00 : f32
    %107 = vector.broadcast %cst_49 : f32 to vector<48x256xf32>
    %108 = arith.cmpf oge, %105, %107 : vector<48x256xf32>
    %109 = vector.broadcast %106 : vector<48x1xf32> to vector<48x256xf32>
    %110 = arith.mulf %105, %109 : vector<48x256xf32>
    %111 = arith.select %108, %105, %110 : vector<48x256xi1>, vector<48x256xf32>
    %c1_50 = arith.constant 1 : index
    %c1_51 = arith.constant 1 : index
    %c0_52 = arith.constant 0 : index
    %c0_53 = arith.constant 0 : index
    %112 = vector.load %arg2[%c1_50, %c1_51, %c0_52, %c0_53] : memref<6x2x48x48xf32, #tpu.memory_space<vmem>>, vector<1x1x48x48xf32>
    %113 = vector.shape_cast %112 : vector<1x1x48x48xf32> to vector<48x48xf32>
    %cst_54 = arith.constant dense<0.000000e+00> : vector<48x256xf32>
    %114 = tpu.matmul %113, %111, %cst_54 {dimension_numbers = #tpu.dot_dimension_numbers<[1], [0], [0], [1], [0, 0, 1, 1], [], []>} : vector<48x48xf32>, vector<48x256xf32>, vector<48x256xf32> -> vector<48x256xf32>
    %115 = arith.addf %71, %114 : vector<48x256xf32>
    %c0_55 = arith.constant 0 : index
    %c15 = arith.constant 15 : index
    %116 = vector.load %arg3[%c0_55, %c15] : memref<48x49xf32, #tpu.memory_space<vmem>>, vector<48x1xf32>
    %117 = vector.broadcast %116 : vector<48x1xf32> to vector<48x256xf32>
    %118 = arith.addf %115, %117 : vector<48x256xf32>
    %c2_56 = arith.constant 2 : index
    %c0_57 = arith.constant 0 : index
    %c0_58 = arith.constant 0 : index
    %c0_59 = arith.constant 0 : index
    %119 = vector.load %arg2[%c2_56, %c0_57, %c0_58, %c0_59] : memref<6x2x48x48xf32, #tpu.memory_space<vmem>>, vector<1x1x48x48xf32>
    %120 = vector.shape_cast %119 : vector<1x1x48x48xf32> to vector<48x48xf32>
    %cst_60 = arith.constant dense<0.000000e+00> : vector<48x256xf32>
    %121 = tpu.matmul %120, %118, %cst_60 {dimension_numbers = #tpu.dot_dimension_numbers<[1], [0], [0], [1], [0, 0, 1, 1], [], []>} : vector<48x48xf32>, vector<48x256xf32>, vector<48x256xf32> -> vector<48x256xf32>
    %c0_61 = arith.constant 0 : index
    %c16 = arith.constant 16 : index
    %122 = vector.load %arg3[%c0_61, %c16] : memref<48x49xf32, #tpu.memory_space<vmem>>, vector<48x1xf32>
    %123 = vector.broadcast %122 : vector<48x1xf32> to vector<48x256xf32>
    %124 = arith.addf %121, %123 : vector<48x256xf32>
    %c0_62 = arith.constant 0 : index
    %c17 = arith.constant 17 : index
    %125 = vector.load %arg3[%c0_62, %c17] : memref<48x49xf32, #tpu.memory_space<vmem>>, vector<48x1xf32>
    %cst_63 = arith.constant 0.000000e+00 : f32
    %126 = vector.broadcast %cst_63 : f32 to vector<48x256xf32>
    %127 = arith.cmpf oge, %124, %126 : vector<48x256xf32>
    %128 = vector.broadcast %125 : vector<48x1xf32> to vector<48x256xf32>
    %129 = arith.mulf %124, %128 : vector<48x256xf32>
    %130 = arith.select %127, %124, %129 : vector<48x256xi1>, vector<48x256xf32>
    %c0_64 = arith.constant 0 : index
    %c20 = arith.constant 20 : index
    %131 = vector.load %arg3[%c0_64, %c20] : memref<48x49xf32, #tpu.memory_space<vmem>>, vector<48x1xf32>
    %132 = vector.broadcast %131 : vector<48x1xf32> to vector<48x256xf32>
    %133 = arith.mulf %130, %132 : vector<48x256xf32>
    %c64_i32_65 = arith.constant 64 : i32
    %134 = tpu.dynamic_rotate %130 by %c64_i32_65 dim 1 : vector<48x256xf32>, i32 -> vector<48x256xf32>
    %cst_66 = arith.constant 0.000000e+00 : f32
    %135 = vector.broadcast %cst_66 : f32 to vector<48x256xf32>
    %136 = arith.select %95, %134, %135 : vector<48x256xi1>, vector<48x256xf32>
    %c0_67 = arith.constant 0 : index
    %c19 = arith.constant 19 : index
    %137 = vector.load %arg3[%c0_67, %c19] : memref<48x49xf32, #tpu.memory_space<vmem>>, vector<48x1xf32>
    %138 = vector.broadcast %137 : vector<48x1xf32> to vector<48x256xf32>
    %139 = arith.mulf %136, %138 : vector<48x256xf32>
    %140 = arith.addf %133, %139 : vector<48x256xf32>
    %c0_68 = arith.constant 0 : index
    %c21 = arith.constant 21 : index
    %141 = vector.load %arg3[%c0_68, %c21] : memref<48x49xf32, #tpu.memory_space<vmem>>, vector<48x1xf32>
    %142 = vector.broadcast %141 : vector<48x1xf32> to vector<48x256xf32>
    %143 = arith.addf %140, %142 : vector<48x256xf32>
    %c0_69 = arith.constant 0 : index
    %c22 = arith.constant 22 : index
    %144 = vector.load %arg3[%c0_69, %c22] : memref<48x49xf32, #tpu.memory_space<vmem>>, vector<48x1xf32>
    %cst_70 = arith.constant 0.000000e+00 : f32
    %145 = vector.broadcast %cst_70 : f32 to vector<48x256xf32>
    %146 = arith.cmpf oge, %143, %145 : vector<48x256xf32>
    %147 = vector.broadcast %144 : vector<48x1xf32> to vector<48x256xf32>
    %148 = arith.mulf %143, %147 : vector<48x256xf32>
    %149 = arith.select %146, %143, %148 : vector<48x256xi1>, vector<48x256xf32>
    %c2_71 = arith.constant 2 : index
    %c1_72 = arith.constant 1 : index
    %c0_73 = arith.constant 0 : index
    %c0_74 = arith.constant 0 : index
    %150 = vector.load %arg2[%c2_71, %c1_72, %c0_73, %c0_74] : memref<6x2x48x48xf32, #tpu.memory_space<vmem>>, vector<1x1x48x48xf32>
    %151 = vector.shape_cast %150 : vector<1x1x48x48xf32> to vector<48x48xf32>
    %cst_75 = arith.constant dense<0.000000e+00> : vector<48x256xf32>
    %152 = tpu.matmul %151, %149, %cst_75 {dimension_numbers = #tpu.dot_dimension_numbers<[1], [0], [0], [1], [0, 0, 1, 1], [], []>} : vector<48x48xf32>, vector<48x256xf32>, vector<48x256xf32> -> vector<48x256xf32>
    %153 = arith.addf %118, %152 : vector<48x256xf32>
    %c0_76 = arith.constant 0 : index
    %c23 = arith.constant 23 : index
    %154 = vector.load %arg3[%c0_76, %c23] : memref<48x49xf32, #tpu.memory_space<vmem>>, vector<48x1xf32>
    %155 = vector.broadcast %154 : vector<48x1xf32> to vector<48x256xf32>
    %156 = arith.addf %153, %155 : vector<48x256xf32>
    %c3_77 = arith.constant 3 : index
    %c0_78 = arith.constant 0 : index
    %c0_79 = arith.constant 0 : index
    %c0_80 = arith.constant 0 : index
    %157 = vector.load %arg2[%c3_77, %c0_78, %c0_79, %c0_80] : memref<6x2x48x48xf32, #tpu.memory_space<vmem>>, vector<1x1x48x48xf32>
    %158 = vector.shape_cast %157 : vector<1x1x48x48xf32> to vector<48x48xf32>
    %cst_81 = arith.constant dense<0.000000e+00> : vector<48x256xf32>
    %159 = tpu.matmul %158, %156, %cst_81 {dimension_numbers = #tpu.dot_dimension_numbers<[1], [0], [0], [1], [0, 0, 1, 1], [], []>} : vector<48x48xf32>, vector<48x256xf32>, vector<48x256xf32> -> vector<48x256xf32>
    %c0_82 = arith.constant 0 : index
    %c24 = arith.constant 24 : index
    %160 = vector.load %arg3[%c0_82, %c24] : memref<48x49xf32, #tpu.memory_space<vmem>>, vector<48x1xf32>
    %161 = vector.broadcast %160 : vector<48x1xf32> to vector<48x256xf32>
    %162 = arith.addf %159, %161 : vector<48x256xf32>
    %c0_83 = arith.constant 0 : index
    %c25 = arith.constant 25 : index
    %163 = vector.load %arg3[%c0_83, %c25] : memref<48x49xf32, #tpu.memory_space<vmem>>, vector<48x1xf32>
    %cst_84 = arith.constant 0.000000e+00 : f32
    %164 = vector.broadcast %cst_84 : f32 to vector<48x256xf32>
    %165 = arith.cmpf oge, %162, %164 : vector<48x256xf32>
    %166 = vector.broadcast %163 : vector<48x1xf32> to vector<48x256xf32>
    %167 = arith.mulf %162, %166 : vector<48x256xf32>
    %168 = arith.select %165, %162, %167 : vector<48x256xi1>, vector<48x256xf32>
    %c0_85 = arith.constant 0 : index
    %c28 = arith.constant 28 : index
    %169 = vector.load %arg3[%c0_85, %c28] : memref<48x49xf32, #tpu.memory_space<vmem>>, vector<48x1xf32>
    %170 = vector.broadcast %169 : vector<48x1xf32> to vector<48x256xf32>
    %171 = arith.mulf %168, %170 : vector<48x256xf32>
    %c0_86 = arith.constant 0 : index
    %c29 = arith.constant 29 : index
    %172 = vector.load %arg3[%c0_86, %c29] : memref<48x49xf32, #tpu.memory_space<vmem>>, vector<48x1xf32>
    %173 = vector.broadcast %172 : vector<48x1xf32> to vector<48x256xf32>
    %174 = arith.addf %171, %173 : vector<48x256xf32>
    %c0_87 = arith.constant 0 : index
    %c30 = arith.constant 30 : index
    %175 = vector.load %arg3[%c0_87, %c30] : memref<48x49xf32, #tpu.memory_space<vmem>>, vector<48x1xf32>
    %cst_88 = arith.constant 0.000000e+00 : f32
    %176 = vector.broadcast %cst_88 : f32 to vector<48x256xf32>
    %177 = arith.cmpf oge, %174, %176 : vector<48x256xf32>
    %178 = vector.broadcast %175 : vector<48x1xf32> to vector<48x256xf32>
    %179 = arith.mulf %174, %178 : vector<48x256xf32>
    %180 = arith.select %177, %174, %179 : vector<48x256xi1>, vector<48x256xf32>
    %c3_89 = arith.constant 3 : index
    %c1_90 = arith.constant 1 : index
    %c0_91 = arith.constant 0 : index
    %c0_92 = arith.constant 0 : index
    %181 = vector.load %arg2[%c3_89, %c1_90, %c0_91, %c0_92] : memref<6x2x48x48xf32, #tpu.memory_space<vmem>>, vector<1x1x48x48xf32>
    %182 = vector.shape_cast %181 : vector<1x1x48x48xf32> to vector<48x48xf32>
    %cst_93 = arith.constant dense<0.000000e+00> : vector<48x256xf32>
    %183 = tpu.matmul %182, %180, %cst_93 {dimension_numbers = #tpu.dot_dimension_numbers<[1], [0], [0], [1], [0, 0, 1, 1], [], []>} : vector<48x48xf32>, vector<48x256xf32>, vector<48x256xf32> -> vector<48x256xf32>
    %184 = arith.addf %156, %183 : vector<48x256xf32>
    %c0_94 = arith.constant 0 : index
    %c31 = arith.constant 31 : index
    %185 = vector.load %arg3[%c0_94, %c31] : memref<48x49xf32, #tpu.memory_space<vmem>>, vector<48x1xf32>
    %186 = vector.broadcast %185 : vector<48x1xf32> to vector<48x256xf32>
    %187 = arith.addf %184, %186 : vector<48x256xf32>
    %c4_95 = arith.constant 4 : index
    %c0_96 = arith.constant 0 : index
    %c0_97 = arith.constant 0 : index
    %c0_98 = arith.constant 0 : index
    %188 = vector.load %arg2[%c4_95, %c0_96, %c0_97, %c0_98] : memref<6x2x48x48xf32, #tpu.memory_space<vmem>>, vector<1x1x48x48xf32>
    %189 = vector.shape_cast %188 : vector<1x1x48x48xf32> to vector<48x48xf32>
    %cst_99 = arith.constant dense<0.000000e+00> : vector<48x256xf32>
    %190 = tpu.matmul %189, %187, %cst_99 {dimension_numbers = #tpu.dot_dimension_numbers<[1], [0], [0], [1], [0, 0, 1, 1], [], []>} : vector<48x48xf32>, vector<48x256xf32>, vector<48x256xf32> -> vector<48x256xf32>
    %c0_100 = arith.constant 0 : index
    %c32 = arith.constant 32 : index
    %191 = vector.load %arg3[%c0_100, %c32] : memref<48x49xf32, #tpu.memory_space<vmem>>, vector<48x1xf32>
    %192 = vector.broadcast %191 : vector<48x1xf32> to vector<48x256xf32>
    %193 = arith.addf %190, %192 : vector<48x256xf32>
    %c0_101 = arith.constant 0 : index
    %c33 = arith.constant 33 : index
    %194 = vector.load %arg3[%c0_101, %c33] : memref<48x49xf32, #tpu.memory_space<vmem>>, vector<48x1xf32>
    %cst_102 = arith.constant 0.000000e+00 : f32
    %195 = vector.broadcast %cst_102 : f32 to vector<48x256xf32>
    %196 = arith.cmpf oge, %193, %195 : vector<48x256xf32>
    %197 = vector.broadcast %194 : vector<48x1xf32> to vector<48x256xf32>
    %198 = arith.mulf %193, %197 : vector<48x256xf32>
    %199 = arith.select %196, %193, %198 : vector<48x256xi1>, vector<48x256xf32>
    %c0_103 = arith.constant 0 : index
    %c36 = arith.constant 36 : index
    %200 = vector.load %arg3[%c0_103, %c36] : memref<48x49xf32, #tpu.memory_space<vmem>>, vector<48x1xf32>
    %201 = vector.broadcast %200 : vector<48x1xf32> to vector<48x256xf32>
    %202 = arith.mulf %199, %201 : vector<48x256xf32>
    %c0_104 = arith.constant 0 : index
    %c37 = arith.constant 37 : index
    %203 = vector.load %arg3[%c0_104, %c37] : memref<48x49xf32, #tpu.memory_space<vmem>>, vector<48x1xf32>
    %204 = vector.broadcast %203 : vector<48x1xf32> to vector<48x256xf32>
    %205 = arith.addf %202, %204 : vector<48x256xf32>
    %c0_105 = arith.constant 0 : index
    %c38 = arith.constant 38 : index
    %206 = vector.load %arg3[%c0_105, %c38] : memref<48x49xf32, #tpu.memory_space<vmem>>, vector<48x1xf32>
    %cst_106 = arith.constant 0.000000e+00 : f32
    %207 = vector.broadcast %cst_106 : f32 to vector<48x256xf32>
    %208 = arith.cmpf oge, %205, %207 : vector<48x256xf32>
    %209 = vector.broadcast %206 : vector<48x1xf32> to vector<48x256xf32>
    %210 = arith.mulf %205, %209 : vector<48x256xf32>
    %211 = arith.select %208, %205, %210 : vector<48x256xi1>, vector<48x256xf32>
    %c4_107 = arith.constant 4 : index
    %c1_108 = arith.constant 1 : index
    %c0_109 = arith.constant 0 : index
    %c0_110 = arith.constant 0 : index
    %212 = vector.load %arg2[%c4_107, %c1_108, %c0_109, %c0_110] : memref<6x2x48x48xf32, #tpu.memory_space<vmem>>, vector<1x1x48x48xf32>
    %213 = vector.shape_cast %212 : vector<1x1x48x48xf32> to vector<48x48xf32>
    %cst_111 = arith.constant dense<0.000000e+00> : vector<48x256xf32>
    %214 = tpu.matmul %213, %211, %cst_111 {dimension_numbers = #tpu.dot_dimension_numbers<[1], [0], [0], [1], [0, 0, 1, 1], [], []>} : vector<48x48xf32>, vector<48x256xf32>, vector<48x256xf32> -> vector<48x256xf32>
    %215 = arith.addf %187, %214 : vector<48x256xf32>
    %c0_112 = arith.constant 0 : index
    %c39 = arith.constant 39 : index
    %216 = vector.load %arg3[%c0_112, %c39] : memref<48x49xf32, #tpu.memory_space<vmem>>, vector<48x1xf32>
    %217 = vector.broadcast %216 : vector<48x1xf32> to vector<48x256xf32>
    %218 = arith.addf %215, %217 : vector<48x256xf32>
    %c5_113 = arith.constant 5 : index
    %c0_114 = arith.constant 0 : index
    %c0_115 = arith.constant 0 : index
    %c0_116 = arith.constant 0 : index
    %219 = vector.load %arg2[%c5_113, %c0_114, %c0_115, %c0_116] : memref<6x2x48x48xf32, #tpu.memory_space<vmem>>, vector<1x1x48x48xf32>
    %220 = vector.shape_cast %219 : vector<1x1x48x48xf32> to vector<48x48xf32>
    %cst_117 = arith.constant dense<0.000000e+00> : vector<48x256xf32>
    %221 = tpu.matmul %220, %218, %cst_117 {dimension_numbers = #tpu.dot_dimension_numbers<[1], [0], [0], [1], [0, 0, 1, 1], [], []>} : vector<48x48xf32>, vector<48x256xf32>, vector<48x256xf32> -> vector<48x256xf32>
    %c0_118 = arith.constant 0 : index
    %c40 = arith.constant 40 : index
    %222 = vector.load %arg3[%c0_118, %c40] : memref<48x49xf32, #tpu.memory_space<vmem>>, vector<48x1xf32>
    %223 = vector.broadcast %222 : vector<48x1xf32> to vector<48x256xf32>
    %224 = arith.addf %221, %223 : vector<48x256xf32>
    %c0_119 = arith.constant 0 : index
    %c41 = arith.constant 41 : index
    %225 = vector.load %arg3[%c0_119, %c41] : memref<48x49xf32, #tpu.memory_space<vmem>>, vector<48x1xf32>
    %cst_120 = arith.constant 0.000000e+00 : f32
    %226 = vector.broadcast %cst_120 : f32 to vector<48x256xf32>
    %227 = arith.cmpf oge, %224, %226 : vector<48x256xf32>
    %228 = vector.broadcast %225 : vector<48x1xf32> to vector<48x256xf32>
    %229 = arith.mulf %224, %228 : vector<48x256xf32>
    %230 = arith.select %227, %224, %229 : vector<48x256xi1>, vector<48x256xf32>
    %c0_121 = arith.constant 0 : index
    %c44 = arith.constant 44 : index
    %231 = vector.load %arg3[%c0_121, %c44] : memref<48x49xf32, #tpu.memory_space<vmem>>, vector<48x1xf32>
    %232 = vector.broadcast %231 : vector<48x1xf32> to vector<48x256xf32>
    %233 = arith.mulf %230, %232 : vector<48x256xf32>
    %c0_122 = arith.constant 0 : index
    %c45 = arith.constant 45 : index
    %234 = vector.load %arg3[%c0_122, %c45] : memref<48x49xf32, #tpu.memory_space<vmem>>, vector<48x1xf32>
    %235 = vector.broadcast %234 : vector<48x1xf32> to vector<48x256xf32>
    %236 = arith.addf %233, %235 : vector<48x256xf32>
    %c0_123 = arith.constant 0 : index
    %c46 = arith.constant 46 : index
    %237 = vector.load %arg3[%c0_123, %c46] : memref<48x49xf32, #tpu.memory_space<vmem>>, vector<48x1xf32>
    %cst_124 = arith.constant 0.000000e+00 : f32
    %238 = vector.broadcast %cst_124 : f32 to vector<48x256xf32>
    %239 = arith.cmpf oge, %236, %238 : vector<48x256xf32>
    %240 = vector.broadcast %237 : vector<48x1xf32> to vector<48x256xf32>
    %241 = arith.mulf %236, %240 : vector<48x256xf32>
    %242 = arith.select %239, %236, %241 : vector<48x256xi1>, vector<48x256xf32>
    %c5_125 = arith.constant 5 : index
    %c1_126 = arith.constant 1 : index
    %c0_127 = arith.constant 0 : index
    %c0_128 = arith.constant 0 : index
    %243 = vector.load %arg2[%c5_125, %c1_126, %c0_127, %c0_128] : memref<6x2x48x48xf32, #tpu.memory_space<vmem>>, vector<1x1x48x48xf32>
    %244 = vector.shape_cast %243 : vector<1x1x48x48xf32> to vector<48x48xf32>
    %cst_129 = arith.constant dense<0.000000e+00> : vector<48x256xf32>
    %245 = tpu.matmul %244, %242, %cst_129 {dimension_numbers = #tpu.dot_dimension_numbers<[1], [0], [0], [1], [0, 0, 1, 1], [], []>} : vector<48x48xf32>, vector<48x256xf32>, vector<48x256xf32> -> vector<48x256xf32>
    %246 = arith.addf %218, %245 : vector<48x256xf32>
    %c0_130 = arith.constant 0 : index
    %c47 = arith.constant 47 : index
    %247 = vector.load %arg3[%c0_130, %c47] : memref<48x49xf32, #tpu.memory_space<vmem>>, vector<48x1xf32>
    %248 = vector.broadcast %247 : vector<48x1xf32> to vector<48x256xf32>
    %249 = arith.addf %246, %248 : vector<48x256xf32>
    %250 = vector.extract_strided_slice %249 {offsets = [0, 0], sizes = [16, 256], strides = [1, 1]} : vector<48x256xf32> to vector<16x256xf32>
    %251 = vector.extract_strided_slice %249 {offsets = [16, 0], sizes = [16, 256], strides = [1, 1]} : vector<48x256xf32> to vector<16x256xf32>
    %252 = arith.addf %250, %251 : vector<16x256xf32>
    %253 = vector.extract_strided_slice %249 {offsets = [32, 0], sizes = [16, 256], strides = [1, 1]} : vector<48x256xf32> to vector<16x256xf32>
    %254 = arith.addf %252, %253 : vector<16x256xf32>
    %c0_131 = arith.constant 0 : index
    %c0_132 = arith.constant 0 : index
    %255 = vector.load %arg4[%c0_131, %c0_132] : memref<16x16xf32, #tpu.memory_space<vmem>>, vector<16x16xf32>
    %cst_133 = arith.constant dense<0.000000e+00> : vector<16x256xf32>
    %256 = tpu.matmul %255, %254, %cst_133 {dimension_numbers = #tpu.dot_dimension_numbers<[1], [0], [0], [1], [0, 0, 1, 1], [], []>} : vector<16x16xf32>, vector<16x256xf32>, vector<16x256xf32> -> vector<16x256xf32>
    %c0_134 = arith.constant 0 : index
    %c48 = arith.constant 48 : index
    %257 = vector.load %arg3[%c0_134, %c48] : memref<48x49xf32, #tpu.memory_space<vmem>>, vector<16x1xf32>
    %258 = vector.broadcast %257 : vector<16x1xf32> to vector<16x256xf32>
    %259 = arith.addf %256, %258 : vector<16x256xf32>
    %260 = vector.extract_strided_slice %259 {offsets = [0, 0], sizes = [16, 128], strides = [1, 1]} : vector<16x256xf32> to vector<16x128xf32>
    %c0_135 = arith.constant 0 : index
    %c0_136 = arith.constant 0 : index
    %c0_137 = arith.constant 0 : index
    %261 = vector.load %arg5[%c0_135, %c0_136, %c0_137] : memref<2x16x128xf32, #tpu.memory_space<vmem>>, vector<1x16x128xf32>
    %262 = vector.shape_cast %261 : vector<1x16x128xf32> to vector<16x128xf32>
    %263 = vector.shape_cast %260 : vector<16x128xf32> to vector<1x16x128xf32>
    tpu.vector_store %arg5[%c0_135, %c0_136, %c0_137], %263 {strides = array<i32>} : memref<2x16x128xf32, #tpu.memory_space<vmem>>, vector<1x16x128xf32>,
    %264 = vector.extract_strided_slice %259 {offsets = [0, 128], sizes = [16, 128], strides = [1, 1]} : vector<16x256xf32> to vector<16x128xf32>
    %c1_138 = arith.constant 1 : index
    %c0_139 = arith.constant 0 : index
    %c0_140 = arith.constant 0 : index
    %265 = vector.load %arg5[%c1_138, %c0_139, %c0_140] : memref<2x16x128xf32, #tpu.memory_space<vmem>>, vector<1x16x128xf32>
    %266 = vector.shape_cast %265 : vector<1x16x128xf32> to vector<16x128xf32>
    %267 = vector.shape_cast %264 : vector<16x128xf32> to vector<1x16x128xf32>
    tpu.vector_store %arg5[%c1_138, %c0_139, %c0_140], %267 {strides = array<i32>} : memref<2x16x128xf32, #tpu.memory_space<vmem>>, vector<1x16x128xf32>,
    return
  }
  func.func @transform_0(%arg0: i32) -> (i32, i32, i32) {
    %c0_i32 = arith.constant 0 : i32
    %c0_i32_0 = arith.constant 0 : i32
    %c0_i32_1 = arith.constant 0 : i32
    %c0_i32_2 = arith.constant 0 : i32
    return %c0_i32, %c0_i32_0, %c0_i32_1 : i32, i32, i32
  }
  func.func @transform_1(%arg0: i32) -> (i32, i32, i32, i32) {
    %c0_i32 = arith.constant 0 : i32
    %c0_i32_0 = arith.constant 0 : i32
    %c0_i32_1 = arith.constant 0 : i32
    %c0_i32_2 = arith.constant 0 : i32
    %c0_i32_3 = arith.constant 0 : i32
    return %c0_i32, %c0_i32_0, %c0_i32_1, %c0_i32_2 : i32, i32, i32, i32
  }
  func.func @transform_2(%arg0: i32) -> (i32, i32) {
    %c0_i32 = arith.constant 0 : i32
    %c0_i32_0 = arith.constant 0 : i32
    %c0_i32_1 = arith.constant 0 : i32
    return %c0_i32, %c0_i32_0 : i32, i32
  }
  func.func @transform_3(%arg0: i32) -> (i32, i32) {
    %c0_i32 = arith.constant 0 : i32
    %c0_i32_0 = arith.constant 0 : i32
    %c0_i32_1 = arith.constant 0 : i32
    return %c0_i32, %c0_i32_0 : i32, i32
  }
  func.func @transform_4(%arg0: i32) -> (i32, i32, i32) {
    %c0_i32 = arith.constant 0 : i32
    %c0_i32_0 = arith.constant 0 : i32
    %c0_i32_1 = arith.constant 0 : i32
    %c0_i32_2 = arith.constant 0 : i32
    return %c0_i32, %c0_i32_0, %c0_i32_1 : i32, i32, i32
  }
}

</mosaic_0001>

<llo_original>
// kernel: mff_forward_pallas.1
$region0: #{mff_forward_pallas.1}
  #allocation0 [shape = 'u32[]', space=smem, size = 0x4, offset = 0x4, fixed_abs, tag = 'smem constant byte address 0x4 - core index']
  #allocation1 [shape = 'u32[144,128]{1,0:T(1,128)}', space=vmem, size = 0x12000, scoped, tag = 'internal scratch']
  %s0 = inlined_call_operand.vmem [shape: f32[2,16,128], index: 0, kind: input, shape index: {}]
  %s1 = inlined_call_operand.hbm [shape: f32[6,2,48,48], index: 1, kind: input, shape index: {}]
  %s2 = inlined_call_operand.vmem [shape: f32[48,49], index: 2, kind: input, shape index: {}]
  %s3 = inlined_call_operand.vmem [shape: f32[16,16], index: 3, kind: input, shape index: {}]
  %s4 = inlined_call_operand.vmem [shape: f32[2,16,128], index: 4, kind: output, shape index: {}]
  %s5 = sld [smem:[#allocation0]]
  $region30: #{mff_forward_pallas.1} parent=0
    _
  %s7 = ssub.s32 1, %s5
  %s8 = scalar_select 0, %s7, %s5
  $region1: #{mff_forward_pallas.1} parent=0
    #allocation2 [shape = 'u8[294912]{0}', space=vmem, size = 0x48000, scoped, tag = 'input window, operand 1, single buffered']
    #allocation3 [shape = 's32[1]{0}', space=sflag, size = 0x4, scoped, tag = 'scoped memory for mff_forward_pallas.1']
    %9 = vsyncpa [#allocation3], 0
    // Predicated region
    $region2: #{mff_forward_pallas.1} parent=1 // pred_check
      _
    $region3: #{mff_forward_pallas.1} parent=1 // pred_check_branch
      %11 = sbr.rel (0) target = $region5
    $region4: #{mff_forward_pallas.1} parent=1 // pred_region
      _
    $region5: #{mff_forward_pallas.1} parent=1 // pred_fallthru
      _
    // Predicated region
    $region6: #{mff_forward_pallas.1} parent=1 // pred_check
      _
    $region7: #{mff_forward_pallas.1} parent=1 // pred_check_branch
      %13 = sbr.rel (0) target = $region9
    $region8: #{mff_forward_pallas.1} parent=1 // pred_region
      %s15 = ssub.s32 9216, 9216
      %16 = vsyncadd [#allocation3], %s15
      %s17 = sshll.u32 [#allocation2], 4
      %s18 = int_to_ptr.vmem [resolvable:$true] %s17
      %23 = dma.hbm_to_vmem [thread:$0]  %s1, 9216, %s18, [#allocation3], 128, 128, 8
    $region9: #{mff_forward_pallas.1} parent=1 // pred_fallthru
      _
    // Predicated region
    $region10: #{mff_forward_pallas.1} parent=1 // pred_check
      _
    $region11: #{mff_forward_pallas.1} parent=1 // pred_check_branch
      %25 = sbr.rel (0) target = $region13
    $region12: #{mff_forward_pallas.1} parent=1 // pred_region
      _
    $region13: #{mff_forward_pallas.1} parent=1 // pred_fallthru
      _
    // Predicated region
    $region14: #{mff_forward_pallas.1} parent=1 // pred_check
      _
    $region15: #{mff_forward_pallas.1} parent=1 // pred_check_branch
      %27 = sbr.rel (0) target = $region17
    $region16: #{mff_forward_pallas.1} parent=1 // pred_region
      _
    $region17: #{mff_forward_pallas.1} parent=1 // pred_fallthru
      _
    // Predicated region
    $region18: #{mff_forward_pallas.1} parent=1 // pred_check
      _
    $region19: #{mff_forward_pallas.1} parent=1 // pred_check_branch
      %29 = sbr.rel (0) target = $region21
    $region20: #{mff_forward_pallas.1} parent=1 // pred_region
      %30 = dma.done [#allocation3], 9216
    $region21: #{mff_forward_pallas.1} parent=1 // pred_fallthru
      _
    %v31 = vld [vmem:[%s0] sm:$0xff]
    %v32 = vld [vmem:[%s0 + $0x8] sm:$0xff]
    %s33 = scalar_lea.vmem %s0, 16
    %v34 = vld [vmem:[%s33] sm:$0xff]
    %v35 = vld [vmem:[%s33 + $0x8] sm:$0xff]
    %v36 = vlaneseq
    %v37 = vand.u32 %v36, 127
    %v38 = vadd.s32 %v37, 128
    %vm39 = vcmp.lt.s32.totalorder %v37, 0
    %v40 = vsub.s32 0, %v37
    %v41 = vsel %vm39, %v40, %v37
    %v42 = vshrl.u32 %v41, 7
    %v43 = vand.u32 %v41, 127
    %v44 = vsub.s32 0, %v43
    %v45 = vsel %vm39, %v44, %v43
    %vm46 = vcmp.lt.s32.totalorder %v38, 0
    %v47 = vsub.s32 0, %v38
    %v48 = vsel %vm46, %v47, %v38
    %v49 = vshrl.u32 %v48, 7
    %v50 = vand.u32 %v48, 127
    %v51 = vsub.s32 0, %v50
    %v52 = vsel %vm46, %v51, %v50
    %vm53 = vcmp.ne.s32.totalorder %v45, 0
    %vm54 = vcmp.ne.s32.totalorder %v52, 0
    %vm55 = vcmp.lt.s32.totalorder %v45, 0
    %vm56 = vcmp.lt.s32.totalorder %v52, 0
    %vm57 = vmand %vm55, %vm53
    %vm58 = vmand %vm56, %vm54
    %v59 = vadd.s32 %v45, 128
    %v60 = vadd.s32 %v52, 128
    %v61 = vsel %vm57, %v59, %v45
    %v62 = vsel %vm58, %v60, %v52
    %v63 = vld [vmem:[#allocation2] sm:$0xff]
    %v64 = vld [vmem:[#allocation2 + $0x8] sm:$0xff]
    %v65 = vld [vmem:[#allocation2 + $0x10] sm:$0xff]
    %v66 = vld [vmem:[#allocation2 + $0x18] sm:$0xff]
    %v67 = vld [vmem:[#allocation2 + $0x20] sm:$0xff]
    %v68 = vld [vmem:[#allocation2 + $0x28] sm:$0xff]
    %v69 = vld [vmem:[%s2] sm:$0xff]
    %v70 = vld [vmem:[%s2 + $0x8] sm:$0xff]
    %v71 = vld [vmem:[%s2 + $0x10] sm:$0xff]
    %v72 = vld [vmem:[%s2 + $0x18] sm:$0xff]
    %v73 = vld [vmem:[%s2 + $0x20] sm:$0xff]
    %v74 = vld [vmem:[%s2 + $0x28] sm:$0xff]
    %76 = vset.pattern.permute.xlu0 0
    %77 = vperm.xlu0 %76, %v69
    %v78 = vpop.permute.xlu0 %77
    %81 = vset.pattern.permute.xlu0 0
    %82 = vperm.xlu0 %81, %v70
    %v83 = vpop.permute.xlu0 %82
    %86 = vset.pattern.permute.xlu0 0
    %87 = vperm.xlu0 %86, %v71
    %v88 = vpop.permute.xlu0 %87
    %91 = vset.pattern.permute.xlu0 0
    %92 = vperm.xlu0 %91, %v72
    %v93 = vpop.permute.xlu0 %92
    %96 = vset.pattern.permute.xlu0 0
    %97 = vperm.xlu0 %96, %v73
    %v98 = vpop.permute.xlu0 %97
    %101 = vset.pattern.permute.xlu0 0
    %102 = vperm.xlu0 %101, %v74
    %v103 = vpop.permute.xlu0 %102
    %vm105 = vcmask 392192
    %v107 = vsel %vm105, %v63, 0
    %v110 = vsel %vm105, %v64, 0
    %v113 = vsel %vm105, %v65, 0
    %v116 = vsel %vm105, %v66, 0
    %v119 = vsel %vm105, %v67, 0
    %v122 = vsel %vm105, %v68, 0
    %124 = vmatprep.subr.mxu0 %v34
    %125 = vmatpush1.msra.mxu0 %v31
    %126 = vmatprep.subr.mxu0 %v35
    %127 = vmatpush1.msra.mxu0 %v32
    %128 = vmatprep.subr.mxu0 %v34
    %129 = vmatpush1.msra.mxu0 %v31
    %130 = vmatprep.subr.mxu0 %v35
    %131 = vmatpush1.msra.mxu0 %v32
    %132 = vmatprep.subr.mxu0 %v34
    %133 = vmatpush1.msra.mxu0 %v31
    %134 = vmatprep.subr.mxu0 %v35
    %135 = vmatpush1.msra.mxu0 %v32
    %136 = vmatprep.subr.mxu0 0.0
    %137 = vmatpush1.msra.mxu0 0.0
    %138 = vmatprep.subr.mxu0 0.0
    %139 = vmatpush1.msra.mxu0 0.0
    %140 = vmatprep.subr.mxu0 0.0
    %141 = vmatpush1.msra.mxu0 0.0
    %142 = vmatprep.subr.mxu0 0.0
    %143 = vmatpush1.msra.mxu0 0.0
    %144 = vmatprep.subr.mxu0 0.0
    %145 = vmatpush1.msra.mxu0 0.0
    %146 = vmatprep.subr.mxu0 0.0
    %147 = vmatpush1.msra.mxu0 0.0
    %148 = vmatprep.subr.mxu0 0.0
    %149 = vmatpush1.msra.mxu0 0.0
    %150 = vmatprep.subr.mxu0 0.0
    %151 = vmatpush1.msra.mxu0 0.0
    %152 = vmatprep.subr.mxu0 0.0
    %153 = vmatpush1.msra.mxu0 0.0
    %154 = vmatprep.subr.mxu0 0.0
    %155 = vmatpush1.msra.mxu0 0.0
    %156 = vmatprep.subr.mxu0 0.0
    %157 = vmatpush1.msra.mxu0 0.0
    %158 = vmatprep.subr.mxu0 0.0
    %159 = vmatpush1.msra.mxu0 0.0
    %160 = vmatprep.subr.mxu0 0.0
    %161 = vmatpush1.msra.mxu0 0.0
    %162 = vmatprep.subr.mxu0 0.0
    %163 = vmatpush1.msra.mxu0 0.0
    %164 = vmatprep.subr.mxu0 0.0
    %165 = vmatpush1.msra.mxu0 0.0
    %166 = vmatprep.subr.mxu0 0.0
    %167 = vmatpush1.msra.mxu0 0.0
    %168 = vmatprep.subr.mxu0 0.0
    %169 = vmatpush1.msra.mxu0 0.0
    %170 = vmatprep.subr.mxu0 0.0
    %171 = vmatpush1.msra.mxu0 0.0
    %172 = vmatprep.subr.mxu0 0.0
    %173 = vmatpush1.msra.mxu0 0.0
    %174 = vmatprep.subr.mxu0 0.0
    %175 = vmatpush1.msra.mxu0 0.0
    %176 = vmatprep.subr.mxu0 0.0
    %177 = vmatpush1.msra.mxu0 0.0
    %178 = vmatprep.subr.mxu0 0.0
    %179 = vmatpush1.msra.mxu0 0.0
    %180 = vmatprep.subr.mxu0 0.0
    %181 = vmatpush1.msra.mxu0 0.0
    %182 = vmatprep.subr.mxu0 0.0
    %183 = vmatpush1.msra.mxu0 0.0
    %184 = vmatprep.subr.mxu0 0.0
    %185 = vmatpush1.msra.mxu0 0.0
    %186 = vmatprep.subr.mxu0 0.0
    %187 = vmatpush1.msra.mxu0 0.0
    %188 = vmatprep.mubr.f32.mxu0 0.0
    %189 = vmatmul.mubr.f32.gmra.mrb[0].mxu0 %v107
    %v190 = vpop.f32.mrb[0].mxu0
    %v191 = vadd.f32 %v78, %v190
    %v192 = vpop.f32.mrb[0].mxu0
    %v193 = vadd.f32 %v78, %v192
    %194 = vmatprep.mubr.f32.mxu0 0.0
    %195 = vmatmul.mubr.f32.gmra.mrb[0].mxu0 %v110
    %v196 = vpop.f32.mrb[0].mxu0
    %v197 = vadd.f32 %v83, %v196
    %v198 = vpop.f32.mrb[0].mxu0
    %v199 = vadd.f32 %v83, %v198
    %200 = vmatprep.mubr.f32.mxu0 0.0
    %201 = vmatmul.mubr.f32.gmra.mrb[0].mxu0 %v113
    %v202 = vpop.f32.mrb[0].mxu0
    %v203 = vadd.f32 %v88, %v202
    %v204 = vpop.f32.mrb[0].mxu0
    %v205 = vadd.f32 %v88, %v204
    %206 = vmatprep.mubr.f32.mxu0 0.0
    %207 = vmatmul.mubr.f32.gmra.mrb[0].mxu0 %v116
    %v208 = vpop.f32.mrb[0].mxu0
    %v209 = vadd.f32 %v93, %v208
    %v210 = vpop.f32.mrb[0].mxu0
    %v211 = vadd.f32 %v93, %v210
    %212 = vmatprep.mubr.f32.mxu0 0.0
    %213 = vmatmul.mubr.f32.gmra.mrb[0].mxu0 %v119
    %v214 = vpop.f32.mrb[0].mxu0
    %v215 = vadd.f32 %v98, %v214
    %v216 = vpop.f32.mrb[0].mxu0
    %v217 = vadd.f32 %v98, %v216
    %218 = vmatprep.mubr.f32.mxu0 0.0
    %219 = vmatmul.mubr.f32.gmra.mrb[0].mxu0 %v122
    %v220 = vpop.f32.mrb[0].mxu0
    %v221 = vadd.f32 %v103, %v220
    %v222 = vpop.f32.mrb[0].mxu0
    %v223 = vadd.f32 %v103, %v222
    %224 = vdwg.mxu0
    %vm225 = vcmp.ge.f32.partialorder %v191, 0.0
    %vm226 = vcmp.ge.f32.partialorder %v193, 0.0
    %vm227 = vcmp.ge.f32.partialorder %v197, 0.0
    %vm228 = vcmp.ge.f32.partialorder %v199, 0.0
    %vm229 = vcmp.ge.f32.partialorder %v203, 0.0
    %vm230 = vcmp.ge.f32.partialorder %v205, 0.0
    %vm231 = vcmp.ge.f32.partialorder %v209, 0.0
    %vm232 = vcmp.ge.f32.partialorder %v211, 0.0
    %vm233 = vcmp.ge.f32.partialorder %v215, 0.0
    %vm234 = vcmp.ge.f32.partialorder %v217, 0.0
    %vm235 = vcmp.ge.f32.partialorder %v221, 0.0
    %vm236 = vcmp.ge.f32.partialorder %v223, 0.0
    %237 = vset.pattern.permute.xlu0 1
    %238 = vperm.xlu0 %237, %v69
    %v239 = vpop.permute.xlu0 %238
    %241 = vset.pattern.permute.xlu0 1
    %242 = vperm.xlu0 %241, %v70
    %v243 = vpop.permute.xlu0 %242
    %245 = vset.pattern.permute.xlu0 1
    %246 = vperm.xlu0 %245, %v71
    %v247 = vpop.permute.xlu0 %246
    %249 = vset.pattern.permute.xlu0 1
    %250 = vperm.xlu0 %249, %v72
    %v251 = vpop.permute.xlu0 %250
    %253 = vset.pattern.permute.xlu0 1
    %254 = vperm.xlu0 %253, %v73
    %v255 = vpop.permute.xlu0 %254
    %257 = vset.pattern.permute.xlu0 1
    %258 = vperm.xlu0 %257, %v74
    %v259 = vpop.permute.xlu0 %258
    %v261 = vmul.f32 %v191, %v239
    %v262 = vmul.f32 %v193, %v239
    %v263 = vmul.f32 %v197, %v243
    %v264 = vmul.f32 %v199, %v243
    %v265 = vmul.f32 %v203, %v247
    %v266 = vmul.f32 %v205, %v247
    %v267 = vmul.f32 %v209, %v251
    %v268 = vmul.f32 %v211, %v251
    %v269 = vmul.f32 %v215, %v255
    %v270 = vmul.f32 %v217, %v255
    %v271 = vmul.f32 %v221, %v259
    %v272 = vmul.f32 %v223, %v259
    %v273 = vsel %vm225, %v191, %v261
    %v274 = vsel %vm226, %v193, %v262
    %v275 = vsel %vm227, %v197, %v263
    %v276 = vsel %vm228, %v199, %v264
    %v277 = vsel %vm229, %v203, %v265
    %v278 = vsel %vm230, %v205, %v266
    %v279 = vsel %vm231, %v209, %v267
    %v280 = vsel %vm232, %v211, %v268
    %v281 = vsel %vm233, %v215, %v269
    %v282 = vsel %vm234, %v217, %v270
    %v283 = vsel %vm235, %v221, %v271
    %v284 = vsel %vm236, %v223, %v272
    %285 = vset.pattern.permute.xlu0 4
    %286 = vperm.xlu0 %285, %v69
    %v287 = vpop.permute.xlu0 %286
    %289 = vset.pattern.permute.xlu0 4
    %290 = vperm.xlu0 %289, %v70
    %v291 = vpop.permute.xlu0 %290
    %293 = vset.pattern.permute.xlu0 4
    %294 = vperm.xlu0 %293, %v71
    %v295 = vpop.permute.xlu0 %294
    %297 = vset.pattern.permute.xlu0 4
    %298 = vperm.xlu0 %297, %v72
    %v299 = vpop.permute.xlu0 %298
    %301 = vset.pattern.permute.xlu0 4
    %302 = vperm.xlu0 %301, %v73
    %v303 = vpop.permute.xlu0 %302
    %305 = vset.pattern.permute.xlu0 4
    %306 = vperm.xlu0 %305, %v74
    %v307 = vpop.permute.xlu0 %306
    %v309 = vmul.f32 %v273, %v287
    %v310 = vmul.f32 %v274, %v287
    %v311 = vmul.f32 %v275, %v291
    %v312 = vmul.f32 %v276, %v291
    %v313 = vmul.f32 %v277, %v295
    %v314 = vmul.f32 %v278, %v295
    %v315 = vmul.f32 %v279, %v299
    %v316 = vmul.f32 %v280, %v299
    %v317 = vmul.f32 %v281, %v303
    %v318 = vmul.f32 %v282, %v303
    %v319 = vmul.f32 %v283, %v307
    %v320 = vmul.f32 %v284, %v307
    %vm321 = vcmp.ge.s32.totalorder %v61, 16
    %vm322 = vcmp.ge.s32.totalorder %v62, 16
    %323 = vrot.lane.b32.xlu0 %v273, 16
    %v324 = vpop.permute.xlu0 %323
    %325 = vrot.lane.b32.xlu0 %v275, 16
    %v326 = vpop.permute.xlu0 %325
    %327 = vrot.lane.b32.xlu0 %v277, 16
    %v328 = vpop.permute.xlu0 %327
    %329 = vrot.lane.b32.xlu0 %v279, 16
    %v330 = vpop.permute.xlu0 %329
    %331 = vrot.lane.b32.xlu0 %v281, 16
    %v332 = vpop.permute.xlu0 %331
    %333 = vrot.lane.b32.xlu0 %v283, 16
    %v334 = vpop.permute.xlu0 %333
    %335 = vrot.lane.b32.xlu0 %v274, 16
    %v336 = vpop.permute.xlu0 %335
    %337 = vrot.lane.b32.xlu0 %v276, 16
    %v338 = vpop.permute.xlu0 %337
    %339 = vrot.lane.b32.xlu0 %v278, 16
    %v340 = vpop.permute.xlu0 %339
    %341 = vrot.lane.b32.xlu0 %v280, 16
    %v342 = vpop.permute.xlu0 %341
    %343 = vrot.lane.b32.xlu0 %v282, 16
    %v344 = vpop.permute.xlu0 %343
    %345 = vrot.lane.b32.xlu0 %v284, 16
    %v346 = vpop.permute.xlu0 %345
    %vm347 = vcmp.lt.s32.totalorder %v37, 16
    %v348 = vsel %vm347, %v324, %v336
    %v349 = vsel %vm347, %v326, %v338
    %v350 = vsel %vm347, %v328, %v340
    %v351 = vsel %vm347, %v330, %v342
    %v352 = vsel %vm347, %v332, %v344
    %v353 = vsel %vm347, %v334, %v346
    %v354 = vsel %vm347, %v336, %v324
    %v355 = vsel %vm347, %v338, %v326
    %v356 = vsel %vm347, %v340, %v328
    %v357 = vsel %vm347, %v342, %v330
    %v358 = vsel %vm347, %v344, %v332
    %v359 = vsel %vm347, %v346, %v334
    %v360 = vsel %vm321, %v354, 0.0
    %v361 = vsel %vm322, %v348, 0.0
    %v362 = vsel %vm321, %v355, 0.0
    %v363 = vsel %vm322, %v349, 0.0
    %v364 = vsel %vm321, %v356, 0.0
    %v365 = vsel %vm322, %v350, 0.0
    %v366 = vsel %vm321, %v357, 0.0
    %v367 = vsel %vm322, %v351, 0.0
    %v368 = vsel %vm321, %v358, 0.0
    %v369 = vsel %vm322, %v352, 0.0
    %v370 = vsel %vm321, %v359, 0.0
    %v371 = vsel %vm322, %v353, 0.0
    %372 = vset.pattern.permute.xlu0 3
    %373 = vperm.xlu0 %372, %v69
    %v374 = vpop.permute.xlu0 %373
    %376 = vset.pattern.permute.xlu0 3
    %377 = vperm.xlu0 %376, %v70
    %v378 = vpop.permute.xlu0 %377
    %380 = vset.pattern.permute.xlu0 3
    %381 = vperm.xlu0 %380, %v71
    %v382 = vpop.permute.xlu0 %381
    %384 = vset.pattern.permute.xlu0 3
    %385 = vperm.xlu0 %384, %v72
    %v386 = vpop.permute.xlu0 %385
    %388 = vset.pattern.permute.xlu0 3
    %389 = vperm.xlu0 %388, %v73
    %v390 = vpop.permute.xlu0 %389
    %392 = vset.pattern.permute.xlu0 3
    %393 = vperm.xlu0 %392, %v74
    %v394 = vpop.permute.xlu0 %393
    %v396 = vmul.f32 %v360, %v374
    %v397 = vmul.f32 %v361, %v374
    %v398 = vmul.f32 %v362, %v378
    %v399 = vmul.f32 %v363, %v378
    %v400 = vmul.f32 %v364, %v382
    %v401 = vmul.f32 %v365, %v382
    %v402 = vmul.f32 %v366, %v386
    %v403 = vmul.f32 %v367, %v386
    %v404 = vmul.f32 %v368, %v390
    %v405 = vmul.f32 %v369, %v390
    %v406 = vmul.f32 %v370, %v394
    %v407 = vmul.f32 %v371, %v394
    %v408 = vadd.f32 %v309, %v396
    %v409 = vadd.f32 %v310, %v397
    %v410 = vadd.f32 %v311, %v398
    %v411 = vadd.f32 %v312, %v399
    %v412 = vadd.f32 %v313, %v400
    %v413 = vadd.f32 %v314, %v401
    %v414 = vadd.f32 %v315, %v402
    %v415 = vadd.f32 %v316, %v403
    %v416 = vadd.f32 %v317, %v404
    %v417 = vadd.f32 %v318, %v405
    %v418 = vadd.f32 %v319, %v406
    %v419 = vadd.f32 %v320, %v407
    %vm420 = vcmp.ge.s32.totalorder %v61, 32
    %vm421 = vcmp.ge.s32.totalorder %v62, 32
    %422 = vrot.lane.b32.xlu0 %v273, 32
    %v423 = vpop.permute.xlu0 %422
    %424 = vrot.lane.b32.xlu0 %v275, 32
    %v425 = vpop.permute.xlu0 %424
    %426 = vrot.lane.b32.xlu0 %v277, 32
    %v427 = vpop.permute.xlu0 %426
    %428 = vrot.lane.b32.xlu0 %v279, 32
    %v429 = vpop.permute.xlu0 %428
    %430 = vrot.lane.b32.xlu0 %v281, 32
    %v431 = vpop.permute.xlu0 %430
    %432 = vrot.lane.b32.xlu0 %v283, 32
    %v433 = vpop.permute.xlu0 %432
    %434 = vrot.lane.b32.xlu0 %v274, 32
    %v435 = vpop.permute.xlu0 %434
    %436 = vrot.lane.b32.xlu0 %v276, 32
    %v437 = vpop.permute.xlu0 %436
    %438 = vrot.lane.b32.xlu0 %v278, 32
    %v439 = vpop.permute.xlu0 %438
    %440 = vrot.lane.b32.xlu0 %v280, 32
    %v441 = vpop.permute.xlu0 %440
    %442 = vrot.lane.b32.xlu0 %v282, 32
    %v443 = vpop.permute.xlu0 %442
    %444 = vrot.lane.b32.xlu0 %v284, 32
    %v445 = vpop.permute.xlu0 %444
    %vm446 = vcmp.lt.s32.totalorder %v37, 32
    %v447 = vsel %vm446, %v423, %v435
    %v448 = vsel %vm446, %v425, %v437
    %v449 = vsel %vm446, %v427, %v439
    %v450 = vsel %vm446, %v429, %v441
    %v451 = vsel %vm446, %v431, %v443
    %v452 = vsel %vm446, %v433, %v445
    %v453 = vsel %vm446, %v435, %v423
    %v454 = vsel %vm446, %v437, %v425
    %v455 = vsel %vm446, %v439, %v427
    %v456 = vsel %vm446, %v441, %v429
    %v457 = vsel %vm446, %v443, %v431
    %v458 = vsel %vm446, %v445, %v433
    %v459 = vsel %vm420, %v453, 0.0
    %v460 = vsel %vm421, %v447, 0.0
    %v461 = vsel %vm420, %v454, 0.0
    %v462 = vsel %vm421, %v448, 0.0
    %v463 = vsel %vm420, %v455, 0.0
    %v464 = vsel %vm421, %v449, 0.0
    %v465 = vsel %vm420, %v456, 0.0
    %v466 = vsel %vm421, %v450, 0.0
    %v467 = vsel %vm420, %v457, 0.0
    %v468 = vsel %vm421, %v451, 0.0
    %v469 = vsel %vm420, %v458, 0.0
    %v470 = vsel %vm421, %v452, 0.0
    %471 = vset.pattern.permute.xlu0 2
    %472 = vperm.xlu0 %471, %v69
    %v473 = vpop.permute.xlu0 %472
    %475 = vset.pattern.permute.xlu0 2
    %476 = vperm.xlu0 %475, %v70
    %v477 = vpop.permute.xlu0 %476
    %479 = vset.pattern.permute.xlu0 2
    %480 = vperm.xlu0 %479, %v71
    %v481 = vpop.permute.xlu0 %480
    %483 = vset.pattern.permute.xlu0 2
    %484 = vperm.xlu0 %483, %v72
    %v485 = vpop.permute.xlu0 %484
    %487 = vset.pattern.permute.xlu0 2
    %488 = vperm.xlu0 %487, %v73
    %v489 = vpop.permute.xlu0 %488
    %491 = vset.pattern.permute.xlu0 2
    %492 = vperm.xlu0 %491, %v74
    %v493 = vpop.permute.xlu0 %492
    %v495 = vmul.f32 %v459, %v473
    %v496 = vmul.f32 %v460, %v473
    %v497 = vmul.f32 %v461, %v477
    %v498 = vmul.f32 %v462, %v477
    %v499 = vmul.f32 %v463, %v481
    %v500 = vmul.f32 %v464, %v481
    %v501 = vmul.f32 %v465, %v485
    %v502 = vmul.f32 %v466, %v485
    %v503 = vmul.f32 %v467, %v489
    %v504 = vmul.f32 %v468, %v489
    %v505 = vmul.f32 %v469, %v493
    %v506 = vmul.f32 %v470, %v493
    %v507 = vadd.f32 %v408, %v495
    %v508 = vadd.f32 %v409, %v496
    %v509 = vadd.f32 %v410, %v497
    %v510 = vadd.f32 %v411, %v498
    %v511 = vadd.f32 %v412, %v499
    %v512 = vadd.f32 %v413, %v500
    %v513 = vadd.f32 %v414, %v501
    %v514 = vadd.f32 %v415, %v502
    %v515 = vadd.f32 %v416, %v503
    %v516 = vadd.f32 %v417, %v504
    %v517 = vadd.f32 %v418, %v505
    %v518 = vadd.f32 %v419, %v506
    %519 = vset.pattern.permute.xlu0 5
    %520 = vperm.xlu0 %519, %v69
    %v521 = vpop.permute.xlu0 %520
    %523 = vset.pattern.permute.xlu0 5
    %524 = vperm.xlu0 %523, %v70
    %v525 = vpop.permute.xlu0 %524
    %527 = vset.pattern.permute.xlu0 5
    %528 = vperm.xlu0 %527, %v71
    %v529 = vpop.permute.xlu0 %528
    %531 = vset.pattern.permute.xlu0 5
    %532 = vperm.xlu0 %531, %v72
    %v533 = vpop.permute.xlu0 %532
    %535 = vset.pattern.permute.xlu0 5
    %536 = vperm.xlu0 %535, %v73
    %v537 = vpop.permute.xlu0 %536
    %539 = vset.pattern.permute.xlu0 5
    %540 = vperm.xlu0 %539, %v74
    %v541 = vpop.permute.xlu0 %540
    %v543 = vadd.f32 %v507, %v521
    %v544 = vadd.f32 %v508, %v521
    %v545 = vadd.f32 %v509, %v525
    %v546 = vadd.f32 %v510, %v525
    %v547 = vadd.f32 %v511, %v529
    %v548 = vadd.f32 %v512, %v529
    %v549 = vadd.f32 %v513, %v533
    %v550 = vadd.f32 %v514, %v533
    %v551 = vadd.f32 %v515, %v537
    %v552 = vadd.f32 %v516, %v537
    %v553 = vadd.f32 %v517, %v541
    %v554 = vadd.f32 %v518, %v541
    %vm555 = vcmp.ge.f32.partialorder %v543, 0.0
    %vm556 = vcmp.ge.f32.partialorder %v544, 0.0
    %vm557 = vcmp.ge.f32.partialorder %v545, 0.0
    %vm558 = vcmp.ge.f32.partialorder %v546, 0.0
    %vm559 = vcmp.ge.f32.partialorder %v547, 0.0
    %vm560 = vcmp.ge.f32.partialorder %v548, 0.0
    %vm561 = vcmp.ge.f32.partialorder %v549, 0.0
    %vm562 = vcmp.ge.f32.partialorder %v550, 0.0
    %vm563 = vcmp.ge.f32.partialorder %v551, 0.0
    %vm564 = vcmp.ge.f32.partialorder %v552, 0.0
    %vm565 = vcmp.ge.f32.partialorder %v553, 0.0
    %vm566 = vcmp.ge.f32.partialorder %v554, 0.0
    %567 = vset.pattern.permute.xlu0 6
    %568 = vperm.xlu0 %567, %v69
    %v569 = vpop.permute.xlu0 %568
    %571 = vset.pattern.permute.xlu0 6
    %572 = vperm.xlu0 %571, %v70
    %v573 = vpop.permute.xlu0 %572
    %575 = vset.pattern.permute.xlu0 6
    %576 = vperm.xlu0 %575, %v71
    %v577 = vpop.permute.xlu0 %576
    %579 = vset.pattern.permute.xlu0 6
    %580 = vperm.xlu0 %579, %v72
    %v581 = vpop.permute.xlu0 %580
    %583 = vset.pattern.permute.xlu0 6
    %584 = vperm.xlu0 %583, %v73
    %v585 = vpop.permute.xlu0 %584
    %587 = vset.pattern.permute.xlu0 6
    %588 = vperm.xlu0 %587, %v74
    %v589 = vpop.permute.xlu0 %588
    %v591 = vmul.f32 %v543, %v569
    %v592 = vmul.f32 %v544, %v569
    %v593 = vmul.f32 %v545, %v573
    %v594 = vmul.f32 %v546, %v573
    %v595 = vmul.f32 %v547, %v577
    %v596 = vmul.f32 %v548, %v577
    %v597 = vmul.f32 %v549, %v581
    %v598 = vmul.f32 %v550, %v581
    %v599 = vmul.f32 %v551, %v585
    %v600 = vmul.f32 %v552, %v585
    %v601 = vmul.f32 %v553, %v589
    %v602 = vmul.f32 %v554, %v589
    %v603 = vsel %vm555, %v543, %v591
    %v604 = vsel %vm556, %v544, %v592
    %v605 = vsel %vm557, %v545, %v593
    %v606 = vsel %vm558, %v546, %v594
    %v607 = vsel %vm559, %v547, %v595
    %v608 = vsel %vm560, %v548, %v596
    %v609 = vsel %vm561, %v549, %v597
    %v610 = vsel %vm562, %v550, %v598
    %v611 = vsel %vm563, %v551, %v599
    %v612 = vsel %vm564, %v552, %v600
    %v613 = vsel %vm565, %v553, %v601
    %v614 = vsel %vm566, %v554, %v602
    %s615 = scalar_lea.vmem [#allocation2], 48
    %v616 = vld [vmem:[%s615] sm:$0xff]
    %v617 = vld [vmem:[%s615 + $0x8] sm:$0xff]
    %v618 = vld [vmem:[%s615 + $0x10] sm:$0xff]
    %v619 = vld [vmem:[%s615 + $0x18] sm:$0xff]
    %v620 = vld [vmem:[%s615 + $0x20] sm:$0xff]
    %v621 = vld [vmem:[%s615 + $0x28] sm:$0xff]
    %v623 = vsel %vm105, %v616, 0
    %v626 = vsel %vm105, %v617, 0
    %v629 = vsel %vm105, %v618, 0
    %v632 = vsel %vm105, %v619, 0
    %v635 = vsel %vm105, %v620, 0
    %v638 = vsel %vm105, %v621, 0
    %640 = vmatprep.subr.mxu0 %v604
    %641 = vmatpush1.msra.mxu0 %v603
    %642 = vmatprep.subr.mxu0 %v606
    %643 = vmatpush1.msra.mxu0 %v605
    %644 = vmatprep.subr.mxu0 %v608
    %645 = vmatpush1.msra.mxu0 %v607
    %646 = vmatprep.subr.mxu0 %v610
    %647 = vmatpush1.msra.mxu0 %v609
    %648 = vmatprep.subr.mxu0 %v612
    %649 = vmatpush1.msra.mxu0 %v611
    %650 = vmatprep.subr.mxu0 %v614
    %651 = vmatpush1.msra.mxu0 %v613
    %652 = vmatprep.subr.mxu0 0.0
    %653 = vmatpush1.msra.mxu0 0.0
    %654 = vmatprep.subr.mxu0 0.0
    %655 = vmatpush1.msra.mxu0 0.0
    %656 = vmatprep.subr.mxu0 0.0
    %657 = vmatpush1.msra.mxu0 0.0
    %658 = vmatprep.subr.mxu0 0.0
    %659 = vmatpush1.msra.mxu0 0.0
    %660 = vmatprep.subr.mxu0 0.0
    %661 = vmatpush1.msra.mxu0 0.0
    %662 = vmatprep.subr.mxu0 0.0
    %663 = vmatpush1.msra.mxu0 0.0
    %664 = vmatprep.subr.mxu0 0.0
    %665 = vmatpush1.msra.mxu0 0.0
    %666 = vmatprep.subr.mxu0 0.0
    %667 = vmatpush1.msra.mxu0 0.0
    %668 = vmatprep.subr.mxu0 0.0
    %669 = vmatpush1.msra.mxu0 0.0
    %670 = vmatprep.subr.mxu0 0.0
    %671 = vmatpush1.msra.mxu0 0.0
    %672 = vmatprep.subr.mxu0 0.0
    %673 = vmatpush1.msra.mxu0 0.0
    %674 = vmatprep.subr.mxu0 0.0
    %675 = vmatpush1.msra.mxu0 0.0
    %676 = vmatprep.subr.mxu0 0.0
    %677 = vmatpush1.msra.mxu0 0.0
    %678 = vmatprep.subr.mxu0 0.0
    %679 = vmatpush1.msra.mxu0 0.0
    %680 = vmatprep.subr.mxu0 0.0
    %681 = vmatpush1.msra.mxu0 0.0
    %682 = vmatprep.subr.mxu0 0.0
    %683 = vmatpush1.msra.mxu0 0.0
    %684 = vmatprep.subr.mxu0 0.0
    %685 = vmatpush1.msra.mxu0 0.0
    %686 = vmatprep.subr.mxu0 0.0
    %687 = vmatpush1.msra.mxu0 0.0
    %688 = vmatprep.subr.mxu0 0.0
    %689 = vmatpush1.msra.mxu0 0.0
    %690 = vmatprep.subr.mxu0 0.0
    %691 = vmatpush1.msra.mxu0 0.0
    %692 = vmatprep.subr.mxu0 0.0
    %693 = vmatpush1.msra.mxu0 0.0
    %694 = vmatprep.subr.mxu0 0.0
    %695 = vmatpush1.msra.mxu0 0.0
    %696 = vmatprep.subr.mxu0 0.0
    %697 = vmatpush1.msra.mxu0 0.0
    %698 = vmatprep.subr.mxu0 0.0
    %699 = vmatpush1.msra.mxu0 0.0
    %700 = vmatprep.subr.mxu0 0.0
    %701 = vmatpush1.msra.mxu0 0.0
    %702 = vmatprep.subr.mxu0 0.0
    %703 = vmatpush1.msra.mxu0 0.0
    %704 = vmatprep.mubr.f32.mxu0 0.0
    %705 = vmatmul.mubr.f32.gmra.mrb[0].mxu0 %v623
    %v706 = vpop.f32.mrb[0].mxu0
    %v707 = vadd.f32 0.0, %v706
    %v708 = vpop.f32.mrb[0].mxu0
    %v709 = vadd.f32 0.0, %v708
    %710 = vmatprep.mubr.f32.mxu0 0.0
    %711 = vmatmul.mubr.f32.gmra.mrb[0].mxu0 %v626
    %v712 = vpop.f32.mrb[0].mxu0
    %v713 = vadd.f32 0.0, %v712
    %v714 = vpop.f32.mrb[0].mxu0
    %v715 = vadd.f32 0.0, %v714
    %716 = vmatprep.mubr.f32.mxu0 0.0
    %717 = vmatmul.mubr.f32.gmra.mrb[0].mxu0 %v629
    %v718 = vpop.f32.mrb[0].mxu0
    %v719 = vadd.f32 0.0, %v718
    %v720 = vpop.f32.mrb[0].mxu0
    %v721 = vadd.f32 0.0, %v720
    %722 = vmatprep.mubr.f32.mxu0 0.0
    %723 = vmatmul.mubr.f32.gmra.mrb[0].mxu0 %v632
    %v724 = vpop.f32.mrb[0].mxu0
    %v725 = vadd.f32 0.0, %v724
    %v726 = vpop.f32.mrb[0].mxu0
    %v727 = vadd.f32 0.0, %v726
    %728 = vmatprep.mubr.f32.mxu0 0.0
    %729 = vmatmul.mubr.f32.gmra.mrb[0].mxu0 %v635
    %v730 = vpop.f32.mrb[0].mxu0
    %v731 = vadd.f32 0.0, %v730
    %v732 = vpop.f32.mrb[0].mxu0
    %v733 = vadd.f32 0.0, %v732
    %734 = vmatprep.mubr.f32.mxu0 0.0
    %735 = vmatmul.mubr.f32.gmra.mrb[0].mxu0 %v638
    %v736 = vpop.f32.mrb[0].mxu0
    %v737 = vadd.f32 0.0, %v736
    %v738 = vpop.f32.mrb[0].mxu0
    %v739 = vadd.f32 0.0, %v738
    %740 = vdwg.mxu0
    %v741 = vadd.f32 %v31, %v707
    %v742 = vadd.f32 %v34, %v709
    %v743 = vadd.f32 %v32, %v713
    %v744 = vadd.f32 %v35, %v715
    %v745 = vadd.f32 %v31, %v719
    %v746 = vadd.f32 %v34, %v721
    %v747 = vadd.f32 %v32, %v725
    %v748 = vadd.f32 %v35, %v727
    %v749 = vadd.f32 %v31, %v731
    %v750 = vadd.f32 %v34, %v733
    %v751 = vadd.f32 %v32, %v737
    %v752 = vadd.f32 %v35, %v739
    %753 = vset.pattern.permute.xlu0 7
    %754 = vperm.xlu0 %753, %v69
    %v755 = vpop.permute.xlu0 %754
    %757 = vset.pattern.permute.xlu0 7
    %758 = vperm.xlu0 %757, %v70
    %v759 = vpop.permute.xlu0 %758
    %761 = vset.pattern.permute.xlu0 7
    %762 = vperm.xlu0 %761, %v71
    %v763 = vpop.permute.xlu0 %762
    %765 = vset.pattern.permute.xlu0 7
    %766 = vperm.xlu0 %765, %v72
    %v767 = vpop.permute.xlu0 %766
    %769 = vset.pattern.permute.xlu0 7
    %770 = vperm.xlu0 %769, %v73
    %v771 = vpop.permute.xlu0 %770
    %773 = vset.pattern.permute.xlu0 7
    %774 = vperm.xlu0 %773, %v74
    %v775 = vpop.permute.xlu0 %774
    %v777 = vadd.f32 %v741, %v755
    %v778 = vadd.f32 %v742, %v755
    %v779 = vadd.f32 %v743, %v759
    %v780 = vadd.f32 %v744, %v759
    %v781 = vadd.f32 %v745, %v763
    %v782 = vadd.f32 %v746, %v763
    %v783 = vadd.f32 %v747, %v767
    %v784 = vadd.f32 %v748, %v767
    %v785 = vadd.f32 %v749, %v771
    %v786 = vadd.f32 %v750, %v771
    %v787 = vadd.f32 %v751, %v775
    %v788 = vadd.f32 %v752, %v775
    %s789 = scalar_lea.vmem [#allocation2], 96
    %v790 = vld [vmem:[%s789] sm:$0xff]
    %v791 = vld [vmem:[%s789 + $0x8] sm:$0xff]
    %v792 = vld [vmem:[%s789 + $0x10] sm:$0xff]
    %v793 = vld [vmem:[%s789 + $0x18] sm:$0xff]
    %v794 = vld [vmem:[%s789 + $0x20] sm:$0xff]
    %v795 = vld [vmem:[%s789 + $0x28] sm:$0xff]
    %796 = vset.pattern.permute.xlu0 8
    %797 = vperm.xlu0 %796, %v69
    %v798 = vpop.permute.xlu0 %797
    %800 = vset.pattern.permute.xlu0 8
    %801 = vperm.xlu0 %800, %v70
    %v802 = vpop.permute.xlu0 %801
    %804 = vset.pattern.permute.xlu0 8
    %805 = vperm.xlu0 %804, %v71
    %v806 = vpop.permute.xlu0 %805
    %808 = vset.pattern.permute.xlu0 8
    %809 = vperm.xlu0 %808, %v72
    %v810 = vpop.permute.xlu0 %809
    %812 = vset.pattern.permute.xlu0 8
    %813 = vperm.xlu0 %812, %v73
    %v814 = vpop.permute.xlu0 %813
    %816 = vset.pattern.permute.xlu0 8
    %817 = vperm.xlu0 %816, %v74
    %v818 = vpop.permute.xlu0 %817
    %v821 = vsel %vm105, %v790, 0
    %v824 = vsel %vm105, %v791, 0
    %v827 = vsel %vm105, %v792, 0
    %v830 = vsel %vm105, %v793, 0
    %v833 = vsel %vm105, %v794, 0
    %v836 = vsel %vm105, %v795, 0
    %838 = vmatprep.subr.mxu0 %v778
    %839 = vmatpush1.msra.mxu0 %v777
    %840 = vmatprep.subr.mxu0 %v780
    %841 = vmatpush1.msra.mxu0 %v779
    %842 = vmatprep.subr.mxu0 %v782
    %843 = vmatpush1.msra.mxu0 %v781
    %844 = vmatprep.subr.mxu0 %v784
    %845 = vmatpush1.msra.mxu0 %v783
    %846 = vmatprep.subr.mxu0 %v786
    %847 = vmatpush1.msra.mxu0 %v785
    %848 = vmatprep.subr.mxu0 %v788
    %849 = vmatpush1.msra.mxu0 %v787
    %850 = vmatprep.subr.mxu0 0.0
    %851 = vmatpush1.msra.mxu0 0.0
    %852 = vmatprep.subr.mxu0 0.0
    %853 = vmatpush1.msra.mxu0 0.0
    %854 = vmatprep.subr.mxu0 0.0
    %855 = vmatpush1.msra.mxu0 0.0
    %856 = vmatprep.subr.mxu0 0.0
    %857 = vmatpush1.msra.mxu0 0.0
    %858 = vmatprep.subr.mxu0 0.0
    %859 = vmatpush1.msra.mxu0 0.0
    %860 = vmatprep.subr.mxu0 0.0
    %861 = vmatpush1.msra.mxu0 0.0
    %862 = vmatprep.subr.mxu0 0.0
    %863 = vmatpush1.msra.mxu0 0.0
    %864 = vmatprep.subr.mxu0 0.0
    %865 = vmatpush1.msra.mxu0 0.0
    %866 = vmatprep.subr.mxu0 0.0
    %867 = vmatpush1.msra.mxu0 0.0
    %868 = vmatprep.subr.mxu0 0.0
    %869 = vmatpush1.msra.mxu0 0.0
    %870 = vmatprep.subr.mxu0 0.0
    %871 = vmatpush1.msra.mxu0 0.0
    %872 = vmatprep.subr.mxu0 0.0
    %873 = vmatpush1.msra.mxu0 0.0
    %874 = vmatprep.subr.mxu0 0.0
    %875 = vmatpush1.msra.mxu0 0.0
    %876 = vmatprep.subr.mxu0 0.0
    %877 = vmatpush1.msra.mxu0 0.0
    %878 = vmatprep.subr.mxu0 0.0
    %879 = vmatpush1.msra.mxu0 0.0
    %880 = vmatprep.subr.mxu0 0.0
    %881 = vmatpush1.msra.mxu0 0.0
    %882 = vmatprep.subr.mxu0 0.0
    %883 = vmatpush1.msra.mxu0 0.0
    %884 = vmatprep.subr.mxu0 0.0
    %885 = vmatpush1.msra.mxu0 0.0
    %886 = vmatprep.subr.mxu0 0.0
    %887 = vmatpush1.msra.mxu0 0.0
    %888 = vmatprep.subr.mxu0 0.0
    %889 = vmatpush1.msra.mxu0 0.0
    %890 = vmatprep.subr.mxu0 0.0
    %891 = vmatpush1.msra.mxu0 0.0
    %892 = vmatprep.subr.mxu0 0.0
    %893 = vmatpush1.msra.mxu0 0.0
    %894 = vmatprep.subr.mxu0 0.0
    %895 = vmatpush1.msra.mxu0 0.0
    %896 = vmatprep.subr.mxu0 0.0
    %897 = vmatpush1.msra.mxu0 0.0
    %898 = vmatprep.subr.mxu0 0.0
    %899 = vmatpush1.msra.mxu0 0.0
    %900 = vmatprep.subr.mxu0 0.0
    %901 = vmatpush1.msra.mxu0 0.0
    %902 = vmatprep.mubr.f32.mxu0 0.0
    %903 = vmatmul.mubr.f32.gmra.mrb[0].mxu0 %v821
    %v904 = vpop.f32.mrb[0].mxu0
    %v905 = vadd.f32 %v798, %v904
    %v906 = vpop.f32.mrb[0].mxu0
    %v907 = vadd.f32 %v798, %v906
    %908 = vmatprep.mubr.f32.mxu0 0.0
    %909 = vmatmul.mubr.f32.gmra.mrb[0].mxu0 %v824
    %v910 = vpop.f32.mrb[0].mxu0
    %v911 = vadd.f32 %v802, %v910
    %v912 = vpop.f32.mrb[0].mxu0
    %v913 = vadd.f32 %v802, %v912
    %914 = vmatprep.mubr.f32.mxu0 0.0
    %915 = vmatmul.mubr.f32.gmra.mrb[0].mxu0 %v827
    %v916 = vpop.f32.mrb[0].mxu0
    %v917 = vadd.f32 %v806, %v916
    %v918 = vpop.f32.mrb[0].mxu0
    %v919 = vadd.f32 %v806, %v918
    %920 = vmatprep.mubr.f32.mxu0 0.0
    %921 = vmatmul.mubr.f32.gmra.mrb[0].mxu0 %v830
    %v922 = vpop.f32.mrb[0].mxu0
    %v923 = vadd.f32 %v810, %v922
    %v924 = vpop.f32.mrb[0].mxu0
    %v925 = vadd.f32 %v810, %v924
    %926 = vmatprep.mubr.f32.mxu0 0.0
    %927 = vmatmul.mubr.f32.gmra.mrb[0].mxu0 %v833
    %v928 = vpop.f32.mrb[0].mxu0
    %v929 = vadd.f32 %v814, %v928
    %v930 = vpop.f32.mrb[0].mxu0
    %v931 = vadd.f32 %v814, %v930
    %932 = vmatprep.mubr.f32.mxu0 0.0
    %933 = vmatmul.mubr.f32.gmra.mrb[0].mxu0 %v836
    %v934 = vpop.f32.mrb[0].mxu0
    %v935 = vadd.f32 %v818, %v934
    %v936 = vpop.f32.mrb[0].mxu0
    %v937 = vadd.f32 %v818, %v936
    %938 = vdwg.mxu0
    %vm939 = vcmp.ge.f32.partialorder %v905, 0.0
    %vm940 = vcmp.ge.f32.partialorder %v907, 0.0
    %vm941 = vcmp.ge.f32.partialorder %v911, 0.0
    %vm942 = vcmp.ge.f32.partialorder %v913, 0.0
    %vm943 = vcmp.ge.f32.partialorder %v917, 0.0
    %vm944 = vcmp.ge.f32.partialorder %v919, 0.0
    %vm945 = vcmp.ge.f32.partialorder %v923, 0.0
    %vm946 = vcmp.ge.f32.partialorder %v925, 0.0
    %vm947 = vcmp.ge.f32.partialorder %v929, 0.0
    %vm948 = vcmp.ge.f32.partialorder %v931, 0.0
    %vm949 = vcmp.ge.f32.partialorder %v935, 0.0
    %vm950 = vcmp.ge.f32.partialorder %v937, 0.0
    %951 = vset.pattern.permute.xlu0 9
    %952 = vperm.xlu0 %951, %v69
    %v953 = vpop.permute.xlu0 %952
    %955 = vset.pattern.permute.xlu0 9
    %956 = vperm.xlu0 %955, %v70
    %v957 = vpop.permute.xlu0 %956
    %959 = vset.pattern.permute.xlu0 9
    %960 = vperm.xlu0 %959, %v71
    %v961 = vpop.permute.xlu0 %960
    %963 = vset.pattern.permute.xlu0 9
    %964 = vperm.xlu0 %963, %v72
    %v965 = vpop.permute.xlu0 %964
    %967 = vset.pattern.permute.xlu0 9
    %968 = vperm.xlu0 %967, %v73
    %v969 = vpop.permute.xlu0 %968
    %971 = vset.pattern.permute.xlu0 9
    %972 = vperm.xlu0 %971, %v74
    %v973 = vpop.permute.xlu0 %972
    %v975 = vmul.f32 %v905, %v953
    %v976 = vmul.f32 %v907, %v953
    %v977 = vmul.f32 %v911, %v957
    %v978 = vmul.f32 %v913, %v957
    %v979 = vmul.f32 %v917, %v961
    %v980 = vmul.f32 %v919, %v961
    %v981 = vmul.f32 %v923, %v965
    %v982 = vmul.f32 %v925, %v965
    %v983 = vmul.f32 %v929, %v969
    %v984 = vmul.f32 %v931, %v969
    %v985 = vmul.f32 %v935, %v973
    %v986 = vmul.f32 %v937, %v973
    %v987 = vsel %vm939, %v905, %v975
    %v988 = vsel %vm940, %v907, %v976
    %v989 = vsel %vm941, %v911, %v977
    %v990 = vsel %vm942, %v913, %v978
    %v991 = vsel %vm943, %v917, %v979
    %v992 = vsel %vm944, %v919, %v980
    %v993 = vsel %vm945, %v923, %v981
    %v994 = vsel %vm946, %v925, %v982
    %v995 = vsel %vm947, %v929, %v983
    %v996 = vsel %vm948, %v931, %v984
    %v997 = vsel %vm949, %v935, %v985
    %v998 = vsel %vm950, %v937, %v986
    %999 = vset.pattern.permute.xlu0 12
    %1000 = vperm.xlu0 %999, %v69
    %v1001 = vpop.permute.xlu0 %1000
    %1003 = vset.pattern.permute.xlu0 12
    %1004 = vperm.xlu0 %1003, %v70
    %v1005 = vpop.permute.xlu0 %1004
    %1007 = vset.pattern.permute.xlu0 12
    %1008 = vperm.xlu0 %1007, %v71
    %v1009 = vpop.permute.xlu0 %1008
    %1011 = vset.pattern.permute.xlu0 12
    %1012 = vperm.xlu0 %1011, %v72
    %v1013 = vpop.permute.xlu0 %1012
    %1015 = vset.pattern.permute.xlu0 12
    %1016 = vperm.xlu0 %1015, %v73
    %v1017 = vpop.permute.xlu0 %1016
    %1019 = vset.pattern.permute.xlu0 12
    %1020 = vperm.xlu0 %1019, %v74
    %v1021 = vpop.permute.xlu0 %1020
    %v1023 = vmul.f32 %v987, %v1001
    %v1024 = vmul.f32 %v988, %v1001
    %v1025 = vmul.f32 %v989, %v1005
    %v1026 = vmul.f32 %v990, %v1005
    %v1027 = vmul.f32 %v991, %v1009
    %v1028 = vmul.f32 %v992, %v1009
    %v1029 = vmul.f32 %v993, %v1013
    %v1030 = vmul.f32 %v994, %v1013
    %v1031 = vmul.f32 %v995, %v1017
    %v1032 = vmul.f32 %v996, %v1017
    %v1033 = vmul.f32 %v997, %v1021
    %v1034 = vmul.f32 %v998, %v1021
    %1035 = vrot.lane.b32.xlu0 %v987, 32
    %v1036 = vpop.permute.xlu0 %1035
    %1037 = vrot.lane.b32.xlu0 %v989, 32
    %v1038 = vpop.permute.xlu0 %1037
    %1039 = vrot.lane.b32.xlu0 %v991, 32
    %v1040 = vpop.permute.xlu0 %1039
    %1041 = vrot.lane.b32.xlu0 %v993, 32
    %v1042 = vpop.permute.xlu0 %1041
    %1043 = vrot.lane.b32.xlu0 %v995, 32
    %v1044 = vpop.permute.xlu0 %1043
    %1045 = vrot.lane.b32.xlu0 %v997, 32
    %v1046 = vpop.permute.xlu0 %1045
    %1047 = vrot.lane.b32.xlu0 %v988, 32
    %v1048 = vpop.permute.xlu0 %1047
    %1049 = vrot.lane.b32.xlu0 %v990, 32
    %v1050 = vpop.permute.xlu0 %1049
    %1051 = vrot.lane.b32.xlu0 %v992, 32
    %v1052 = vpop.permute.xlu0 %1051
    %1053 = vrot.lane.b32.xlu0 %v994, 32
    %v1054 = vpop.permute.xlu0 %1053
    %1055 = vrot.lane.b32.xlu0 %v996, 32
    %v1056 = vpop.permute.xlu0 %1055
    %1057 = vrot.lane.b32.xlu0 %v998, 32
    %v1058 = vpop.permute.xlu0 %1057
    %v1059 = vsel %vm446, %v1036, %v1048
    %v1060 = vsel %vm446, %v1038, %v1050
    %v1061 = vsel %vm446, %v1040, %v1052
    %v1062 = vsel %vm446, %v1042, %v1054
    %v1063 = vsel %vm446, %v1044, %v1056
    %v1064 = vsel %vm446, %v1046, %v1058
    %v1065 = vsel %vm446, %v1048, %v1036
    %v1066 = vsel %vm446, %v1050, %v1038
    %v1067 = vsel %vm446, %v1052, %v1040
    %v1068 = vsel %vm446, %v1054, %v1042
    %v1069 = vsel %vm446, %v1056, %v1044
    %v1070 = vsel %vm446, %v1058, %v1046
    %v1071 = vsel %vm420, %v1065, 0.0
    %v1072 = vsel %vm421, %v1059, 0.0
    %v1073 = vsel %vm420, %v1066, 0.0
    %v1074 = vsel %vm421, %v1060, 0.0
    %v1075 = vsel %vm420, %v1067, 0.0
    %v1076 = vsel %vm421, %v1061, 0.0
    %v1077 = vsel %vm420, %v1068, 0.0
    %v1078 = vsel %vm421, %v1062, 0.0
    %v1079 = vsel %vm420, %v1069, 0.0
    %v1080 = vsel %vm421, %v1063, 0.0
    %v1081 = vsel %vm420, %v1070, 0.0
    %v1082 = vsel %vm421, %v1064, 0.0
    %1083 = vset.pattern.permute.xlu0 11
    %1084 = vperm.xlu0 %1083, %v69
    %v1085 = vpop.permute.xlu0 %1084
    %1087 = vset.pattern.permute.xlu0 11
    %1088 = vperm.xlu0 %1087, %v70
    %v1089 = vpop.permute.xlu0 %1088
    %1091 = vset.pattern.permute.xlu0 11
    %1092 = vperm.xlu0 %1091, %v71
    %v1093 = vpop.permute.xlu0 %1092
    %1095 = vset.pattern.permute.xlu0 11
    %1096 = vperm.xlu0 %1095, %v72
    %v1097 = vpop.permute.xlu0 %1096
    %1099 = vset.pattern.permute.xlu0 11
    %1100 = vperm.xlu0 %1099, %v73
    %v1101 = vpop.permute.xlu0 %1100
    %1103 = vset.pattern.permute.xlu0 11
    %1104 = vperm.xlu0 %1103, %v74
    %v1105 = vpop.permute.xlu0 %1104
    %v1107 = vmul.f32 %v1071, %v1085
    %v1108 = vmul.f32 %v1072, %v1085
    %v1109 = vmul.f32 %v1073, %v1089
    %v1110 = vmul.f32 %v1074, %v1089
    %v1111 = vmul.f32 %v1075, %v1093
    %v1112 = vmul.f32 %v1076, %v1093
    %v1113 = vmul.f32 %v1077, %v1097
    %v1114 = vmul.f32 %v1078, %v1097
    %v1115 = vmul.f32 %v1079, %v1101
    %v1116 = vmul.f32 %v1080, %v1101
    %v1117 = vmul.f32 %v1081, %v1105
    %v1118 = vmul.f32 %v1082, %v1105
    %v1119 = vadd.f32 %v1023, %v1107
    %v1120 = vadd.f32 %v1024, %v1108
    %v1121 = vadd.f32 %v1025, %v1109
    %v1122 = vadd.f32 %v1026, %v1110
    %v1123 = vadd.f32 %v1027, %v1111
    %v1124 = vadd.f32 %v1028, %v1112
    %v1125 = vadd.f32 %v1029, %v1113
    %v1126 = vadd.f32 %v1030, %v1114
    %v1127 = vadd.f32 %v1031, %v1115
    %v1128 = vadd.f32 %v1032, %v1116
    %v1129 = vadd.f32 %v1033, %v1117
    %v1130 = vadd.f32 %v1034, %v1118
    %vm1131 = vcmp.ge.s32.totalorder %v61, 64
    %vm1132 = vcmp.ge.s32.totalorder %v62, 64
    %1133 = vrot.lane.b32.xlu0 %v987, 64
    %v1134 = vpop.permute.xlu0 %1133
    %1135 = vrot.lane.b32.xlu0 %v989, 64
    %v1136 = vpop.permute.xlu0 %1135
    %1137 = vrot.lane.b32.xlu0 %v991, 64
    %v1138 = vpop.permute.xlu0 %1137
    %1139 = vrot.lane.b32.xlu0 %v993, 64
    %v1140 = vpop.permute.xlu0 %1139
    %1141 = vrot.lane.b32.xlu0 %v995, 64
    %v1142 = vpop.permute.xlu0 %1141
    %1143 = vrot.lane.b32.xlu0 %v997, 64
    %v1144 = vpop.permute.xlu0 %1143
    %1145 = vrot.lane.b32.xlu0 %v988, 64
    %v1146 = vpop.permute.xlu0 %1145
    %1147 = vrot.lane.b32.xlu0 %v990, 64
    %v1148 = vpop.permute.xlu0 %1147
    %1149 = vrot.lane.b32.xlu0 %v992, 64
    %v1150 = vpop.permute.xlu0 %1149
    %1151 = vrot.lane.b32.xlu0 %v994, 64
    %v1152 = vpop.permute.xlu0 %1151
    %1153 = vrot.lane.b32.xlu0 %v996, 64
    %v1154 = vpop.permute.xlu0 %1153
    %1155 = vrot.lane.b32.xlu0 %v998, 64
    %v1156 = vpop.permute.xlu0 %1155
    %vm1157 = vcmp.lt.s32.totalorder %v37, 64
    %v1158 = vsel %vm1157, %v1134, %v1146
    %v1159 = vsel %vm1157, %v1136, %v1148
    %v1160 = vsel %vm1157, %v1138, %v1150
    %v1161 = vsel %vm1157, %v1140, %v1152
    %v1162 = vsel %vm1157, %v1142, %v1154
    %v1163 = vsel %vm1157, %v1144, %v1156
    %v1164 = vsel %vm1157, %v1146, %v1134
    %v1165 = vsel %vm1157, %v1148, %v1136
    %v1166 = vsel %vm1157, %v1150, %v1138
    %v1167 = vsel %vm1157, %v1152, %v1140
    %v1168 = vsel %vm1157, %v1154, %v1142
    %v1169 = vsel %vm1157, %v1156, %v1144
    %v1170 = vsel %vm1131, %v1164, 0.0
    %v1171 = vsel %vm1132, %v1158, 0.0
    %v1172 = vsel %vm1131, %v1165, 0.0
    %v1173 = vsel %vm1132, %v1159, 0.0
    %v1174 = vsel %vm1131, %v1166, 0.0
    %v1175 = vsel %vm1132, %v1160, 0.0
    %v1176 = vsel %vm1131, %v1167, 0.0
    %v1177 = vsel %vm1132, %v1161, 0.0
    %v1178 = vsel %vm1131, %v1168, 0.0
    %v1179 = vsel %vm1132, %v1162, 0.0
    %v1180 = vsel %vm1131, %v1169, 0.0
    %v1181 = vsel %vm1132, %v1163, 0.0
    %1182 = vset.pattern.permute.xlu0 10
    %1183 = vperm.xlu0 %1182, %v69
    %v1184 = vpop.permute.xlu0 %1183
    %1186 = vset.pattern.permute.xlu0 10
    %1187 = vperm.xlu0 %1186, %v70
    %v1188 = vpop.permute.xlu0 %1187
    %1190 = vset.pattern.permute.xlu0 10
    %1191 = vperm.xlu0 %1190, %v71
    %v1192 = vpop.permute.xlu0 %1191
    %1194 = vset.pattern.permute.xlu0 10
    %1195 = vperm.xlu0 %1194, %v72
    %v1196 = vpop.permute.xlu0 %1195
    %1198 = vset.pattern.permute.xlu0 10
    %1199 = vperm.xlu0 %1198, %v73
    %v1200 = vpop.permute.xlu0 %1199
    %1202 = vset.pattern.permute.xlu0 10
    %1203 = vperm.xlu0 %1202, %v74
    %v1204 = vpop.permute.xlu0 %1203
    %v1206 = vmul.f32 %v1170, %v1184
    %v1207 = vmul.f32 %v1171, %v1184
    %v1208 = vmul.f32 %v1172, %v1188
    %v1209 = vmul.f32 %v1173, %v1188
    %v1210 = vmul.f32 %v1174, %v1192
    %v1211 = vmul.f32 %v1175, %v1192
    %v1212 = vmul.f32 %v1176, %v1196
    %v1213 = vmul.f32 %v1177, %v1196
    %v1214 = vmul.f32 %v1178, %v1200
    %v1215 = vmul.f32 %v1179, %v1200
    %v1216 = vmul.f32 %v1180, %v1204
    %v1217 = vmul.f32 %v1181, %v1204
    %v1218 = vadd.f32 %v1119, %v1206
    %v1219 = vadd.f32 %v1120, %v1207
    %v1220 = vadd.f32 %v1121, %v1208
    %v1221 = vadd.f32 %v1122, %v1209
    %v1222 = vadd.f32 %v1123, %v1210
    %v1223 = vadd.f32 %v1124, %v1211
    %v1224 = vadd.f32 %v1125, %v1212
    %v1225 = vadd.f32 %v1126, %v1213
    %v1226 = vadd.f32 %v1127, %v1214
    %v1227 = vadd.f32 %v1128, %v1215
    %v1228 = vadd.f32 %v1129, %v1216
    %v1229 = vadd.f32 %v1130, %v1217
    %1230 = vset.pattern.permute.xlu0 13
    %1231 = vperm.xlu0 %1230, %v69
    %v1232 = vpop.permute.xlu0 %1231
    %1234 = vset.pattern.permute.xlu0 13
    %1235 = vperm.xlu0 %1234, %v70
    %v1236 = vpop.permute.xlu0 %1235
    %1238 = vset.pattern.permute.xlu0 13
    %1239 = vperm.xlu0 %1238, %v71
    %v1240 = vpop.permute.xlu0 %1239
    %1242 = vset.pattern.permute.xlu0 13
    %1243 = vperm.xlu0 %1242, %v72
    %v1244 = vpop.permute.xlu0 %1243
    %1246 = vset.pattern.permute.xlu0 13
    %1247 = vperm.xlu0 %1246, %v73
    %v1248 = vpop.permute.xlu0 %1247
    %1250 = vset.pattern.permute.xlu0 13
    %1251 = vperm.xlu0 %1250, %v74
    %v1252 = vpop.permute.xlu0 %1251
    %v1254 = vadd.f32 %v1218, %v1232
    %v1255 = vadd.f32 %v1219, %v1232
    %v1256 = vadd.f32 %v1220, %v1236
    %v1257 = vadd.f32 %v1221, %v1236
    %v1258 = vadd.f32 %v1222, %v1240
    %v1259 = vadd.f32 %v1223, %v1240
    %v1260 = vadd.f32 %v1224, %v1244
    %v1261 = vadd.f32 %v1225, %v1244
    %v1262 = vadd.f32 %v1226, %v1248
    %v1263 = vadd.f32 %v1227, %v1248
    %v1264 = vadd.f32 %v1228, %v1252
    %v1265 = vadd.f32 %v1229, %v1252
    %vm1266 = vcmp.ge.f32.partialorder %v1254, 0.0
    %vm1267 = vcmp.ge.f32.partialorder %v1255, 0.0
    %vm1268 = vcmp.ge.f32.partialorder %v1256, 0.0
    %vm1269 = vcmp.ge.f32.partialorder %v1257, 0.0
    %vm1270 = vcmp.ge.f32.partialorder %v1258, 0.0
    %vm1271 = vcmp.ge.f32.partialorder %v1259, 0.0
    %vm1272 = vcmp.ge.f32.partialorder %v1260, 0.0
    %vm1273 = vcmp.ge.f32.partialorder %v1261, 0.0
    %vm1274 = vcmp.ge.f32.partialorder %v1262, 0.0
    %vm1275 = vcmp.ge.f32.partialorder %v1263, 0.0
    %vm1276 = vcmp.ge.f32.partialorder %v1264, 0.0
    %vm1277 = vcmp.ge.f32.partialorder %v1265, 0.0
    %1278 = vset.pattern.permute.xlu0 14
    %1279 = vperm.xlu0 %1278, %v69
    %v1280 = vpop.permute.xlu0 %1279
    %1282 = vset.pattern.permute.xlu0 14
    %1283 = vperm.xlu0 %1282, %v70
    %v1284 = vpop.permute.xlu0 %1283
    %1286 = vset.pattern.permute.xlu0 14
    %1287 = vperm.xlu0 %1286, %v71
    %v1288 = vpop.permute.xlu0 %1287
    %1290 = vset.pattern.permute.xlu0 14
    %1291 = vperm.xlu0 %1290, %v72
    %v1292 = vpop.permute.xlu0 %1291
    %1294 = vset.pattern.permute.xlu0 14
    %1295 = vperm.xlu0 %1294, %v73
    %v1296 = vpop.permute.xlu0 %1295
    %1298 = vset.pattern.permute.xlu0 14
    %1299 = vperm.xlu0 %1298, %v74
    %v1300 = vpop.permute.xlu0 %1299
    %v1302 = vmul.f32 %v1254, %v1280
    %v1303 = vmul.f32 %v1255, %v1280
    %v1304 = vmul.f32 %v1256, %v1284
    %v1305 = vmul.f32 %v1257, %v1284
    %v1306 = vmul.f32 %v1258, %v1288
    %v1307 = vmul.f32 %v1259, %v1288
    %v1308 = vmul.f32 %v1260, %v1292
    %v1309 = vmul.f32 %v1261, %v1292
    %v1310 = vmul.f32 %v1262, %v1296
    %v1311 = vmul.f32 %v1263, %v1296
    %v1312 = vmul.f32 %v1264, %v1300
    %v1313 = vmul.f32 %v1265, %v1300
    %v1314 = vsel %vm1266, %v1254, %v1302
    %v1315 = vsel %vm1267, %v1255, %v1303
    %v1316 = vsel %vm1268, %v1256, %v1304
    %v1317 = vsel %vm1269, %v1257, %v1305
    %v1318 = vsel %vm1270, %v1258, %v1306
    %v1319 = vsel %vm1271, %v1259, %v1307
    %v1320 = vsel %vm1272, %v1260, %v1308
    %v1321 = vsel %vm1273, %v1261, %v1309
    %v1322 = vsel %vm1274, %v1262, %v1310
    %v1323 = vsel %vm1275, %v1263, %v1311
    %v1324 = vsel %vm1276, %v1264, %v1312
    %v1325 = vsel %vm1277, %v1265, %v1313
    %s1326 = scalar_lea.vmem [#allocation2], 144
    %v1327 = vld [vmem:[%s1326] sm:$0xff]
    %v1328 = vld [vmem:[%s1326 + $0x8] sm:$0xff]
    %v1329 = vld [vmem:[%s1326 + $0x10] sm:$0xff]
    %v1330 = vld [vmem:[%s1326 + $0x18] sm:$0xff]
    %v1331 = vld [vmem:[%s1326 + $0x20] sm:$0xff]
    %v1332 = vld [vmem:[%s1326 + $0x28] sm:$0xff]
    %v1334 = vsel %vm105, %v1327, 0
    %v1337 = vsel %vm105, %v1328, 0
    %v1340 = vsel %vm105, %v1329, 0
    %v1343 = vsel %vm105, %v1330, 0
    %v1346 = vsel %vm105, %v1331, 0
    %v1349 = vsel %vm105, %v1332, 0
    %1351 = vmatprep.subr.mxu0 %v1315
    %1352 = vmatpush1.msra.mxu0 %v1314
    %1353 = vmatprep.subr.mxu0 %v1317
    %1354 = vmatpush1.msra.mxu0 %v1316
    %1355 = vmatprep.subr.mxu0 %v1319
    %1356 = vmatpush1.msra.mxu0 %v1318
    %1357 = vmatprep.subr.mxu0 %v1321
    %1358 = vmatpush1.msra.mxu0 %v1320
    %1359 = vmatprep.subr.mxu0 %v1323
    %1360 = vmatpush1.msra.mxu0 %v1322
    %1361 = vmatprep.subr.mxu0 %v1325
    %1362 = vmatpush1.msra.mxu0 %v1324
    %1363 = vmatprep.subr.mxu0 0.0
    %1364 = vmatpush1.msra.mxu0 0.0
    %1365 = vmatprep.subr.mxu0 0.0
    %1366 = vmatpush1.msra.mxu0 0.0
    %1367 = vmatprep.subr.mxu0 0.0
    %1368 = vmatpush1.msra.mxu0 0.0
    %1369 = vmatprep.subr.mxu0 0.0
    %1370 = vmatpush1.msra.mxu0 0.0
    %1371 = vmatprep.subr.mxu0 0.0
    %1372 = vmatpush1.msra.mxu0 0.0
    %1373 = vmatprep.subr.mxu0 0.0
    %1374 = vmatpush1.msra.mxu0 0.0
    %1375 = vmatprep.subr.mxu0 0.0
    %1376 = vmatpush1.msra.mxu0 0.0
    %1377 = vmatprep.subr.mxu0 0.0
    %1378 = vmatpush1.msra.mxu0 0.0
    %1379 = vmatprep.subr.mxu0 0.0
    %1380 = vmatpush1.msra.mxu0 0.0
    %1381 = vmatprep.subr.mxu0 0.0
    %1382 = vmatpush1.msra.mxu0 0.0
    %1383 = vmatprep.subr.mxu0 0.0
    %1384 = vmatpush1.msra.mxu0 0.0
    %1385 = vmatprep.subr.mxu0 0.0
    %1386 = vmatpush1.msra.mxu0 0.0
    %1387 = vmatprep.subr.mxu0 0.0
    %1388 = vmatpush1.msra.mxu0 0.0
    %1389 = vmatprep.subr.mxu0 0.0
    %1390 = vmatpush1.msra.mxu0 0.0
    %1391 = vmatprep.subr.mxu0 0.0
    %1392 = vmatpush1.msra.mxu0 0.0
    %1393 = vmatprep.subr.mxu0 0.0
    %1394 = vmatpush1.msra.mxu0 0.0
    %1395 = vmatprep.subr.mxu0 0.0
    %1396 = vmatpush1.msra.mxu0 0.0
    %1397 = vmatprep.subr.mxu0 0.0
    %1398 = vmatpush1.msra.mxu0 0.0
    %1399 = vmatprep.subr.mxu0 0.0
    %1400 = vmatpush1.msra.mxu0 0.0
    %1401 = vmatprep.subr.mxu0 0.0
    %1402 = vmatpush1.msra.mxu0 0.0
    %1403 = vmatprep.subr.mxu0 0.0
    %1404 = vmatpush1.msra.mxu0 0.0
    %1405 = vmatprep.subr.mxu0 0.0
    %1406 = vmatpush1.msra.mxu0 0.0
    %1407 = vmatprep.subr.mxu0 0.0
    %1408 = vmatpush1.msra.mxu0 0.0
    %1409 = vmatprep.subr.mxu0 0.0
    %1410 = vmatpush1.msra.mxu0 0.0
    %1411 = vmatprep.subr.mxu0 0.0
    %1412 = vmatpush1.msra.mxu0 0.0
    %1413 = vmatprep.subr.mxu0 0.0
    %1414 = vmatpush1.msra.mxu0 0.0
    %1415 = vmatprep.mubr.f32.mxu0 0.0
    %1416 = vmatmul.mubr.f32.gmra.mrb[0].mxu0 %v1334
    %v1417 = vpop.f32.mrb[0].mxu0
    %v1418 = vadd.f32 0.0, %v1417
    %v1419 = vpop.f32.mrb[0].mxu0
    %v1420 = vadd.f32 0.0, %v1419
    %1421 = vmatprep.mubr.f32.mxu0 0.0
    %1422 = vmatmul.mubr.f32.gmra.mrb[0].mxu0 %v1337
    %v1423 = vpop.f32.mrb[0].mxu0
    %v1424 = vadd.f32 0.0, %v1423
    %v1425 = vpop.f32.mrb[0].mxu0
    %v1426 = vadd.f32 0.0, %v1425
    %1427 = vmatprep.mubr.f32.mxu0 0.0
    %1428 = vmatmul.mubr.f32.gmra.mrb[0].mxu0 %v1340
    %v1429 = vpop.f32.mrb[0].mxu0
    %v1430 = vadd.f32 0.0, %v1429
    %v1431 = vpop.f32.mrb[0].mxu0
    %v1432 = vadd.f32 0.0, %v1431
    %1433 = vmatprep.mubr.f32.mxu0 0.0
    %1434 = vmatmul.mubr.f32.gmra.mrb[0].mxu0 %v1343
    %v1435 = vpop.f32.mrb[0].mxu0
    %v1436 = vadd.f32 0.0, %v1435
    %v1437 = vpop.f32.mrb[0].mxu0
    %v1438 = vadd.f32 0.0, %v1437
    %1439 = vmatprep.mubr.f32.mxu0 0.0
    %1440 = vmatmul.mubr.f32.gmra.mrb[0].mxu0 %v1346
    %v1441 = vpop.f32.mrb[0].mxu0
    %v1442 = vadd.f32 0.0, %v1441
    %v1443 = vpop.f32.mrb[0].mxu0
    %v1444 = vadd.f32 0.0, %v1443
    %1445 = vmatprep.mubr.f32.mxu0 0.0
    %1446 = vmatmul.mubr.f32.gmra.mrb[0].mxu0 %v1349
    %v1447 = vpop.f32.mrb[0].mxu0
    %v1448 = vadd.f32 0.0, %v1447
    %v1449 = vpop.f32.mrb[0].mxu0
    %v1450 = vadd.f32 0.0, %v1449
    %1451 = vdwg.mxu0
    %v1452 = vadd.f32 %v777, %v1418
    %v1453 = vadd.f32 %v778, %v1420
    %v1454 = vadd.f32 %v779, %v1424
    %v1455 = vadd.f32 %v780, %v1426
    %v1456 = vadd.f32 %v781, %v1430
    %v1457 = vadd.f32 %v782, %v1432
    %v1458 = vadd.f32 %v783, %v1436
    %v1459 = vadd.f32 %v784, %v1438
    %v1460 = vadd.f32 %v785, %v1442
    %v1461 = vadd.f32 %v786, %v1444
    %v1462 = vadd.f32 %v787, %v1448
    %v1463 = vadd.f32 %v788, %v1450
    %1464 = vset.pattern.permute.xlu0 15
    %1465 = vperm.xlu0 %1464, %v69
    %v1466 = vpop.permute.xlu0 %1465
    %1468 = vset.pattern.permute.xlu0 15
    %1469 = vperm.xlu0 %1468, %v70
    %v1470 = vpop.permute.xlu0 %1469
    %1472 = vset.pattern.permute.xlu0 15
    %1473 = vperm.xlu0 %1472, %v71
    %v1474 = vpop.permute.xlu0 %1473
    %1476 = vset.pattern.permute.xlu0 15
    %1477 = vperm.xlu0 %1476, %v72
    %v1478 = vpop.permute.xlu0 %1477
    %1480 = vset.pattern.permute.xlu0 15
    %1481 = vperm.xlu0 %1480, %v73
    %v1482 = vpop.permute.xlu0 %1481
    %1484 = vset.pattern.permute.xlu0 15
    %1485 = vperm.xlu0 %1484, %v74
    %v1486 = vpop.permute.xlu0 %1485
    %v1488 = vadd.f32 %v1452, %v1466
    %v1489 = vadd.f32 %v1453, %v1466
    %v1490 = vadd.f32 %v1454, %v1470
    %v1491 = vadd.f32 %v1455, %v1470
    %v1492 = vadd.f32 %v1456, %v1474
    %v1493 = vadd.f32 %v1457, %v1474
    %v1494 = vadd.f32 %v1458, %v1478
    %v1495 = vadd.f32 %v1459, %v1478
    %v1496 = vadd.f32 %v1460, %v1482
    %v1497 = vadd.f32 %v1461, %v1482
    %v1498 = vadd.f32 %v1462, %v1486
    %v1499 = vadd.f32 %v1463, %v1486
    %s1500 = scalar_lea.vmem [#allocation2], 192
    %v1501 = vld [vmem:[%s1500] sm:$0xff]
    %v1502 = vld [vmem:[%s1500 + $0x8] sm:$0xff]
    %v1503 = vld [vmem:[%s1500 + $0x10] sm:$0xff]
    %v1504 = vld [vmem:[%s1500 + $0x18] sm:$0xff]
    %v1505 = vld [vmem:[%s1500 + $0x20] sm:$0xff]
    %v1506 = vld [vmem:[%s1500 + $0x28] sm:$0xff]
    %1507 = vset.pattern.permute.xlu0 16
    %1508 = vperm.xlu0 %1507, %v69
    %v1509 = vpop.permute.xlu0 %1508
    %1511 = vset.pattern.permute.xlu0 16
    %1512 = vperm.xlu0 %1511, %v70
    %v1513 = vpop.permute.xlu0 %1512
    %1515 = vset.pattern.permute.xlu0 16
    %1516 = vperm.xlu0 %1515, %v71
    %v1517 = vpop.permute.xlu0 %1516
    %1519 = vset.pattern.permute.xlu0 16
    %1520 = vperm.xlu0 %1519, %v72
    %v1521 = vpop.permute.xlu0 %1520
    %1523 = vset.pattern.permute.xlu0 16
    %1524 = vperm.xlu0 %1523, %v73
    %v1525 = vpop.permute.xlu0 %1524
    %1527 = vset.pattern.permute.xlu0 16
    %1528 = vperm.xlu0 %1527, %v74
    %v1529 = vpop.permute.xlu0 %1528
    %v1532 = vsel %vm105, %v1501, 0
    %v1535 = vsel %vm105, %v1502, 0
    %v1538 = vsel %vm105, %v1503, 0
    %v1541 = vsel %vm105, %v1504, 0
    %v1544 = vsel %vm105, %v1505, 0
    %v1547 = vsel %vm105, %v1506, 0
    %1549 = vmatprep.subr.mxu0 %v1489
    %1550 = vmatpush1.msra.mxu0 %v1488
    %1551 = vmatprep.subr.mxu0 %v1491
    %1552 = vmatpush1.msra.mxu0 %v1490
    %1553 = vmatprep.subr.mxu0 %v1493
    %1554 = vmatpush1.msra.mxu0 %v1492
    %1555 = vmatprep.subr.mxu0 %v1495
    %1556 = vmatpush1.msra.mxu0 %v1494
    %1557 = vmatprep.subr.mxu0 %v1497
    %1558 = vmatpush1.msra.mxu0 %v1496
    %1559 = vmatprep.subr.mxu0 %v1499
    %1560 = vmatpush1.msra.mxu0 %v1498
    %1561 = vmatprep.subr.mxu0 0.0
    %1562 = vmatpush1.msra.mxu0 0.0
    %1563 = vmatprep.subr.mxu0 0.0
    %1564 = vmatpush1.msra.mxu0 0.0
    %1565 = vmatprep.subr.mxu0 0.0
    %1566 = vmatpush1.msra.mxu0 0.0
    %1567 = vmatprep.subr.mxu0 0.0
    %1568 = vmatpush1.msra.mxu0 0.0
    %1569 = vmatprep.subr.mxu0 0.0
    %1570 = vmatpush1.msra.mxu0 0.0
    %1571 = vmatprep.subr.mxu0 0.0
    %1572 = vmatpush1.msra.mxu0 0.0
    %1573 = vmatprep.subr.mxu0 0.0
    %1574 = vmatpush1.msra.mxu0 0.0
    %1575 = vmatprep.subr.mxu0 0.0
    %1576 = vmatpush1.msra.mxu0 0.0
    %1577 = vmatprep.subr.mxu0 0.0
    %1578 = vmatpush1.msra.mxu0 0.0
    %1579 = vmatprep.subr.mxu0 0.0
    %1580 = vmatpush1.msra.mxu0 0.0
    %1581 = vmatprep.subr.mxu0 0.0
    %1582 = vmatpush1.msra.mxu0 0.0
    %1583 = vmatprep.subr.mxu0 0.0
    %1584 = vmatpush1.msra.mxu0 0.0
    %1585 = vmatprep.subr.mxu0 0.0
    %1586 = vmatpush1.msra.mxu0 0.0
    %1587 = vmatprep.subr.mxu0 0.0
    %1588 = vmatpush1.msra.mxu0 0.0
    %1589 = vmatprep.subr.mxu0 0.0
    %1590 = vmatpush1.msra.mxu0 0.0
    %1591 = vmatprep.subr.mxu0 0.0
    %1592 = vmatpush1.msra.mxu0 0.0
    %1593 = vmatprep.subr.mxu0 0.0
    %1594 = vmatpush1.msra.mxu0 0.0
    %1595 = vmatprep.subr.mxu0 0.0
    %1596 = vmatpush1.msra.mxu0 0.0
    %1597 = vmatprep.subr.mxu0 0.0
    %1598 = vmatpush1.msra.mxu0 0.0
    %1599 = vmatprep.subr.mxu0 0.0
    %1600 = vmatpush1.msra.mxu0 0.0
    %1601 = vmatprep.subr.mxu0 0.0
    %1602 = vmatpush1.msra.mxu0 0.0
    %1603 = vmatprep.subr.mxu0 0.0
    %1604 = vmatpush1.msra.mxu0 0.0
    %1605 = vmatprep.subr.mxu0 0.0
    %1606 = vmatpush1.msra.mxu0 0.0
    %1607 = vmatprep.subr.mxu0 0.0
    %1608 = vmatpush1.msra.mxu0 0.0
    %1609 = vmatprep.subr.mxu0 0.0
    %1610 = vmatpush1.msra.mxu0 0.0
    %1611 = vmatprep.subr.mxu0 0.0
    %1612 = vmatpush1.msra.mxu0 0.0
    %1613 = vmatprep.mubr.f32.mxu0 0.0
    %1614 = vmatmul.mubr.f32.gmra.mrb[0].mxu0 %v1532
    %v1615 = vpop.f32.mrb[0].mxu0
    %v1616 = vadd.f32 %v1509, %v1615
    %v1617 = vpop.f32.mrb[0].mxu0
    %v1618 = vadd.f32 %v1509, %v1617
    %1619 = vmatprep.mubr.f32.mxu0 0.0
    %1620 = vmatmul.mubr.f32.gmra.mrb[0].mxu0 %v1535
    %v1621 = vpop.f32.mrb[0].mxu0
    %v1622 = vadd.f32 %v1513, %v1621
    %v1623 = vpop.f32.mrb[0].mxu0
    %v1624 = vadd.f32 %v1513, %v1623
    %1625 = vmatprep.mubr.f32.mxu0 0.0
    %1626 = vmatmul.mubr.f32.gmra.mrb[0].mxu0 %v1538
    %v1627 = vpop.f32.mrb[0].mxu0
    %v1628 = vadd.f32 %v1517, %v1627
    %v1629 = vpop.f32.mrb[0].mxu0
    %v1630 = vadd.f32 %v1517, %v1629
    %1631 = vmatprep.mubr.f32.mxu0 0.0
    %1632 = vmatmul.mubr.f32.gmra.mrb[0].mxu0 %v1541
    %v1633 = vpop.f32.mrb[0].mxu0
    %v1634 = vadd.f32 %v1521, %v1633
    %v1635 = vpop.f32.mrb[0].mxu0
    %v1636 = vadd.f32 %v1521, %v1635
    %1637 = vmatprep.mubr.f32.mxu0 0.0
    %1638 = vmatmul.mubr.f32.gmra.mrb[0].mxu0 %v1544
    %v1639 = vpop.f32.mrb[0].mxu0
    %v1640 = vadd.f32 %v1525, %v1639
    %v1641 = vpop.f32.mrb[0].mxu0
    %v1642 = vadd.f32 %v1525, %v1641
    %1643 = vmatprep.mubr.f32.mxu0 0.0
    %1644 = vmatmul.mubr.f32.gmra.mrb[0].mxu0 %v1547
    %v1645 = vpop.f32.mrb[0].mxu0
    %v1646 = vadd.f32 %v1529, %v1645
    %v1647 = vpop.f32.mrb[0].mxu0
    %v1648 = vadd.f32 %v1529, %v1647
    %1649 = vdwg.mxu0
    %vm1650 = vcmp.ge.f32.partialorder %v1616, 0.0
    %vm1651 = vcmp.ge.f32.partialorder %v1618, 0.0
    %vm1652 = vcmp.ge.f32.partialorder %v1622, 0.0
    %vm1653 = vcmp.ge.f32.partialorder %v1624, 0.0
    %vm1654 = vcmp.ge.f32.partialorder %v1628, 0.0
    %vm1655 = vcmp.ge.f32.partialorder %v1630, 0.0
    %vm1656 = vcmp.ge.f32.partialorder %v1634, 0.0
    %vm1657 = vcmp.ge.f32.partialorder %v1636, 0.0
    %vm1658 = vcmp.ge.f32.partialorder %v1640, 0.0
    %vm1659 = vcmp.ge.f32.partialorder %v1642, 0.0
    %vm1660 = vcmp.ge.f32.partialorder %v1646, 0.0
    %vm1661 = vcmp.ge.f32.partialorder %v1648, 0.0
    %1662 = vset.pattern.permute.xlu0 17
    %1663 = vperm.xlu0 %1662, %v69
    %v1664 = vpop.permute.xlu0 %1663
    %1666 = vset.pattern.permute.xlu0 17
    %1667 = vperm.xlu0 %1666, %v70
    %v1668 = vpop.permute.xlu0 %1667
    %1670 = vset.pattern.permute.xlu0 17
    %1671 = vperm.xlu0 %1670, %v71
    %v1672 = vpop.permute.xlu0 %1671
    %1674 = vset.pattern.permute.xlu0 17
    %1675 = vperm.xlu0 %1674, %v72
    %v1676 = vpop.permute.xlu0 %1675
    %1678 = vset.pattern.permute.xlu0 17
    %1679 = vperm.xlu0 %1678, %v73
    %v1680 = vpop.permute.xlu0 %1679
    %1682 = vset.pattern.permute.xlu0 17
    %1683 = vperm.xlu0 %1682, %v74
    %v1684 = vpop.permute.xlu0 %1683
    %v1686 = vmul.f32 %v1616, %v1664
    %v1687 = vmul.f32 %v1618, %v1664
    %v1688 = vmul.f32 %v1622, %v1668
    %v1689 = vmul.f32 %v1624, %v1668
    %v1690 = vmul.f32 %v1628, %v1672
    %v1691 = vmul.f32 %v1630, %v1672
    %v1692 = vmul.f32 %v1634, %v1676
    %v1693 = vmul.f32 %v1636, %v1676
    %v1694 = vmul.f32 %v1640, %v1680
    %v1695 = vmul.f32 %v1642, %v1680
    %v1696 = vmul.f32 %v1646, %v1684
    %v1697 = vmul.f32 %v1648, %v1684
    %v1698 = vsel %vm1650, %v1616, %v1686
    %v1699 = vsel %vm1651, %v1618, %v1687
    %v1700 = vsel %vm1652, %v1622, %v1688
    %v1701 = vsel %vm1653, %v1624, %v1689
    %v1702 = vsel %vm1654, %v1628, %v1690
    %v1703 = vsel %vm1655, %v1630, %v1691
    %v1704 = vsel %vm1656, %v1634, %v1692
    %v1705 = vsel %vm1657, %v1636, %v1693
    %v1706 = vsel %vm1658, %v1640, %v1694
    %v1707 = vsel %vm1659, %v1642, %v1695
    %v1708 = vsel %vm1660, %v1646, %v1696
    %v1709 = vsel %vm1661, %v1648, %v1697
    %1710 = vset.pattern.permute.xlu0 20
    %1711 = vperm.xlu0 %1710, %v69
    %v1712 = vpop.permute.xlu0 %1711
    %1714 = vset.pattern.permute.xlu0 20
    %1715 = vperm.xlu0 %1714, %v70
    %v1716 = vpop.permute.xlu0 %1715
    %1718 = vset.pattern.permute.xlu0 20
    %1719 = vperm.xlu0 %1718, %v71
    %v1720 = vpop.permute.xlu0 %1719
    %1722 = vset.pattern.permute.xlu0 20
    %1723 = vperm.xlu0 %1722, %v72
    %v1724 = vpop.permute.xlu0 %1723
    %1726 = vset.pattern.permute.xlu0 20
    %1727 = vperm.xlu0 %1726, %v73
    %v1728 = vpop.permute.xlu0 %1727
    %1730 = vset.pattern.permute.xlu0 20
    %1731 = vperm.xlu0 %1730, %v74
    %v1732 = vpop.permute.xlu0 %1731
    %v1734 = vmul.f32 %v1698, %v1712
    %v1735 = vmul.f32 %v1699, %v1712
    %v1736 = vmul.f32 %v1700, %v1716
    %v1737 = vmul.f32 %v1701, %v1716
    %v1738 = vmul.f32 %v1702, %v1720
    %v1739 = vmul.f32 %v1703, %v1720
    %v1740 = vmul.f32 %v1704, %v1724
    %v1741 = vmul.f32 %v1705, %v1724
    %v1742 = vmul.f32 %v1706, %v1728
    %v1743 = vmul.f32 %v1707, %v1728
    %v1744 = vmul.f32 %v1708, %v1732
    %v1745 = vmul.f32 %v1709, %v1732
    %1746 = vrot.lane.b32.xlu0 %v1698, 64
    %v1747 = vpop.permute.xlu0 %1746
    %1748 = vrot.lane.b32.xlu0 %v1700, 64
    %v1749 = vpop.permute.xlu0 %1748
    %1750 = vrot.lane.b32.xlu0 %v1702, 64
    %v1751 = vpop.permute.xlu0 %1750
    %1752 = vrot.lane.b32.xlu0 %v1704, 64
    %v1753 = vpop.permute.xlu0 %1752
    %1754 = vrot.lane.b32.xlu0 %v1706, 64
    %v1755 = vpop.permute.xlu0 %1754
    %1756 = vrot.lane.b32.xlu0 %v1708, 64
    %v1757 = vpop.permute.xlu0 %1756
    %1758 = vrot.lane.b32.xlu0 %v1699, 64
    %v1759 = vpop.permute.xlu0 %1758
    %1760 = vrot.lane.b32.xlu0 %v1701, 64
    %v1761 = vpop.permute.xlu0 %1760
    %1762 = vrot.lane.b32.xlu0 %v1703, 64
    %v1763 = vpop.permute.xlu0 %1762
    %1764 = vrot.lane.b32.xlu0 %v1705, 64
    %v1765 = vpop.permute.xlu0 %1764
    %1766 = vrot.lane.b32.xlu0 %v1707, 64
    %v1767 = vpop.permute.xlu0 %1766
    %1768 = vrot.lane.b32.xlu0 %v1709, 64
    %v1769 = vpop.permute.xlu0 %1768
    %v1770 = vsel %vm1157, %v1747, %v1759
    %v1771 = vsel %vm1157, %v1749, %v1761
    %v1772 = vsel %vm1157, %v1751, %v1763
    %v1773 = vsel %vm1157, %v1753, %v1765
    %v1774 = vsel %vm1157, %v1755, %v1767
    %v1775 = vsel %vm1157, %v1757, %v1769
    %v1776 = vsel %vm1157, %v1759, %v1747
    %v1777 = vsel %vm1157, %v1761, %v1749
    %v1778 = vsel %vm1157, %v1763, %v1751
    %v1779 = vsel %vm1157, %v1765, %v1753
    %v1780 = vsel %vm1157, %v1767, %v1755
    %v1781 = vsel %vm1157, %v1769, %v1757
    %v1782 = vsel %vm1131, %v1776, 0.0
    %v1783 = vsel %vm1132, %v1770, 0.0
    %v1784 = vsel %vm1131, %v1777, 0.0
    %v1785 = vsel %vm1132, %v1771, 0.0
    %v1786 = vsel %vm1131, %v1778, 0.0
    %v1787 = vsel %vm1132, %v1772, 0.0
    %v1788 = vsel %vm1131, %v1779, 0.0
    %v1789 = vsel %vm1132, %v1773, 0.0
    %v1790 = vsel %vm1131, %v1780, 0.0
    %v1791 = vsel %vm1132, %v1774, 0.0
    %v1792 = vsel %vm1131, %v1781, 0.0
    %v1793 = vsel %vm1132, %v1775, 0.0
    %1794 = vset.pattern.permute.xlu0 19
    %1795 = vperm.xlu0 %1794, %v69
    %v1796 = vpop.permute.xlu0 %1795
    %1798 = vset.pattern.permute.xlu0 19
    %1799 = vperm.xlu0 %1798, %v70
    %v1800 = vpop.permute.xlu0 %1799
    %1802 = vset.pattern.permute.xlu0 19
    %1803 = vperm.xlu0 %1802, %v71
    %v1804 = vpop.permute.xlu0 %1803
    %1806 = vset.pattern.permute.xlu0 19
    %1807 = vperm.xlu0 %1806, %v72
    %v1808 = vpop.permute.xlu0 %1807
    %1810 = vset.pattern.permute.xlu0 19
    %1811 = vperm.xlu0 %1810, %v73
    %v1812 = vpop.permute.xlu0 %1811
    %1814 = vset.pattern.permute.xlu0 19
    %1815 = vperm.xlu0 %1814, %v74
    %v1816 = vpop.permute.xlu0 %1815
    %v1818 = vmul.f32 %v1782, %v1796
    %v1819 = vmul.f32 %v1783, %v1796
    %v1820 = vmul.f32 %v1784, %v1800
    %v1821 = vmul.f32 %v1785, %v1800
    %v1822 = vmul.f32 %v1786, %v1804
    %v1823 = vmul.f32 %v1787, %v1804
    %v1824 = vmul.f32 %v1788, %v1808
    %v1825 = vmul.f32 %v1789, %v1808
    %v1826 = vmul.f32 %v1790, %v1812
    %v1827 = vmul.f32 %v1791, %v1812
    %v1828 = vmul.f32 %v1792, %v1816
    %v1829 = vmul.f32 %v1793, %v1816
    %v1830 = vadd.f32 %v1734, %v1818
    %v1831 = vadd.f32 %v1735, %v1819
    %v1832 = vadd.f32 %v1736, %v1820
    %v1833 = vadd.f32 %v1737, %v1821
    %v1834 = vadd.f32 %v1738, %v1822
    %v1835 = vadd.f32 %v1739, %v1823
    %v1836 = vadd.f32 %v1740, %v1824
    %v1837 = vadd.f32 %v1741, %v1825
    %v1838 = vadd.f32 %v1742, %v1826
    %v1839 = vadd.f32 %v1743, %v1827
    %v1840 = vadd.f32 %v1744, %v1828
    %v1841 = vadd.f32 %v1745, %v1829
    %1842 = vset.pattern.permute.xlu0 21
    %1843 = vperm.xlu0 %1842, %v69
    %v1844 = vpop.permute.xlu0 %1843
    %1846 = vset.pattern.permute.xlu0 21
    %1847 = vperm.xlu0 %1846, %v70
    %v1848 = vpop.permute.xlu0 %1847
    %1850 = vset.pattern.permute.xlu0 21
    %1851 = vperm.xlu0 %1850, %v71
    %v1852 = vpop.permute.xlu0 %1851
    %1854 = vset.pattern.permute.xlu0 21
    %1855 = vperm.xlu0 %1854, %v72
    %v1856 = vpop.permute.xlu0 %1855
    %1858 = vset.pattern.permute.xlu0 21
    %1859 = vperm.xlu0 %1858, %v73
    %v1860 = vpop.permute.xlu0 %1859
    %1862 = vset.pattern.permute.xlu0 21
    %1863 = vperm.xlu0 %1862, %v74
    %v1864 = vpop.permute.xlu0 %1863
    %v1866 = vadd.f32 %v1830, %v1844
    %v1867 = vadd.f32 %v1831, %v1844
    %v1868 = vadd.f32 %v1832, %v1848
    %v1869 = vadd.f32 %v1833, %v1848
    %v1870 = vadd.f32 %v1834, %v1852
    %v1871 = vadd.f32 %v1835, %v1852
    %v1872 = vadd.f32 %v1836, %v1856
    %v1873 = vadd.f32 %v1837, %v1856
    %v1874 = vadd.f32 %v1838, %v1860
    %v1875 = vadd.f32 %v1839, %v1860
    %v1876 = vadd.f32 %v1840, %v1864
    %v1877 = vadd.f32 %v1841, %v1864
    %vm1878 = vcmp.ge.f32.partialorder %v1866, 0.0
    %vm1879 = vcmp.ge.f32.partialorder %v1867, 0.0
    %vm1880 = vcmp.ge.f32.partialorder %v1868, 0.0
    %vm1881 = vcmp.ge.f32.partialorder %v1869, 0.0
    %vm1882 = vcmp.ge.f32.partialorder %v1870, 0.0
    %vm1883 = vcmp.ge.f32.partialorder %v1871, 0.0
    %vm1884 = vcmp.ge.f32.partialorder %v1872, 0.0
    %vm1885 = vcmp.ge.f32.partialorder %v1873, 0.0
    %vm1886 = vcmp.ge.f32.partialorder %v1874, 0.0
    %vm1887 = vcmp.ge.f32.partialorder %v1875, 0.0
    %vm1888 = vcmp.ge.f32.partialorder %v1876, 0.0
    %vm1889 = vcmp.ge.f32.partialorder %v1877, 0.0
    %1890 = vset.pattern.permute.xlu0 22
    %1891 = vperm.xlu0 %1890, %v69
    %v1892 = vpop.permute.xlu0 %1891
    %1894 = vset.pattern.permute.xlu0 22
    %1895 = vperm.xlu0 %1894, %v70
    %v1896 = vpop.permute.xlu0 %1895
    %1898 = vset.pattern.permute.xlu0 22
    %1899 = vperm.xlu0 %1898, %v71
    %v1900 = vpop.permute.xlu0 %1899
    %1902 = vset.pattern.permute.xlu0 22
    %1903 = vperm.xlu0 %1902, %v72
    %v1904 = vpop.permute.xlu0 %1903
    %1906 = vset.pattern.permute.xlu0 22
    %1907 = vperm.xlu0 %1906, %v73
    %v1908 = vpop.permute.xlu0 %1907
    %1910 = vset.pattern.permute.xlu0 22
    %1911 = vperm.xlu0 %1910, %v74
    %v1912 = vpop.permute.xlu0 %1911
    %v1914 = vmul.f32 %v1866, %v1892
    %v1915 = vmul.f32 %v1867, %v1892
    %v1916 = vmul.f32 %v1868, %v1896
    %v1917 = vmul.f32 %v1869, %v1896
    %v1918 = vmul.f32 %v1870, %v1900
    %v1919 = vmul.f32 %v1871, %v1900
    %v1920 = vmul.f32 %v1872, %v1904
    %v1921 = vmul.f32 %v1873, %v1904
    %v1922 = vmul.f32 %v1874, %v1908
    %v1923 = vmul.f32 %v1875, %v1908
    %v1924 = vmul.f32 %v1876, %v1912
    %v1925 = vmul.f32 %v1877, %v1912
    %v1926 = vsel %vm1878, %v1866, %v1914
    %v1927 = vsel %vm1879, %v1867, %v1915
    %v1928 = vsel %vm1880, %v1868, %v1916
    %v1929 = vsel %vm1881, %v1869, %v1917
    %v1930 = vsel %vm1882, %v1870, %v1918
    %v1931 = vsel %vm1883, %v1871, %v1919
    %v1932 = vsel %vm1884, %v1872, %v1920
    %v1933 = vsel %vm1885, %v1873, %v1921
    %v1934 = vsel %vm1886, %v1874, %v1922
    %v1935 = vsel %vm1887, %v1875, %v1923
    %v1936 = vsel %vm1888, %v1876, %v1924
    %v1937 = vsel %vm1889, %v1877, %v1925
    %s1938 = scalar_lea.vmem [#allocation2], 240
    %v1939 = vld [vmem:[%s1938] sm:$0xff]
    %v1940 = vld [vmem:[%s1938 + $0x8] sm:$0xff]
    %v1941 = vld [vmem:[%s1938 + $0x10] sm:$0xff]
    %v1942 = vld [vmem:[%s1938 + $0x18] sm:$0xff]
    %v1943 = vld [vmem:[%s1938 + $0x20] sm:$0xff]
    %v1944 = vld [vmem:[%s1938 + $0x28] sm:$0xff]
    %v1946 = vsel %vm105, %v1939, 0
    %v1949 = vsel %vm105, %v1940, 0
    %v1952 = vsel %vm105, %v1941, 0
    %v1955 = vsel %vm105, %v1942, 0
    %v1958 = vsel %vm105, %v1943, 0
    %v1961 = vsel %vm105, %v1944, 0
    %1963 = vmatprep.subr.mxu0 %v1927
    %1964 = vmatpush1.msra.mxu0 %v1926
    %1965 = vmatprep.subr.mxu0 %v1929
    %1966 = vmatpush1.msra.mxu0 %v1928
    %1967 = vmatprep.subr.mxu0 %v1931
    %1968 = vmatpush1.msra.mxu0 %v1930
    %1969 = vmatprep.subr.mxu0 %v1933
    %1970 = vmatpush1.msra.mxu0 %v1932
    %1971 = vmatprep.subr.mxu0 %v1935
    %1972 = vmatpush1.msra.mxu0 %v1934
    %1973 = vmatprep.subr.mxu0 %v1937
    %1974 = vmatpush1.msra.mxu0 %v1936
    %1975 = vmatprep.subr.mxu0 0.0
    %1976 = vmatpush1.msra.mxu0 0.0
    %1977 = vmatprep.subr.mxu0 0.0
    %1978 = vmatpush1.msra.mxu0 0.0
    %1979 = vmatprep.subr.mxu0 0.0
    %1980 = vmatpush1.msra.mxu0 0.0
    %1981 = vmatprep.subr.mxu0 0.0
    %1982 = vmatpush1.msra.mxu0 0.0
    %1983 = vmatprep.subr.mxu0 0.0
    %1984 = vmatpush1.msra.mxu0 0.0
    %1985 = vmatprep.subr.mxu0 0.0
    %1986 = vmatpush1.msra.mxu0 0.0
    %1987 = vmatprep.subr.mxu0 0.0
    %1988 = vmatpush1.msra.mxu0 0.0
    %1989 = vmatprep.subr.mxu0 0.0
    %1990 = vmatpush1.msra.mxu0 0.0
    %1991 = vmatprep.subr.mxu0 0.0
    %1992 = vmatpush1.msra.mxu0 0.0
    %1993 = vmatprep.subr.mxu0 0.0
    %1994 = vmatpush1.msra.mxu0 0.0
    %1995 = vmatprep.subr.mxu0 0.0
    %1996 = vmatpush1.msra.mxu0 0.0
    %1997 = vmatprep.subr.mxu0 0.0
    %1998 = vmatpush1.msra.mxu0 0.0
    %1999 = vmatprep.subr.mxu0 0.0
    %2000 = vmatpush1.msra.mxu0 0.0
    %2001 = vmatprep.subr.mxu0 0.0
    %2002 = vmatpush1.msra.mxu0 0.0
    %2003 = vmatprep.subr.mxu0 0.0
    %2004 = vmatpush1.msra.mxu0 0.0
    %2005 = vmatprep.subr.mxu0 0.0
    %2006 = vmatpush1.msra.mxu0 0.0
    %2007 = vmatprep.subr.mxu0 0.0
    %2008 = vmatpush1.msra.mxu0 0.0
    %2009 = vmatprep.subr.mxu0 0.0
    %2010 = vmatpush1.msra.mxu0 0.0
    %2011 = vmatprep.subr.mxu0 0.0
    %2012 = vmatpush1.msra.mxu0 0.0
    %2013 = vmatprep.subr.mxu0 0.0
    %2014 = vmatpush1.msra.mxu0 0.0
    %2015 = vmatprep.subr.mxu0 0.0
    %2016 = vmatpush1.msra.mxu0 0.0
    %2017 = vmatprep.subr.mxu0 0.0
    %2018 = vmatpush1.msra.mxu0 0.0
    %2019 = vmatprep.subr.mxu0 0.0
    %2020 = vmatpush1.msra.mxu0 0.0
    %2021 = vmatprep.subr.mxu0 0.0
    %2022 = vmatpush1.msra.mxu0 0.0
    %2023 = vmatprep.subr.mxu0 0.0
    %2024 = vmatpush1.msra.mxu0 0.0
    %2025 = vmatprep.subr.mxu0 0.0
    %2026 = vmatpush1.msra.mxu0 0.0
    %2027 = vmatprep.mubr.f32.mxu0 0.0
    %2028 = vmatmul.mubr.f32.gmra.mrb[0].mxu0 %v1946
    %v2029 = vpop.f32.mrb[0].mxu0
    %v2030 = vadd.f32 0.0, %v2029
    %v2031 = vpop.f32.mrb[0].mxu0
    %v2032 = vadd.f32 0.0, %v2031
    %2033 = vmatprep.mubr.f32.mxu0 0.0
    %2034 = vmatmul.mubr.f32.gmra.mrb[0].mxu0 %v1949
    %v2035 = vpop.f32.mrb[0].mxu0
    %v2036 = vadd.f32 0.0, %v2035
    %v2037 = vpop.f32.mrb[0].mxu0
    %v2038 = vadd.f32 0.0, %v2037
    %2039 = vmatprep.mubr.f32.mxu0 0.0
    %2040 = vmatmul.mubr.f32.gmra.mrb[0].mxu0 %v1952
    %v2041 = vpop.f32.mrb[0].mxu0
    %v2042 = vadd.f32 0.0, %v2041
    %v2043 = vpop.f32.mrb[0].mxu0
    %v2044 = vadd.f32 0.0, %v2043
    %2045 = vmatprep.mubr.f32.mxu0 0.0
    %2046 = vmatmul.mubr.f32.gmra.mrb[0].mxu0 %v1955
    %v2047 = vpop.f32.mrb[0].mxu0
    %v2048 = vadd.f32 0.0, %v2047
    %v2049 = vpop.f32.mrb[0].mxu0
    %v2050 = vadd.f32 0.0, %v2049
    %2051 = vmatprep.mubr.f32.mxu0 0.0
    %2052 = vmatmul.mubr.f32.gmra.mrb[0].mxu0 %v1958
    %v2053 = vpop.f32.mrb[0].mxu0
    %v2054 = vadd.f32 0.0, %v2053
    %v2055 = vpop.f32.mrb[0].mxu0
    %v2056 = vadd.f32 0.0, %v2055
    %2057 = vmatprep.mubr.f32.mxu0 0.0
    %2058 = vmatmul.mubr.f32.gmra.mrb[0].mxu0 %v1961
    %v2059 = vpop.f32.mrb[0].mxu0
    %v2060 = vadd.f32 0.0, %v2059
    %v2061 = vpop.f32.mrb[0].mxu0
    %v2062 = vadd.f32 0.0, %v2061
    %2063 = vdwg.mxu0
    %v2064 = vadd.f32 %v1488, %v2030
    %v2065 = vadd.f32 %v1489, %v2032
    %v2066 = vadd.f32 %v1490, %v2036
    %v2067 = vadd.f32 %v1491, %v2038
    %v2068 = vadd.f32 %v1492, %v2042
    %v2069 = vadd.f32 %v1493, %v2044
    %v2070 = vadd.f32 %v1494, %v2048
    %v2071 = vadd.f32 %v1495, %v2050
    %v2072 = vadd.f32 %v1496, %v2054
    %v2073 = vadd.f32 %v1497, %v2056
    %v2074 = vadd.f32 %v1498, %v2060
    %v2075 = vadd.f32 %v1499, %v2062
    %2076 = vset.pattern.permute.xlu0 23
    %2077 = vperm.xlu0 %2076, %v69
    %v2078 = vpop.permute.xlu0 %2077
    %2080 = vset.pattern.permute.xlu0 23
    %2081 = vperm.xlu0 %2080, %v70
    %v2082 = vpop.permute.xlu0 %2081
    %2084 = vset.pattern.permute.xlu0 23
    %2085 = vperm.xlu0 %2084, %v71
    %v2086 = vpop.permute.xlu0 %2085
    %2088 = vset.pattern.permute.xlu0 23
    %2089 = vperm.xlu0 %2088, %v72
    %v2090 = vpop.permute.xlu0 %2089
    %2092 = vset.pattern.permute.xlu0 23
    %2093 = vperm.xlu0 %2092, %v73
    %v2094 = vpop.permute.xlu0 %2093
    %2096 = vset.pattern.permute.xlu0 23
    %2097 = vperm.xlu0 %2096, %v74
    %v2098 = vpop.permute.xlu0 %2097
    %v2100 = vadd.f32 %v2064, %v2078
    %v2101 = vadd.f32 %v2065, %v2078
    %v2102 = vadd.f32 %v2066, %v2082
    %v2103 = vadd.f32 %v2067, %v2082
    %v2104 = vadd.f32 %v2068, %v2086
    %v2105 = vadd.f32 %v2069, %v2086
    %v2106 = vadd.f32 %v2070, %v2090
    %v2107 = vadd.f32 %v2071, %v2090
    %v2108 = vadd.f32 %v2072, %v2094
    %v2109 = vadd.f32 %v2073, %v2094
    %v2110 = vadd.f32 %v2074, %v2098
    %v2111 = vadd.f32 %v2075, %v2098
    %s2112 = scalar_lea.vmem [#allocation2], 288
    %v2113 = vld [vmem:[%s2112] sm:$0xff]
    %v2114 = vld [vmem:[%s2112 + $0x8] sm:$0xff]
    %v2115 = vld [vmem:[%s2112 + $0x10] sm:$0xff]
    %v2116 = vld [vmem:[%s2112 + $0x18] sm:$0xff]
    %v2117 = vld [vmem:[%s2112 + $0x20] sm:$0xff]
    %v2118 = vld [vmem:[%s2112 + $0x28] sm:$0xff]
    %2119 = vset.pattern.permute.xlu0 24
    %2120 = vperm.xlu0 %2119, %v69
    %v2121 = vpop.permute.xlu0 %2120
    %2123 = vset.pattern.permute.xlu0 24
    %2124 = vperm.xlu0 %2123, %v70
    %v2125 = vpop.permute.xlu0 %2124
    %2127 = vset.pattern.permute.xlu0 24
    %2128 = vperm.xlu0 %2127, %v71
    %v2129 = vpop.permute.xlu0 %2128
    %2131 = vset.pattern.permute.xlu0 24
    %2132 = vperm.xlu0 %2131, %v72
    %v2133 = vpop.permute.xlu0 %2132
    %2135 = vset.pattern.permute.xlu0 24
    %2136 = vperm.xlu0 %2135, %v73
    %v2137 = vpop.permute.xlu0 %2136
    %2139 = vset.pattern.permute.xlu0 24
    %2140 = vperm.xlu0 %2139, %v74
    %v2141 = vpop.permute.xlu0 %2140
    %v2144 = vsel %vm105, %v2113, 0
    %v2147 = vsel %vm105, %v2114, 0
    %v2150 = vsel %vm105, %v2115, 0
    %v2153 = vsel %vm105, %v2116, 0
    %v2156 = vsel %vm105, %v2117, 0
    %v2159 = vsel %vm105, %v2118, 0
    %2161 = vmatprep.subr.mxu0 %v2101
    %2162 = vmatpush1.msra.mxu0 %v2100
    %2163 = vmatprep.subr.mxu0 %v2103
    %2164 = vmatpush1.msra.mxu0 %v2102
    %2165 = vmatprep.subr.mxu0 %v2105
    %2166 = vmatpush1.msra.mxu0 %v2104
    %2167 = vmatprep.subr.mxu0 %v2107
    %2168 = vmatpush1.msra.mxu0 %v2106
    %2169 = vmatprep.subr.mxu0 %v2109
    %2170 = vmatpush1.msra.mxu0 %v2108
    %2171 = vmatprep.subr.mxu0 %v2111
    %2172 = vmatpush1.msra.mxu0 %v2110
    %2173 = vmatprep.subr.mxu0 0.0
    %2174 = vmatpush1.msra.mxu0 0.0
    %2175 = vmatprep.subr.mxu0 0.0
    %2176 = vmatpush1.msra.mxu0 0.0
    %2177 = vmatprep.subr.mxu0 0.0
    %2178 = vmatpush1.msra.mxu0 0.0
    %2179 = vmatprep.subr.mxu0 0.0
    %2180 = vmatpush1.msra.mxu0 0.0
    %2181 = vmatprep.subr.mxu0 0.0
    %2182 = vmatpush1.msra.mxu0 0.0
    %2183 = vmatprep.subr.mxu0 0.0
    %2184 = vmatpush1.msra.mxu0 0.0
    %2185 = vmatprep.subr.mxu0 0.0
    %2186 = vmatpush1.msra.mxu0 0.0
    %2187 = vmatprep.subr.mxu0 0.0
    %2188 = vmatpush1.msra.mxu0 0.0
    %2189 = vmatprep.subr.mxu0 0.0
    %2190 = vmatpush1.msra.mxu0 0.0
    %2191 = vmatprep.subr.mxu0 0.0
    %2192 = vmatpush1.msra.mxu0 0.0
    %2193 = vmatprep.subr.mxu0 0.0
    %2194 = vmatpush1.msra.mxu0 0.0
    %2195 = vmatprep.subr.mxu0 0.0
    %2196 = vmatpush1.msra.mxu0 0.0
    %2197 = vmatprep.subr.mxu0 0.0
    %2198 = vmatpush1.msra.mxu0 0.0
    %2199 = vmatprep.subr.mxu0 0.0
    %2200 = vmatpush1.msra.mxu0 0.0
    %2201 = vmatprep.subr.mxu0 0.0
    %2202 = vmatpush1.msra.mxu0 0.0
    %2203 = vmatprep.subr.mxu0 0.0
    %2204 = vmatpush1.msra.mxu0 0.0
    %2205 = vmatprep.subr.mxu0 0.0
    %2206 = vmatpush1.msra.mxu0 0.0
    %2207 = vmatprep.subr.mxu0 0.0
    %2208 = vmatpush1.msra.mxu0 0.0
    %2209 = vmatprep.subr.mxu0 0.0
    %2210 = vmatpush1.msra.mxu0 0.0
    %2211 = vmatprep.subr.mxu0 0.0
    %2212 = vmatpush1.msra.mxu0 0.0
    %2213 = vmatprep.subr.mxu0 0.0
    %2214 = vmatpush1.msra.mxu0 0.0
    %2215 = vmatprep.subr.mxu0 0.0
    %2216 = vmatpush1.msra.mxu0 0.0
    %2217 = vmatprep.subr.mxu0 0.0
    %2218 = vmatpush1.msra.mxu0 0.0
    %2219 = vmatprep.subr.mxu0 0.0
    %2220 = vmatpush1.msra.mxu0 0.0
    %2221 = vmatprep.subr.mxu0 0.0
    %2222 = vmatpush1.msra.mxu0 0.0
    %2223 = vmatprep.subr.mxu0 0.0
    %2224 = vmatpush1.msra.mxu0 0.0
    %2225 = vmatprep.mubr.f32.mxu0 0.0
    %2226 = vmatmul.mubr.f32.gmra.mrb[0].mxu0 %v2144
    %v2227 = vpop.f32.mrb[0].mxu0
    %v2228 = vadd.f32 %v2121, %v2227
    %v2229 = vpop.f32.mrb[0].mxu0
    %v2230 = vadd.f32 %v2121, %v2229
    %2231 = vmatprep.mubr.f32.mxu0 0.0
    %2232 = vmatmul.mubr.f32.gmra.mrb[0].mxu0 %v2147
    %v2233 = vpop.f32.mrb[0].mxu0
    %v2234 = vadd.f32 %v2125, %v2233
    %v2235 = vpop.f32.mrb[0].mxu0
    %v2236 = vadd.f32 %v2125, %v2235
    %2237 = vmatprep.mubr.f32.mxu0 0.0
    %2238 = vmatmul.mubr.f32.gmra.mrb[0].mxu0 %v2150
    %v2239 = vpop.f32.mrb[0].mxu0
    %v2240 = vadd.f32 %v2129, %v2239
    %v2241 = vpop.f32.mrb[0].mxu0
    %v2242 = vadd.f32 %v2129, %v2241
    %2243 = vmatprep.mubr.f32.mxu0 0.0
    %2244 = vmatmul.mubr.f32.gmra.mrb[0].mxu0 %v2153
    %v2245 = vpop.f32.mrb[0].mxu0
    %v2246 = vadd.f32 %v2133, %v2245
    %v2247 = vpop.f32.mrb[0].mxu0
    %v2248 = vadd.f32 %v2133, %v2247
    %2249 = vmatprep.mubr.f32.mxu0 0.0
    %2250 = vmatmul.mubr.f32.gmra.mrb[0].mxu0 %v2156
    %v2251 = vpop.f32.mrb[0].mxu0
    %v2252 = vadd.f32 %v2137, %v2251
    %v2253 = vpop.f32.mrb[0].mxu0
    %v2254 = vadd.f32 %v2137, %v2253
    %2255 = vmatprep.mubr.f32.mxu0 0.0
    %2256 = vmatmul.mubr.f32.gmra.mrb[0].mxu0 %v2159
    %v2257 = vpop.f32.mrb[0].mxu0
    %v2258 = vadd.f32 %v2141, %v2257
    %v2259 = vpop.f32.mrb[0].mxu0
    %v2260 = vadd.f32 %v2141, %v2259
    %2261 = vdwg.mxu0
    %vm2262 = vcmp.ge.f32.partialorder %v2228, 0.0
    %vm2263 = vcmp.ge.f32.partialorder %v2230, 0.0
    %vm2264 = vcmp.ge.f32.partialorder %v2234, 0.0
    %vm2265 = vcmp.ge.f32.partialorder %v2236, 0.0
    %vm2266 = vcmp.ge.f32.partialorder %v2240, 0.0
    %vm2267 = vcmp.ge.f32.partialorder %v2242, 0.0
    %vm2268 = vcmp.ge.f32.partialorder %v2246, 0.0
    %vm2269 = vcmp.ge.f32.partialorder %v2248, 0.0
    %vm2270 = vcmp.ge.f32.partialorder %v2252, 0.0
    %vm2271 = vcmp.ge.f32.partialorder %v2254, 0.0
    %vm2272 = vcmp.ge.f32.partialorder %v2258, 0.0
    %vm2273 = vcmp.ge.f32.partialorder %v2260, 0.0
    %2274 = vset.pattern.permute.xlu0 25
    %2275 = vperm.xlu0 %2274, %v69
    %v2276 = vpop.permute.xlu0 %2275
    %2278 = vset.pattern.permute.xlu0 25
    %2279 = vperm.xlu0 %2278, %v70
    %v2280 = vpop.permute.xlu0 %2279
    %2282 = vset.pattern.permute.xlu0 25
    %2283 = vperm.xlu0 %2282, %v71
    %v2284 = vpop.permute.xlu0 %2283
    %2286 = vset.pattern.permute.xlu0 25
    %2287 = vperm.xlu0 %2286, %v72
    %v2288 = vpop.permute.xlu0 %2287
    %2290 = vset.pattern.permute.xlu0 25
    %2291 = vperm.xlu0 %2290, %v73
    %v2292 = vpop.permute.xlu0 %2291
    %2294 = vset.pattern.permute.xlu0 25
    %2295 = vperm.xlu0 %2294, %v74
    %v2296 = vpop.permute.xlu0 %2295
    %v2298 = vmul.f32 %v2228, %v2276
    %v2299 = vmul.f32 %v2230, %v2276
    %v2300 = vmul.f32 %v2234, %v2280
    %v2301 = vmul.f32 %v2236, %v2280
    %v2302 = vmul.f32 %v2240, %v2284
    %v2303 = vmul.f32 %v2242, %v2284
    %v2304 = vmul.f32 %v2246, %v2288
    %v2305 = vmul.f32 %v2248, %v2288
    %v2306 = vmul.f32 %v2252, %v2292
    %v2307 = vmul.f32 %v2254, %v2292
    %v2308 = vmul.f32 %v2258, %v2296
    %v2309 = vmul.f32 %v2260, %v2296
    %v2310 = vsel %vm2262, %v2228, %v2298
    %v2311 = vsel %vm2263, %v2230, %v2299
    %v2312 = vsel %vm2264, %v2234, %v2300
    %v2313 = vsel %vm2265, %v2236, %v2301
    %v2314 = vsel %vm2266, %v2240, %v2302
    %v2315 = vsel %vm2267, %v2242, %v2303
    %v2316 = vsel %vm2268, %v2246, %v2304
    %v2317 = vsel %vm2269, %v2248, %v2305
    %v2318 = vsel %vm2270, %v2252, %v2306
    %v2319 = vsel %vm2271, %v2254, %v2307
    %v2320 = vsel %vm2272, %v2258, %v2308
    %v2321 = vsel %vm2273, %v2260, %v2309
    %2322 = vset.pattern.permute.xlu0 28
    %2323 = vperm.xlu0 %2322, %v69
    %v2324 = vpop.permute.xlu0 %2323
    %2326 = vset.pattern.permute.xlu0 28
    %2327 = vperm.xlu0 %2326, %v70
    %v2328 = vpop.permute.xlu0 %2327
    %2330 = vset.pattern.permute.xlu0 28
    %2331 = vperm.xlu0 %2330, %v71
    %v2332 = vpop.permute.xlu0 %2331
    %2334 = vset.pattern.permute.xlu0 28
    %2335 = vperm.xlu0 %2334, %v72
    %v2336 = vpop.permute.xlu0 %2335
    %2338 = vset.pattern.permute.xlu0 28
    %2339 = vperm.xlu0 %2338, %v73
    %v2340 = vpop.permute.xlu0 %2339
    %2342 = vset.pattern.permute.xlu0 28
    %2343 = vperm.xlu0 %2342, %v74
    %v2344 = vpop.permute.xlu0 %2343
    %v2346 = vmul.f32 %v2310, %v2324
    %v2347 = vmul.f32 %v2311, %v2324
    %v2348 = vmul.f32 %v2312, %v2328
    %v2349 = vmul.f32 %v2313, %v2328
    %v2350 = vmul.f32 %v2314, %v2332
    %v2351 = vmul.f32 %v2315, %v2332
    %v2352 = vmul.f32 %v2316, %v2336
    %v2353 = vmul.f32 %v2317, %v2336
    %v2354 = vmul.f32 %v2318, %v2340
    %v2355 = vmul.f32 %v2319, %v2340
    %v2356 = vmul.f32 %v2320, %v2344
    %v2357 = vmul.f32 %v2321, %v2344
    %2358 = vset.pattern.permute.xlu0 29
    %2359 = vperm.xlu0 %2358, %v69
    %v2360 = vpop.permute.xlu0 %2359
    %2362 = vset.pattern.permute.xlu0 29
    %2363 = vperm.xlu0 %2362, %v70
    %v2364 = vpop.permute.xlu0 %2363
    %2366 = vset.pattern.permute.xlu0 29
    %2367 = vperm.xlu0 %2366, %v71
    %v2368 = vpop.permute.xlu0 %2367
    %2370 = vset.pattern.permute.xlu0 29
    %2371 = vperm.xlu0 %2370, %v72
    %v2372 = vpop.permute.xlu0 %2371
    %2374 = vset.pattern.permute.xlu0 29
    %2375 = vperm.xlu0 %2374, %v73
    %v2376 = vpop.permute.xlu0 %2375
    %2378 = vset.pattern.permute.xlu0 29
    %2379 = vperm.xlu0 %2378, %v74
    %v2380 = vpop.permute.xlu0 %2379
    %v2382 = vadd.f32 %v2346, %v2360
    %v2383 = vadd.f32 %v2347, %v2360
    %v2384 = vadd.f32 %v2348, %v2364
    %v2385 = vadd.f32 %v2349, %v2364
    %v2386 = vadd.f32 %v2350, %v2368
    %v2387 = vadd.f32 %v2351, %v2368
    %v2388 = vadd.f32 %v2352, %v2372
    %v2389 = vadd.f32 %v2353, %v2372
    %v2390 = vadd.f32 %v2354, %v2376
    %v2391 = vadd.f32 %v2355, %v2376
    %v2392 = vadd.f32 %v2356, %v2380
    %v2393 = vadd.f32 %v2357, %v2380
    %vm2394 = vcmp.ge.f32.partialorder %v2382, 0.0
    %vm2395 = vcmp.ge.f32.partialorder %v2383, 0.0
    %vm2396 = vcmp.ge.f32.partialorder %v2384, 0.0
    %vm2397 = vcmp.ge.f32.partialorder %v2385, 0.0
    %vm2398 = vcmp.ge.f32.partialorder %v2386, 0.0
    %vm2399 = vcmp.ge.f32.partialorder %v2387, 0.0
    %vm2400 = vcmp.ge.f32.partialorder %v2388, 0.0
    %vm2401 = vcmp.ge.f32.partialorder %v2389, 0.0
    %vm2402 = vcmp.ge.f32.partialorder %v2390, 0.0
    %vm2403 = vcmp.ge.f32.partialorder %v2391, 0.0
    %vm2404 = vcmp.ge.f32.partialorder %v2392, 0.0
    %vm2405 = vcmp.ge.f32.partialorder %v2393, 0.0
    %2406 = vset.pattern.permute.xlu0 30
    %2407 = vperm.xlu0 %2406, %v69
    %v2408 = vpop.permute.xlu0 %2407
    %2410 = vset.pattern.permute.xlu0 30
    %2411 = vperm.xlu0 %2410, %v70
    %v2412 = vpop.permute.xlu0 %2411
    %2414 = vset.pattern.permute.xlu0 30
    %2415 = vperm.xlu0 %2414, %v71
    %v2416 = vpop.permute.xlu0 %2415
    %2418 = vset.pattern.permute.xlu0 30
    %2419 = vperm.xlu0 %2418, %v72
    %v2420 = vpop.permute.xlu0 %2419
    %2422 = vset.pattern.permute.xlu0 30
    %2423 = vperm.xlu0 %2422, %v73
    %v2424 = vpop.permute.xlu0 %2423
    %2426 = vset.pattern.permute.xlu0 30
    %2427 = vperm.xlu0 %2426, %v74
    %v2428 = vpop.permute.xlu0 %2427
    %v2430 = vmul.f32 %v2382, %v2408
    %v2431 = vmul.f32 %v2383, %v2408
    %v2432 = vmul.f32 %v2384, %v2412
    %v2433 = vmul.f32 %v2385, %v2412
    %v2434 = vmul.f32 %v2386, %v2416
    %v2435 = vmul.f32 %v2387, %v2416
    %v2436 = vmul.f32 %v2388, %v2420
    %v2437 = vmul.f32 %v2389, %v2420
    %v2438 = vmul.f32 %v2390, %v2424
    %v2439 = vmul.f32 %v2391, %v2424
    %v2440 = vmul.f32 %v2392, %v2428
    %v2441 = vmul.f32 %v2393, %v2428
    %v2442 = vsel %vm2394, %v2382, %v2430
    %v2443 = vsel %vm2395, %v2383, %v2431
    %v2444 = vsel %vm2396, %v2384, %v2432
    %v2445 = vsel %vm2397, %v2385, %v2433
    %v2446 = vsel %vm2398, %v2386, %v2434
    %v2447 = vsel %vm2399, %v2387, %v2435
    %v2448 = vsel %vm2400, %v2388, %v2436
    %v2449 = vsel %vm2401, %v2389, %v2437
    %v2450 = vsel %vm2402, %v2390, %v2438
    %v2451 = vsel %vm2403, %v2391, %v2439
    %v2452 = vsel %vm2404, %v2392, %v2440
    %v2453 = vsel %vm2405, %v2393, %v2441
    %s2454 = scalar_lea.vmem [#allocation2], 336
    %v2455 = vld [vmem:[%s2454] sm:$0xff]
    %v2456 = vld [vmem:[%s2454 + $0x8] sm:$0xff]
    %v2457 = vld [vmem:[%s2454 + $0x10] sm:$0xff]
    %v2458 = vld [vmem:[%s2454 + $0x18] sm:$0xff]
    %v2459 = vld [vmem:[%s2454 + $0x20] sm:$0xff]
    %v2460 = vld [vmem:[%s2454 + $0x28] sm:$0xff]
    %v2462 = vsel %vm105, %v2455, 0
    %v2465 = vsel %vm105, %v2456, 0
    %v2468 = vsel %vm105, %v2457, 0
    %v2471 = vsel %vm105, %v2458, 0
    %v2474 = vsel %vm105, %v2459, 0
    %v2477 = vsel %vm105, %v2460, 0
    %2479 = vmatprep.subr.mxu0 %v2443
    %2480 = vmatpush1.msra.mxu0 %v2442
    %2481 = vmatprep.subr.mxu0 %v2445
    %2482 = vmatpush1.msra.mxu0 %v2444
    %2483 = vmatprep.subr.mxu0 %v2447
    %2484 = vmatpush1.msra.mxu0 %v2446
    %2485 = vmatprep.subr.mxu0 %v2449
    %2486 = vmatpush1.msra.mxu0 %v2448
    %2487 = vmatprep.subr.mxu0 %v2451
    %2488 = vmatpush1.msra.mxu0 %v2450
    %2489 = vmatprep.subr.mxu0 %v2453
    %2490 = vmatpush1.msra.mxu0 %v2452
    %2491 = vmatprep.subr.mxu0 0.0
    %2492 = vmatpush1.msra.mxu0 0.0
    %2493 = vmatprep.subr.mxu0 0.0
    %2494 = vmatpush1.msra.mxu0 0.0
    %2495 = vmatprep.subr.mxu0 0.0
    %2496 = vmatpush1.msra.mxu0 0.0
    %2497 = vmatprep.subr.mxu0 0.0
    %2498 = vmatpush1.msra.mxu0 0.0
    %2499 = vmatprep.subr.mxu0 0.0
    %2500 = vmatpush1.msra.mxu0 0.0
    %2501 = vmatprep.subr.mxu0 0.0
    %2502 = vmatpush1.msra.mxu0 0.0
    %2503 = vmatprep.subr.mxu0 0.0
    %2504 = vmatpush1.msra.mxu0 0.0
    %2505 = vmatprep.subr.mxu0 0.0
    %2506 = vmatpush1.msra.mxu0 0.0
    %2507 = vmatprep.subr.mxu0 0.0
    %2508 = vmatpush1.msra.mxu0 0.0
    %2509 = vmatprep.subr.mxu0 0.0
    %2510 = vmatpush1.msra.mxu0 0.0
    %2511 = vmatprep.subr.mxu0 0.0
    %2512 = vmatpush1.msra.mxu0 0.0
    %2513 = vmatprep.subr.mxu0 0.0
    %2514 = vmatpush1.msra.mxu0 0.0
    %2515 = vmatprep.subr.mxu0 0.0
    %2516 = vmatpush1.msra.mxu0 0.0
    %2517 = vmatprep.subr.mxu0 0.0
    %2518 = vmatpush1.msra.mxu0 0.0
    %2519 = vmatprep.subr.mxu0 0.0
    %2520 = vmatpush1.msra.mxu0 0.0
    %2521 = vmatprep.subr.mxu0 0.0
    %2522 = vmatpush1.msra.mxu0 0.0
    %2523 = vmatprep.subr.mxu0 0.0
    %2524 = vmatpush1.msra.mxu0 0.0
    %2525 = vmatprep.subr.mxu0 0.0
    %2526 = vmatpush1.msra.mxu0 0.0
    %2527 = vmatprep.subr.mxu0 0.0
    %2528 = vmatpush1.msra.mxu0 0.0
    %2529 = vmatprep.subr.mxu0 0.0
    %2530 = vmatpush1.msra.mxu0 0.0
    %2531 = vmatprep.subr.mxu0 0.0
    %2532 = vmatpush1.msra.mxu0 0.0
    %2533 = vmatprep.subr.mxu0 0.0
    %2534 = vmatpush1.msra.mxu0 0.0
    %2535 = vmatprep.subr.mxu0 0.0
    %2536 = vmatpush1.msra.mxu0 0.0
    %2537 = vmatprep.subr.mxu0 0.0
    %2538 = vmatpush1.msra.mxu0 0.0
    %2539 = vmatprep.subr.mxu0 0.0
    %2540 = vmatpush1.msra.mxu0 0.0
    %2541 = vmatprep.subr.mxu0 0.0
    %2542 = vmatpush1.msra.mxu0 0.0
    %2543 = vmatprep.mubr.f32.mxu0 0.0
    %2544 = vmatmul.mubr.f32.gmra.mrb[0].mxu0 %v2462
    %v2545 = vpop.f32.mrb[0].mxu0
    %v2546 = vadd.f32 0.0, %v2545
    %v2547 = vpop.f32.mrb[0].mxu0
    %v2548 = vadd.f32 0.0, %v2547
    %2549 = vmatprep.mubr.f32.mxu0 0.0
    %2550 = vmatmul.mubr.f32.gmra.mrb[0].mxu0 %v2465
    %v2551 = vpop.f32.mrb[0].mxu0
    %v2552 = vadd.f32 0.0, %v2551
    %v2553 = vpop.f32.mrb[0].mxu0
    %v2554 = vadd.f32 0.0, %v2553
    %2555 = vmatprep.mubr.f32.mxu0 0.0
    %2556 = vmatmul.mubr.f32.gmra.mrb[0].mxu0 %v2468
    %v2557 = vpop.f32.mrb[0].mxu0
    %v2558 = vadd.f32 0.0, %v2557
    %v2559 = vpop.f32.mrb[0].mxu0
    %v2560 = vadd.f32 0.0, %v2559
    %2561 = vmatprep.mubr.f32.mxu0 0.0
    %2562 = vmatmul.mubr.f32.gmra.mrb[0].mxu0 %v2471
    %v2563 = vpop.f32.mrb[0].mxu0
    %v2564 = vadd.f32 0.0, %v2563
    %v2565 = vpop.f32.mrb[0].mxu0
    %v2566 = vadd.f32 0.0, %v2565
    %2567 = vmatprep.mubr.f32.mxu0 0.0
    %2568 = vmatmul.mubr.f32.gmra.mrb[0].mxu0 %v2474
    %v2569 = vpop.f32.mrb[0].mxu0
    %v2570 = vadd.f32 0.0, %v2569
    %v2571 = vpop.f32.mrb[0].mxu0
    %v2572 = vadd.f32 0.0, %v2571
    %2573 = vmatprep.mubr.f32.mxu0 0.0
    %2574 = vmatmul.mubr.f32.gmra.mrb[0].mxu0 %v2477
    %v2575 = vpop.f32.mrb[0].mxu0
    %v2576 = vadd.f32 0.0, %v2575
    %v2577 = vpop.f32.mrb[0].mxu0
    %v2578 = vadd.f32 0.0, %v2577
    %2579 = vdwg.mxu0
    %v2580 = vadd.f32 %v2100, %v2546
    %v2581 = vadd.f32 %v2101, %v2548
    %v2582 = vadd.f32 %v2102, %v2552
    %v2583 = vadd.f32 %v2103, %v2554
    %v2584 = vadd.f32 %v2104, %v2558
    %v2585 = vadd.f32 %v2105, %v2560
    %v2586 = vadd.f32 %v2106, %v2564
    %v2587 = vadd.f32 %v2107, %v2566
    %v2588 = vadd.f32 %v2108, %v2570
    %v2589 = vadd.f32 %v2109, %v2572
    %v2590 = vadd.f32 %v2110, %v2576
    %v2591 = vadd.f32 %v2111, %v2578
    %2592 = vset.pattern.permute.xlu0 31
    %2593 = vperm.xlu0 %2592, %v69
    %v2594 = vpop.permute.xlu0 %2593
    %2596 = vset.pattern.permute.xlu0 31
    %2597 = vperm.xlu0 %2596, %v70
    %v2598 = vpop.permute.xlu0 %2597
    %2600 = vset.pattern.permute.xlu0 31
    %2601 = vperm.xlu0 %2600, %v71
    %v2602 = vpop.permute.xlu0 %2601
    %2604 = vset.pattern.permute.xlu0 31
    %2605 = vperm.xlu0 %2604, %v72
    %v2606 = vpop.permute.xlu0 %2605
    %2608 = vset.pattern.permute.xlu0 31
    %2609 = vperm.xlu0 %2608, %v73
    %v2610 = vpop.permute.xlu0 %2609
    %2612 = vset.pattern.permute.xlu0 31
    %2613 = vperm.xlu0 %2612, %v74
    %v2614 = vpop.permute.xlu0 %2613
    %v2616 = vadd.f32 %v2580, %v2594
    %v2617 = vadd.f32 %v2581, %v2594
    %v2618 = vadd.f32 %v2582, %v2598
    %v2619 = vadd.f32 %v2583, %v2598
    %v2620 = vadd.f32 %v2584, %v2602
    %v2621 = vadd.f32 %v2585, %v2602
    %v2622 = vadd.f32 %v2586, %v2606
    %v2623 = vadd.f32 %v2587, %v2606
    %v2624 = vadd.f32 %v2588, %v2610
    %v2625 = vadd.f32 %v2589, %v2610
    %v2626 = vadd.f32 %v2590, %v2614
    %v2627 = vadd.f32 %v2591, %v2614
    %s2628 = scalar_lea.vmem [#allocation2], 384
    %v2629 = vld [vmem:[%s2628] sm:$0xff]
    %v2630 = vld [vmem:[%s2628 + $0x8] sm:$0xff]
    %v2631 = vld [vmem:[%s2628 + $0x10] sm:$0xff]
    %v2632 = vld [vmem:[%s2628 + $0x18] sm:$0xff]
    %v2633 = vld [vmem:[%s2628 + $0x20] sm:$0xff]
    %v2634 = vld [vmem:[%s2628 + $0x28] sm:$0xff]
    %2635 = vset.pattern.permute.xlu0 32
    %2636 = vperm.xlu0 %2635, %v69
    %v2637 = vpop.permute.xlu0 %2636
    %2639 = vset.pattern.permute.xlu0 32
    %2640 = vperm.xlu0 %2639, %v70
    %v2641 = vpop.permute.xlu0 %2640
    %2643 = vset.pattern.permute.xlu0 32
    %2644 = vperm.xlu0 %2643, %v71
    %v2645 = vpop.permute.xlu0 %2644
    %2647 = vset.pattern.permute.xlu0 32
    %2648 = vperm.xlu0 %2647, %v72
    %v2649 = vpop.permute.xlu0 %2648
    %2651 = vset.pattern.permute.xlu0 32
    %2652 = vperm.xlu0 %2651, %v73
    %v2653 = vpop.permute.xlu0 %2652
    %2655 = vset.pattern.permute.xlu0 32
    %2656 = vperm.xlu0 %2655, %v74
    %v2657 = vpop.permute.xlu0 %2656
    %v2660 = vsel %vm105, %v2629, 0
    %v2663 = vsel %vm105, %v2630, 0
    %v2666 = vsel %vm105, %v2631, 0
    %v2669 = vsel %vm105, %v2632, 0
    %v2672 = vsel %vm105, %v2633, 0
    %v2675 = vsel %vm105, %v2634, 0
    %2677 = vmatprep.subr.mxu0 %v2617
    %2678 = vmatpush1.msra.mxu0 %v2616
    %2679 = vmatprep.subr.mxu0 %v2619
    %2680 = vmatpush1.msra.mxu0 %v2618
    %2681 = vmatprep.subr.mxu0 %v2621
    %2682 = vmatpush1.msra.mxu0 %v2620
    %2683 = vmatprep.subr.mxu0 %v2623
    %2684 = vmatpush1.msra.mxu0 %v2622
    %2685 = vmatprep.subr.mxu0 %v2625
    %2686 = vmatpush1.msra.mxu0 %v2624
    %2687 = vmatprep.subr.mxu0 %v2627
    %2688 = vmatpush1.msra.mxu0 %v2626
    %2689 = vmatprep.subr.mxu0 0.0
    %2690 = vmatpush1.msra.mxu0 0.0
    %2691 = vmatprep.subr.mxu0 0.0
    %2692 = vmatpush1.msra.mxu0 0.0
    %2693 = vmatprep.subr.mxu0 0.0
    %2694 = vmatpush1.msra.mxu0 0.0
    %2695 = vmatprep.subr.mxu0 0.0
    %2696 = vmatpush1.msra.mxu0 0.0
    %2697 = vmatprep.subr.mxu0 0.0
    %2698 = vmatpush1.msra.mxu0 0.0
    %2699 = vmatprep.subr.mxu0 0.0
    %2700 = vmatpush1.msra.mxu0 0.0
    %2701 = vmatprep.subr.mxu0 0.0
    %2702 = vmatpush1.msra.mxu0 0.0
    %2703 = vmatprep.subr.mxu0 0.0
    %2704 = vmatpush1.msra.mxu0 0.0
    %2705 = vmatprep.subr.mxu0 0.0
    %2706 = vmatpush1.msra.mxu0 0.0
    %2707 = vmatprep.subr.mxu0 0.0
    %2708 = vmatpush1.msra.mxu0 0.0
    %2709 = vmatprep.subr.mxu0 0.0
    %2710 = vmatpush1.msra.mxu0 0.0
    %2711 = vmatprep.subr.mxu0 0.0
    %2712 = vmatpush1.msra.mxu0 0.0
    %2713 = vmatprep.subr.mxu0 0.0
    %2714 = vmatpush1.msra.mxu0 0.0
    %2715 = vmatprep.subr.mxu0 0.0
    %2716 = vmatpush1.msra.mxu0 0.0
    %2717 = vmatprep.subr.mxu0 0.0
    %2718 = vmatpush1.msra.mxu0 0.0
    %2719 = vmatprep.subr.mxu0 0.0
    %2720 = vmatpush1.msra.mxu0 0.0
    %2721 = vmatprep.subr.mxu0 0.0
    %2722 = vmatpush1.msra.mxu0 0.0
    %2723 = vmatprep.subr.mxu0 0.0
    %2724 = vmatpush1.msra.mxu0 0.0
    %2725 = vmatprep.subr.mxu0 0.0
    %2726 = vmatpush1.msra.mxu0 0.0
    %2727 = vmatprep.subr.mxu0 0.0
    %2728 = vmatpush1.msra.mxu0 0.0
    %2729 = vmatprep.subr.mxu0 0.0
    %2730 = vmatpush1.msra.mxu0 0.0
    %2731 = vmatprep.subr.mxu0 0.0
    %2732 = vmatpush1.msra.mxu0 0.0
    %2733 = vmatprep.subr.mxu0 0.0
    %2734 = vmatpush1.msra.mxu0 0.0
    %2735 = vmatprep.subr.mxu0 0.0
    %2736 = vmatpush1.msra.mxu0 0.0
    %2737 = vmatprep.subr.mxu0 0.0
    %2738 = vmatpush1.msra.mxu0 0.0
    %2739 = vmatprep.subr.mxu0 0.0
    %2740 = vmatpush1.msra.mxu0 0.0
    %2741 = vmatprep.mubr.f32.mxu0 0.0
    %2742 = vmatmul.mubr.f32.gmra.mrb[0].mxu0 %v2660
    %v2743 = vpop.f32.mrb[0].mxu0
    %v2744 = vadd.f32 %v2637, %v2743
    %v2745 = vpop.f32.mrb[0].mxu0
    %v2746 = vadd.f32 %v2637, %v2745
    %2747 = vmatprep.mubr.f32.mxu0 0.0
    %2748 = vmatmul.mubr.f32.gmra.mrb[0].mxu0 %v2663
    %v2749 = vpop.f32.mrb[0].mxu0
    %v2750 = vadd.f32 %v2641, %v2749
    %v2751 = vpop.f32.mrb[0].mxu0
    %v2752 = vadd.f32 %v2641, %v2751
    %2753 = vmatprep.mubr.f32.mxu0 0.0
    %2754 = vmatmul.mubr.f32.gmra.mrb[0].mxu0 %v2666
    %v2755 = vpop.f32.mrb[0].mxu0
    %v2756 = vadd.f32 %v2645, %v2755
    %v2757 = vpop.f32.mrb[0].mxu0
    %v2758 = vadd.f32 %v2645, %v2757
    %2759 = vmatprep.mubr.f32.mxu0 0.0
    %2760 = vmatmul.mubr.f32.gmra.mrb[0].mxu0 %v2669
    %v2761 = vpop.f32.mrb[0].mxu0
    %v2762 = vadd.f32 %v2649, %v2761
    %v2763 = vpop.f32.mrb[0].mxu0
    %v2764 = vadd.f32 %v2649, %v2763
    %2765 = vmatprep.mubr.f32.mxu0 0.0
    %2766 = vmatmul.mubr.f32.gmra.mrb[0].mxu0 %v2672
    %v2767 = vpop.f32.mrb[0].mxu0
    %v2768 = vadd.f32 %v2653, %v2767
    %v2769 = vpop.f32.mrb[0].mxu0
    %v2770 = vadd.f32 %v2653, %v2769
    %2771 = vmatprep.mubr.f32.mxu0 0.0
    %2772 = vmatmul.mubr.f32.gmra.mrb[0].mxu0 %v2675
    %v2773 = vpop.f32.mrb[0].mxu0
    %v2774 = vadd.f32 %v2657, %v2773
    %v2775 = vpop.f32.mrb[0].mxu0
    %v2776 = vadd.f32 %v2657, %v2775
    %2777 = vdwg.mxu0
    %vm2778 = vcmp.ge.f32.partialorder %v2744, 0.0
    %vm2779 = vcmp.ge.f32.partialorder %v2746, 0.0
    %vm2780 = vcmp.ge.f32.partialorder %v2750, 0.0
    %vm2781 = vcmp.ge.f32.partialorder %v2752, 0.0
    %vm2782 = vcmp.ge.f32.partialorder %v2756, 0.0
    %vm2783 = vcmp.ge.f32.partialorder %v2758, 0.0
    %vm2784 = vcmp.ge.f32.partialorder %v2762, 0.0
    %vm2785 = vcmp.ge.f32.partialorder %v2764, 0.0
    %vm2786 = vcmp.ge.f32.partialorder %v2768, 0.0
    %vm2787 = vcmp.ge.f32.partialorder %v2770, 0.0
    %vm2788 = vcmp.ge.f32.partialorder %v2774, 0.0
    %vm2789 = vcmp.ge.f32.partialorder %v2776, 0.0
    %2790 = vset.pattern.permute.xlu0 33
    %2791 = vperm.xlu0 %2790, %v69
    %v2792 = vpop.permute.xlu0 %2791
    %2794 = vset.pattern.permute.xlu0 33
    %2795 = vperm.xlu0 %2794, %v70
    %v2796 = vpop.permute.xlu0 %2795
    %2798 = vset.pattern.permute.xlu0 33
    %2799 = vperm.xlu0 %2798, %v71
    %v2800 = vpop.permute.xlu0 %2799
    %2802 = vset.pattern.permute.xlu0 33
    %2803 = vperm.xlu0 %2802, %v72
    %v2804 = vpop.permute.xlu0 %2803
    %2806 = vset.pattern.permute.xlu0 33
    %2807 = vperm.xlu0 %2806, %v73
    %v2808 = vpop.permute.xlu0 %2807
    %2810 = vset.pattern.permute.xlu0 33
    %2811 = vperm.xlu0 %2810, %v74
    %v2812 = vpop.permute.xlu0 %2811
    %v2814 = vmul.f32 %v2744, %v2792
    %v2815 = vmul.f32 %v2746, %v2792
    %v2816 = vmul.f32 %v2750, %v2796
    %v2817 = vmul.f32 %v2752, %v2796
    %v2818 = vmul.f32 %v2756, %v2800
    %v2819 = vmul.f32 %v2758, %v2800
    %v2820 = vmul.f32 %v2762, %v2804
    %v2821 = vmul.f32 %v2764, %v2804
    %v2822 = vmul.f32 %v2768, %v2808
    %v2823 = vmul.f32 %v2770, %v2808
    %v2824 = vmul.f32 %v2774, %v2812
    %v2825 = vmul.f32 %v2776, %v2812
    %v2826 = vsel %vm2778, %v2744, %v2814
    %v2827 = vsel %vm2779, %v2746, %v2815
    %v2828 = vsel %vm2780, %v2750, %v2816
    %v2829 = vsel %vm2781, %v2752, %v2817
    %v2830 = vsel %vm2782, %v2756, %v2818
    %v2831 = vsel %vm2783, %v2758, %v2819
    %v2832 = vsel %vm2784, %v2762, %v2820
    %v2833 = vsel %vm2785, %v2764, %v2821
    %v2834 = vsel %vm2786, %v2768, %v2822
    %v2835 = vsel %vm2787, %v2770, %v2823
    %v2836 = vsel %vm2788, %v2774, %v2824
    %v2837 = vsel %vm2789, %v2776, %v2825
    %2838 = vset.pattern.permute.xlu0 36
    %2839 = vperm.xlu0 %2838, %v69
    %v2840 = vpop.permute.xlu0 %2839
    %2842 = vset.pattern.permute.xlu0 36
    %2843 = vperm.xlu0 %2842, %v70
    %v2844 = vpop.permute.xlu0 %2843
    %2846 = vset.pattern.permute.xlu0 36
    %2847 = vperm.xlu0 %2846, %v71
    %v2848 = vpop.permute.xlu0 %2847
    %2850 = vset.pattern.permute.xlu0 36
    %2851 = vperm.xlu0 %2850, %v72
    %v2852 = vpop.permute.xlu0 %2851
    %2854 = vset.pattern.permute.xlu0 36
    %2855 = vperm.xlu0 %2854, %v73
    %v2856 = vpop.permute.xlu0 %2855
    %2858 = vset.pattern.permute.xlu0 36
    %2859 = vperm.xlu0 %2858, %v74
    %v2860 = vpop.permute.xlu0 %2859
    %v2862 = vmul.f32 %v2826, %v2840
    %v2863 = vmul.f32 %v2827, %v2840
    %v2864 = vmul.f32 %v2828, %v2844
    %v2865 = vmul.f32 %v2829, %v2844
    %v2866 = vmul.f32 %v2830, %v2848
    %v2867 = vmul.f32 %v2831, %v2848
    %v2868 = vmul.f32 %v2832, %v2852
    %v2869 = vmul.f32 %v2833, %v2852
    %v2870 = vmul.f32 %v2834, %v2856
    %v2871 = vmul.f32 %v2835, %v2856
    %v2872 = vmul.f32 %v2836, %v2860
    %v2873 = vmul.f32 %v2837, %v2860
    %2874 = vset.pattern.permute.xlu0 37
    %2875 = vperm.xlu0 %2874, %v69
    %v2876 = vpop.permute.xlu0 %2875
    %2878 = vset.pattern.permute.xlu0 37
    %2879 = vperm.xlu0 %2878, %v70
    %v2880 = vpop.permute.xlu0 %2879
    %2882 = vset.pattern.permute.xlu0 37
    %2883 = vperm.xlu0 %2882, %v71
    %v2884 = vpop.permute.xlu0 %2883
    %2886 = vset.pattern.permute.xlu0 37
    %2887 = vperm.xlu0 %2886, %v72
    %v2888 = vpop.permute.xlu0 %2887
    %2890 = vset.pattern.permute.xlu0 37
    %2891 = vperm.xlu0 %2890, %v73
    %v2892 = vpop.permute.xlu0 %2891
    %2894 = vset.pattern.permute.xlu0 37
    %2895 = vperm.xlu0 %2894, %v74
    %v2896 = vpop.permute.xlu0 %2895
    %v2898 = vadd.f32 %v2862, %v2876
    %v2899 = vadd.f32 %v2863, %v2876
    %v2900 = vadd.f32 %v2864, %v2880
    %v2901 = vadd.f32 %v2865, %v2880
    %v2902 = vadd.f32 %v2866, %v2884
    %v2903 = vadd.f32 %v2867, %v2884
    %v2904 = vadd.f32 %v2868, %v2888
    %v2905 = vadd.f32 %v2869, %v2888
    %v2906 = vadd.f32 %v2870, %v2892
    %v2907 = vadd.f32 %v2871, %v2892
    %v2908 = vadd.f32 %v2872, %v2896
    %v2909 = vadd.f32 %v2873, %v2896
    %vm2910 = vcmp.ge.f32.partialorder %v2898, 0.0
    %vm2911 = vcmp.ge.f32.partialorder %v2899, 0.0
    %vm2912 = vcmp.ge.f32.partialorder %v2900, 0.0
    %vm2913 = vcmp.ge.f32.partialorder %v2901, 0.0
    %vm2914 = vcmp.ge.f32.partialorder %v2902, 0.0
    %vm2915 = vcmp.ge.f32.partialorder %v2903, 0.0
    %vm2916 = vcmp.ge.f32.partialorder %v2904, 0.0
    %vm2917 = vcmp.ge.f32.partialorder %v2905, 0.0
    %vm2918 = vcmp.ge.f32.partialorder %v2906, 0.0
    %vm2919 = vcmp.ge.f32.partialorder %v2907, 0.0
    %vm2920 = vcmp.ge.f32.partialorder %v2908, 0.0
    %vm2921 = vcmp.ge.f32.partialorder %v2909, 0.0
    %2922 = vset.pattern.permute.xlu0 38
    %2923 = vperm.xlu0 %2922, %v69
    %v2924 = vpop.permute.xlu0 %2923
    %2926 = vset.pattern.permute.xlu0 38
    %2927 = vperm.xlu0 %2926, %v70
    %v2928 = vpop.permute.xlu0 %2927
    %2930 = vset.pattern.permute.xlu0 38
    %2931 = vperm.xlu0 %2930, %v71
    %v2932 = vpop.permute.xlu0 %2931
    %2934 = vset.pattern.permute.xlu0 38
    %2935 = vperm.xlu0 %2934, %v72
    %v2936 = vpop.permute.xlu0 %2935
    %2938 = vset.pattern.permute.xlu0 38
    %2939 = vperm.xlu0 %2938, %v73
    %v2940 = vpop.permute.xlu0 %2939
    %2942 = vset.pattern.permute.xlu0 38
    %2943 = vperm.xlu0 %2942, %v74
    %v2944 = vpop.permute.xlu0 %2943
    %v2946 = vmul.f32 %v2898, %v2924
    %v2947 = vmul.f32 %v2899, %v2924
    %v2948 = vmul.f32 %v2900, %v2928
    %v2949 = vmul.f32 %v2901, %v2928
    %v2950 = vmul.f32 %v2902, %v2932
    %v2951 = vmul.f32 %v2903, %v2932
    %v2952 = vmul.f32 %v2904, %v2936
    %v2953 = vmul.f32 %v2905, %v2936
    %v2954 = vmul.f32 %v2906, %v2940
    %v2955 = vmul.f32 %v2907, %v2940
    %v2956 = vmul.f32 %v2908, %v2944
    %v2957 = vmul.f32 %v2909, %v2944
    %v2958 = vsel %vm2910, %v2898, %v2946
    %v2959 = vsel %vm2911, %v2899, %v2947
    %v2960 = vsel %vm2912, %v2900, %v2948
    %v2961 = vsel %vm2913, %v2901, %v2949
    %v2962 = vsel %vm2914, %v2902, %v2950
    %v2963 = vsel %vm2915, %v2903, %v2951
    %v2964 = vsel %vm2916, %v2904, %v2952
    %v2965 = vsel %vm2917, %v2905, %v2953
    %v2966 = vsel %vm2918, %v2906, %v2954
    %v2967 = vsel %vm2919, %v2907, %v2955
    %v2968 = vsel %vm2920, %v2908, %v2956
    %v2969 = vsel %vm2921, %v2909, %v2957
    %s2970 = scalar_lea.vmem [#allocation2], 432
    %v2971 = vld [vmem:[%s2970] sm:$0xff]
    %v2972 = vld [vmem:[%s2970 + $0x8] sm:$0xff]
    %v2973 = vld [vmem:[%s2970 + $0x10] sm:$0xff]
    %v2974 = vld [vmem:[%s2970 + $0x18] sm:$0xff]
    %v2975 = vld [vmem:[%s2970 + $0x20] sm:$0xff]
    %v2976 = vld [vmem:[%s2970 + $0x28] sm:$0xff]
    %v2978 = vsel %vm105, %v2971, 0
    %v2981 = vsel %vm105, %v2972, 0
    %v2984 = vsel %vm105, %v2973, 0
    %v2987 = vsel %vm105, %v2974, 0
    %v2990 = vsel %vm105, %v2975, 0
    %v2993 = vsel %vm105, %v2976, 0
    %2995 = vmatprep.subr.mxu0 %v2959
    %2996 = vmatpush1.msra.mxu0 %v2958
    %2997 = vmatprep.subr.mxu0 %v2961
    %2998 = vmatpush1.msra.mxu0 %v2960
    %2999 = vmatprep.subr.mxu0 %v2963
    %3000 = vmatpush1.msra.mxu0 %v2962
    %3001 = vmatprep.subr.mxu0 %v2965
    %3002 = vmatpush1.msra.mxu0 %v2964
    %3003 = vmatprep.subr.mxu0 %v2967
    %3004 = vmatpush1.msra.mxu0 %v2966
    %3005 = vmatprep.subr.mxu0 %v2969
    %3006 = vmatpush1.msra.mxu0 %v2968
    %3007 = vmatprep.subr.mxu0 0.0
    %3008 = vmatpush1.msra.mxu0 0.0
    %3009 = vmatprep.subr.mxu0 0.0
    %3010 = vmatpush1.msra.mxu0 0.0
    %3011 = vmatprep.subr.mxu0 0.0
    %3012 = vmatpush1.msra.mxu0 0.0
    %3013 = vmatprep.subr.mxu0 0.0
    %3014 = vmatpush1.msra.mxu0 0.0
    %3015 = vmatprep.subr.mxu0 0.0
    %3016 = vmatpush1.msra.mxu0 0.0
    %3017 = vmatprep.subr.mxu0 0.0
    %3018 = vmatpush1.msra.mxu0 0.0
    %3019 = vmatprep.subr.mxu0 0.0
    %3020 = vmatpush1.msra.mxu0 0.0
    %3021 = vmatprep.subr.mxu0 0.0
    %3022 = vmatpush1.msra.mxu0 0.0
    %3023 = vmatprep.subr.mxu0 0.0
    %3024 = vmatpush1.msra.mxu0 0.0
    %3025 = vmatprep.subr.mxu0 0.0
    %3026 = vmatpush1.msra.mxu0 0.0
    %3027 = vmatprep.subr.mxu0 0.0
    %3028 = vmatpush1.msra.mxu0 0.0
    %3029 = vmatprep.subr.mxu0 0.0
    %3030 = vmatpush1.msra.mxu0 0.0
    %3031 = vmatprep.subr.mxu0 0.0
    %3032 = vmatpush1.msra.mxu0 0.0
    %3033 = vmatprep.subr.mxu0 0.0
    %3034 = vmatpush1.msra.mxu0 0.0
    %3035 = vmatprep.subr.mxu0 0.0
    %3036 = vmatpush1.msra.mxu0 0.0
    %3037 = vmatprep.subr.mxu0 0.0
    %3038 = vmatpush1.msra.mxu0 0.0
    %3039 = vmatprep.subr.mxu0 0.0
    %3040 = vmatpush1.msra.mxu0 0.0
    %3041 = vmatprep.subr.mxu0 0.0
    %3042 = vmatpush1.msra.mxu0 0.0
    %3043 = vmatprep.subr.mxu0 0.0
    %3044 = vmatpush1.msra.mxu0 0.0
    %3045 = vmatprep.subr.mxu0 0.0
    %3046 = vmatpush1.msra.mxu0 0.0
    %3047 = vmatprep.subr.mxu0 0.0
    %3048 = vmatpush1.msra.mxu0 0.0
    %3049 = vmatprep.subr.mxu0 0.0
    %3050 = vmatpush1.msra.mxu0 0.0
    %3051 = vmatprep.subr.mxu0 0.0
    %3052 = vmatpush1.msra.mxu0 0.0
    %3053 = vmatprep.subr.mxu0 0.0
    %3054 = vmatpush1.msra.mxu0 0.0
    %3055 = vmatprep.subr.mxu0 0.0
    %3056 = vmatpush1.msra.mxu0 0.0
    %3057 = vmatprep.subr.mxu0 0.0
    %3058 = vmatpush1.msra.mxu0 0.0
    %3059 = vmatprep.mubr.f32.mxu0 0.0
    %3060 = vmatmul.mubr.f32.gmra.mrb[0].mxu0 %v2978
    %v3061 = vpop.f32.mrb[0].mxu0
    %v3062 = vadd.f32 0.0, %v3061
    %v3063 = vpop.f32.mrb[0].mxu0
    %v3064 = vadd.f32 0.0, %v3063
    %3065 = vmatprep.mubr.f32.mxu0 0.0
    %3066 = vmatmul.mubr.f32.gmra.mrb[0].mxu0 %v2981
    %v3067 = vpop.f32.mrb[0].mxu0
    %v3068 = vadd.f32 0.0, %v3067
    %v3069 = vpop.f32.mrb[0].mxu0
    %v3070 = vadd.f32 0.0, %v3069
    %3071 = vmatprep.mubr.f32.mxu0 0.0
    %3072 = vmatmul.mubr.f32.gmra.mrb[0].mxu0 %v2984
    %v3073 = vpop.f32.mrb[0].mxu0
    %v3074 = vadd.f32 0.0, %v3073
    %v3075 = vpop.f32.mrb[0].mxu0
    %v3076 = vadd.f32 0.0, %v3075
    %3077 = vmatprep.mubr.f32.mxu0 0.0
    %3078 = vmatmul.mubr.f32.gmra.mrb[0].mxu0 %v2987
    %v3079 = vpop.f32.mrb[0].mxu0
    %v3080 = vadd.f32 0.0, %v3079
    %v3081 = vpop.f32.mrb[0].mxu0
    %v3082 = vadd.f32 0.0, %v3081
    %3083 = vmatprep.mubr.f32.mxu0 0.0
    %3084 = vmatmul.mubr.f32.gmra.mrb[0].mxu0 %v2990
    %v3085 = vpop.f32.mrb[0].mxu0
    %v3086 = vadd.f32 0.0, %v3085
    %v3087 = vpop.f32.mrb[0].mxu0
    %v3088 = vadd.f32 0.0, %v3087
    %3089 = vmatprep.mubr.f32.mxu0 0.0
    %3090 = vmatmul.mubr.f32.gmra.mrb[0].mxu0 %v2993
    %v3091 = vpop.f32.mrb[0].mxu0
    %v3092 = vadd.f32 0.0, %v3091
    %v3093 = vpop.f32.mrb[0].mxu0
    %v3094 = vadd.f32 0.0, %v3093
    %3095 = vdwg.mxu0
    %v3096 = vadd.f32 %v2616, %v3062
    %v3097 = vadd.f32 %v2617, %v3064
    %v3098 = vadd.f32 %v2618, %v3068
    %v3099 = vadd.f32 %v2619, %v3070
    %v3100 = vadd.f32 %v2620, %v3074
    %v3101 = vadd.f32 %v2621, %v3076
    %v3102 = vadd.f32 %v2622, %v3080
    %v3103 = vadd.f32 %v2623, %v3082
    %v3104 = vadd.f32 %v2624, %v3086
    %v3105 = vadd.f32 %v2625, %v3088
    %v3106 = vadd.f32 %v2626, %v3092
    %v3107 = vadd.f32 %v2627, %v3094
    %3108 = vset.pattern.permute.xlu0 39
    %3109 = vperm.xlu0 %3108, %v69
    %v3110 = vpop.permute.xlu0 %3109
    %3112 = vset.pattern.permute.xlu0 39
    %3113 = vperm.xlu0 %3112, %v70
    %v3114 = vpop.permute.xlu0 %3113
    %3116 = vset.pattern.permute.xlu0 39
    %3117 = vperm.xlu0 %3116, %v71
    %v3118 = vpop.permute.xlu0 %3117
    %3120 = vset.pattern.permute.xlu0 39
    %3121 = vperm.xlu0 %3120, %v72
    %v3122 = vpop.permute.xlu0 %3121
    %3124 = vset.pattern.permute.xlu0 39
    %3125 = vperm.xlu0 %3124, %v73
    %v3126 = vpop.permute.xlu0 %3125
    %3128 = vset.pattern.permute.xlu0 39
    %3129 = vperm.xlu0 %3128, %v74
    %v3130 = vpop.permute.xlu0 %3129
    %v3132 = vadd.f32 %v3096, %v3110
    %v3133 = vadd.f32 %v3097, %v3110
    %v3134 = vadd.f32 %v3098, %v3114
    %v3135 = vadd.f32 %v3099, %v3114
    %v3136 = vadd.f32 %v3100, %v3118
    %v3137 = vadd.f32 %v3101, %v3118
    %v3138 = vadd.f32 %v3102, %v3122
    %v3139 = vadd.f32 %v3103, %v3122
    %v3140 = vadd.f32 %v3104, %v3126
    %v3141 = vadd.f32 %v3105, %v3126
    %v3142 = vadd.f32 %v3106, %v3130
    %v3143 = vadd.f32 %v3107, %v3130
    %s3144 = scalar_lea.vmem [#allocation2], 480
    %v3145 = vld [vmem:[%s3144] sm:$0xff]
    %v3146 = vld [vmem:[%s3144 + $0x8] sm:$0xff]
    %v3147 = vld [vmem:[%s3144 + $0x10] sm:$0xff]
    %v3148 = vld [vmem:[%s3144 + $0x18] sm:$0xff]
    %v3149 = vld [vmem:[%s3144 + $0x20] sm:$0xff]
    %v3150 = vld [vmem:[%s3144 + $0x28] sm:$0xff]
    %3151 = vset.pattern.permute.xlu0 40
    %3152 = vperm.xlu0 %3151, %v69
    %v3153 = vpop.permute.xlu0 %3152
    %3155 = vset.pattern.permute.xlu0 40
    %3156 = vperm.xlu0 %3155, %v70
    %v3157 = vpop.permute.xlu0 %3156
    %3159 = vset.pattern.permute.xlu0 40
    %3160 = vperm.xlu0 %3159, %v71
    %v3161 = vpop.permute.xlu0 %3160
    %3163 = vset.pattern.permute.xlu0 40
    %3164 = vperm.xlu0 %3163, %v72
    %v3165 = vpop.permute.xlu0 %3164
    %3167 = vset.pattern.permute.xlu0 40
    %3168 = vperm.xlu0 %3167, %v73
    %v3169 = vpop.permute.xlu0 %3168
    %3171 = vset.pattern.permute.xlu0 40
    %3172 = vperm.xlu0 %3171, %v74
    %v3173 = vpop.permute.xlu0 %3172
    %v3176 = vsel %vm105, %v3145, 0
    %v3179 = vsel %vm105, %v3146, 0
    %v3182 = vsel %vm105, %v3147, 0
    %v3185 = vsel %vm105, %v3148, 0
    %v3188 = vsel %vm105, %v3149, 0
    %v3191 = vsel %vm105, %v3150, 0
    %3193 = vmatprep.subr.mxu0 %v3133
    %3194 = vmatpush1.msra.mxu0 %v3132
    %3195 = vmatprep.subr.mxu0 %v3135
    %3196 = vmatpush1.msra.mxu0 %v3134
    %3197 = vmatprep.subr.mxu0 %v3137
    %3198 = vmatpush1.msra.mxu0 %v3136
    %3199 = vmatprep.subr.mxu0 %v3139
    %3200 = vmatpush1.msra.mxu0 %v3138
    %3201 = vmatprep.subr.mxu0 %v3141
    %3202 = vmatpush1.msra.mxu0 %v3140
    %3203 = vmatprep.subr.mxu0 %v3143
    %3204 = vmatpush1.msra.mxu0 %v3142
    %3205 = vmatprep.subr.mxu0 0.0
    %3206 = vmatpush1.msra.mxu0 0.0
    %3207 = vmatprep.subr.mxu0 0.0
    %3208 = vmatpush1.msra.mxu0 0.0
    %3209 = vmatprep.subr.mxu0 0.0
    %3210 = vmatpush1.msra.mxu0 0.0
    %3211 = vmatprep.subr.mxu0 0.0
    %3212 = vmatpush1.msra.mxu0 0.0
    %3213 = vmatprep.subr.mxu0 0.0
    %3214 = vmatpush1.msra.mxu0 0.0
    %3215 = vmatprep.subr.mxu0 0.0
    %3216 = vmatpush1.msra.mxu0 0.0
    %3217 = vmatprep.subr.mxu0 0.0
    %3218 = vmatpush1.msra.mxu0 0.0
    %3219 = vmatprep.subr.mxu0 0.0
    %3220 = vmatpush1.msra.mxu0 0.0
    %3221 = vmatprep.subr.mxu0 0.0
    %3222 = vmatpush1.msra.mxu0 0.0
    %3223 = vmatprep.subr.mxu0 0.0
    %3224 = vmatpush1.msra.mxu0 0.0
    %3225 = vmatprep.subr.mxu0 0.0
    %3226 = vmatpush1.msra.mxu0 0.0
    %3227 = vmatprep.subr.mxu0 0.0
    %3228 = vmatpush1.msra.mxu0 0.0
    %3229 = vmatprep.subr.mxu0 0.0
    %3230 = vmatpush1.msra.mxu0 0.0
    %3231 = vmatprep.subr.mxu0 0.0
    %3232 = vmatpush1.msra.mxu0 0.0
    %3233 = vmatprep.subr.mxu0 0.0
    %3234 = vmatpush1.msra.mxu0 0.0
    %3235 = vmatprep.subr.mxu0 0.0
    %3236 = vmatpush1.msra.mxu0 0.0
    %3237 = vmatprep.subr.mxu0 0.0
    %3238 = vmatpush1.msra.mxu0 0.0
    %3239 = vmatprep.subr.mxu0 0.0
    %3240 = vmatpush1.msra.mxu0 0.0
    %3241 = vmatprep.subr.mxu0 0.0
    %3242 = vmatpush1.msra.mxu0 0.0
    %3243 = vmatprep.subr.mxu0 0.0
    %3244 = vmatpush1.msra.mxu0 0.0
    %3245 = vmatprep.subr.mxu0 0.0
    %3246 = vmatpush1.msra.mxu0 0.0
    %3247 = vmatprep.subr.mxu0 0.0
    %3248 = vmatpush1.msra.mxu0 0.0
    %3249 = vmatprep.subr.mxu0 0.0
    %3250 = vmatpush1.msra.mxu0 0.0
    %3251 = vmatprep.subr.mxu0 0.0
    %3252 = vmatpush1.msra.mxu0 0.0
    %3253 = vmatprep.subr.mxu0 0.0
    %3254 = vmatpush1.msra.mxu0 0.0
    %3255 = vmatprep.subr.mxu0 0.0
    %3256 = vmatpush1.msra.mxu0 0.0
    %3257 = vmatprep.mubr.f32.mxu0 0.0
    %3258 = vmatmul.mubr.f32.gmra.mrb[0].mxu0 %v3176
    %v3259 = vpop.f32.mrb[0].mxu0
    %v3260 = vadd.f32 %v3153, %v3259
    %v3261 = vpop.f32.mrb[0].mxu0
    %v3262 = vadd.f32 %v3153, %v3261
    %3263 = vmatprep.mubr.f32.mxu0 0.0
    %3264 = vmatmul.mubr.f32.gmra.mrb[0].mxu0 %v3179
    %v3265 = vpop.f32.mrb[0].mxu0
    %v3266 = vadd.f32 %v3157, %v3265
    %v3267 = vpop.f32.mrb[0].mxu0
    %v3268 = vadd.f32 %v3157, %v3267
    %3269 = vmatprep.mubr.f32.mxu0 0.0
    %3270 = vmatmul.mubr.f32.gmra.mrb[0].mxu0 %v3182
    %v3271 = vpop.f32.mrb[0].mxu0
    %v3272 = vadd.f32 %v3161, %v3271
    %v3273 = vpop.f32.mrb[0].mxu0
    %v3274 = vadd.f32 %v3161, %v3273
    %3275 = vmatprep.mubr.f32.mxu0 0.0
    %3276 = vmatmul.mubr.f32.gmra.mrb[0].mxu0 %v3185
    %v3277 = vpop.f32.mrb[0].mxu0
    %v3278 = vadd.f32 %v3165, %v3277
    %v3279 = vpop.f32.mrb[0].mxu0
    %v3280 = vadd.f32 %v3165, %v3279
    %3281 = vmatprep.mubr.f32.mxu0 0.0
    %3282 = vmatmul.mubr.f32.gmra.mrb[0].mxu0 %v3188
    %v3283 = vpop.f32.mrb[0].mxu0
    %v3284 = vadd.f32 %v3169, %v3283
    %v3285 = vpop.f32.mrb[0].mxu0
    %v3286 = vadd.f32 %v3169, %v3285
    %3287 = vmatprep.mubr.f32.mxu0 0.0
    %3288 = vmatmul.mubr.f32.gmra.mrb[0].mxu0 %v3191
    %v3289 = vpop.f32.mrb[0].mxu0
    %v3290 = vadd.f32 %v3173, %v3289
    %v3291 = vpop.f32.mrb[0].mxu0
    %v3292 = vadd.f32 %v3173, %v3291
    %3293 = vdwg.mxu0
    %vm3294 = vcmp.ge.f32.partialorder %v3260, 0.0
    %vm3295 = vcmp.ge.f32.partialorder %v3262, 0.0
    %vm3296 = vcmp.ge.f32.partialorder %v3266, 0.0
    %vm3297 = vcmp.ge.f32.partialorder %v3268, 0.0
    %vm3298 = vcmp.ge.f32.partialorder %v3272, 0.0
    %vm3299 = vcmp.ge.f32.partialorder %v3274, 0.0
    %vm3300 = vcmp.ge.f32.partialorder %v3278, 0.0
    %vm3301 = vcmp.ge.f32.partialorder %v3280, 0.0
    %vm3302 = vcmp.ge.f32.partialorder %v3284, 0.0
    %vm3303 = vcmp.ge.f32.partialorder %v3286, 0.0
    %vm3304 = vcmp.ge.f32.partialorder %v3290, 0.0
    %vm3305 = vcmp.ge.f32.partialorder %v3292, 0.0
    %3306 = vset.pattern.permute.xlu0 41
    %3307 = vperm.xlu0 %3306, %v69
    %v3308 = vpop.permute.xlu0 %3307
    %3310 = vset.pattern.permute.xlu0 41
    %3311 = vperm.xlu0 %3310, %v70
    %v3312 = vpop.permute.xlu0 %3311
    %3314 = vset.pattern.permute.xlu0 41
    %3315 = vperm.xlu0 %3314, %v71
    %v3316 = vpop.permute.xlu0 %3315
    %3318 = vset.pattern.permute.xlu0 41
    %3319 = vperm.xlu0 %3318, %v72
    %v3320 = vpop.permute.xlu0 %3319
    %3322 = vset.pattern.permute.xlu0 41
    %3323 = vperm.xlu0 %3322, %v73
    %v3324 = vpop.permute.xlu0 %3323
    %3326 = vset.pattern.permute.xlu0 41
    %3327 = vperm.xlu0 %3326, %v74
    %v3328 = vpop.permute.xlu0 %3327
    %v3330 = vmul.f32 %v3260, %v3308
    %v3331 = vmul.f32 %v3262, %v3308
    %v3332 = vmul.f32 %v3266, %v3312
    %v3333 = vmul.f32 %v3268, %v3312
    %v3334 = vmul.f32 %v3272, %v3316
    %v3335 = vmul.f32 %v3274, %v3316
    %v3336 = vmul.f32 %v3278, %v3320
    %v3337 = vmul.f32 %v3280, %v3320
    %v3338 = vmul.f32 %v3284, %v3324
    %v3339 = vmul.f32 %v3286, %v3324
    %v3340 = vmul.f32 %v3290, %v3328
    %v3341 = vmul.f32 %v3292, %v3328
    %v3342 = vsel %vm3294, %v3260, %v3330
    %v3343 = vsel %vm3295, %v3262, %v3331
    %v3344 = vsel %vm3296, %v3266, %v3332
    %v3345 = vsel %vm3297, %v3268, %v3333
    %v3346 = vsel %vm3298, %v3272, %v3334
    %v3347 = vsel %vm3299, %v3274, %v3335
    %v3348 = vsel %vm3300, %v3278, %v3336
    %v3349 = vsel %vm3301, %v3280, %v3337
    %v3350 = vsel %vm3302, %v3284, %v3338
    %v3351 = vsel %vm3303, %v3286, %v3339
    %v3352 = vsel %vm3304, %v3290, %v3340
    %v3353 = vsel %vm3305, %v3292, %v3341
    %3354 = vset.pattern.permute.xlu0 44
    %3355 = vperm.xlu0 %3354, %v69
    %v3356 = vpop.permute.xlu0 %3355
    %3358 = vset.pattern.permute.xlu0 44
    %3359 = vperm.xlu0 %3358, %v70
    %v3360 = vpop.permute.xlu0 %3359
    %3362 = vset.pattern.permute.xlu0 44
    %3363 = vperm.xlu0 %3362, %v71
    %v3364 = vpop.permute.xlu0 %3363
    %3366 = vset.pattern.permute.xlu0 44
    %3367 = vperm.xlu0 %3366, %v72
    %v3368 = vpop.permute.xlu0 %3367
    %3370 = vset.pattern.permute.xlu0 44
    %3371 = vperm.xlu0 %3370, %v73
    %v3372 = vpop.permute.xlu0 %3371
    %3374 = vset.pattern.permute.xlu0 44
    %3375 = vperm.xlu0 %3374, %v74
    %v3376 = vpop.permute.xlu0 %3375
    %v3378 = vmul.f32 %v3342, %v3356
    %v3379 = vmul.f32 %v3343, %v3356
    %v3380 = vmul.f32 %v3344, %v3360
    %v3381 = vmul.f32 %v3345, %v3360
    %v3382 = vmul.f32 %v3346, %v3364
    %v3383 = vmul.f32 %v3347, %v3364
    %v3384 = vmul.f32 %v3348, %v3368
    %v3385 = vmul.f32 %v3349, %v3368
    %v3386 = vmul.f32 %v3350, %v3372
    %v3387 = vmul.f32 %v3351, %v3372
    %v3388 = vmul.f32 %v3352, %v3376
    %v3389 = vmul.f32 %v3353, %v3376
    %3390 = vset.pattern.permute.xlu0 45
    %3391 = vperm.xlu0 %3390, %v69
    %v3392 = vpop.permute.xlu0 %3391
    %3394 = vset.pattern.permute.xlu0 45
    %3395 = vperm.xlu0 %3394, %v70
    %v3396 = vpop.permute.xlu0 %3395
    %3398 = vset.pattern.permute.xlu0 45
    %3399 = vperm.xlu0 %3398, %v71
    %v3400 = vpop.permute.xlu0 %3399
    %3402 = vset.pattern.permute.xlu0 45
    %3403 = vperm.xlu0 %3402, %v72
    %v3404 = vpop.permute.xlu0 %3403
    %3406 = vset.pattern.permute.xlu0 45
    %3407 = vperm.xlu0 %3406, %v73
    %v3408 = vpop.permute.xlu0 %3407
    %3410 = vset.pattern.permute.xlu0 45
    %3411 = vperm.xlu0 %3410, %v74
    %v3412 = vpop.permute.xlu0 %3411
    %v3414 = vadd.f32 %v3378, %v3392
    %v3415 = vadd.f32 %v3379, %v3392
    %v3416 = vadd.f32 %v3380, %v3396
    %v3417 = vadd.f32 %v3381, %v3396
    %v3418 = vadd.f32 %v3382, %v3400
    %v3419 = vadd.f32 %v3383, %v3400
    %v3420 = vadd.f32 %v3384, %v3404
    %v3421 = vadd.f32 %v3385, %v3404
    %v3422 = vadd.f32 %v3386, %v3408
    %v3423 = vadd.f32 %v3387, %v3408
    %v3424 = vadd.f32 %v3388, %v3412
    %v3425 = vadd.f32 %v3389, %v3412
    %vm3426 = vcmp.ge.f32.partialorder %v3414, 0.0
    %vm3427 = vcmp.ge.f32.partialorder %v3415, 0.0
    %vm3428 = vcmp.ge.f32.partialorder %v3416, 0.0
    %vm3429 = vcmp.ge.f32.partialorder %v3417, 0.0
    %vm3430 = vcmp.ge.f32.partialorder %v3418, 0.0
    %vm3431 = vcmp.ge.f32.partialorder %v3419, 0.0
    %vm3432 = vcmp.ge.f32.partialorder %v3420, 0.0
    %vm3433 = vcmp.ge.f32.partialorder %v3421, 0.0
    %vm3434 = vcmp.ge.f32.partialorder %v3422, 0.0
    %vm3435 = vcmp.ge.f32.partialorder %v3423, 0.0
    %vm3436 = vcmp.ge.f32.partialorder %v3424, 0.0
    %vm3437 = vcmp.ge.f32.partialorder %v3425, 0.0
    %3438 = vset.pattern.permute.xlu0 46
    %3439 = vperm.xlu0 %3438, %v69
    %v3440 = vpop.permute.xlu0 %3439
    %3442 = vset.pattern.permute.xlu0 46
    %3443 = vperm.xlu0 %3442, %v70
    %v3444 = vpop.permute.xlu0 %3443
    %3446 = vset.pattern.permute.xlu0 46
    %3447 = vperm.xlu0 %3446, %v71
    %v3448 = vpop.permute.xlu0 %3447
    %3450 = vset.pattern.permute.xlu0 46
    %3451 = vperm.xlu0 %3450, %v72
    %v3452 = vpop.permute.xlu0 %3451
    %3454 = vset.pattern.permute.xlu0 46
    %3455 = vperm.xlu0 %3454, %v73
    %v3456 = vpop.permute.xlu0 %3455
    %3458 = vset.pattern.permute.xlu0 46
    %3459 = vperm.xlu0 %3458, %v74
    %v3460 = vpop.permute.xlu0 %3459
    %v3462 = vmul.f32 %v3414, %v3440
    %v3463 = vmul.f32 %v3415, %v3440
    %v3464 = vmul.f32 %v3416, %v3444
    %v3465 = vmul.f32 %v3417, %v3444
    %v3466 = vmul.f32 %v3418, %v3448
    %v3467 = vmul.f32 %v3419, %v3448
    %v3468 = vmul.f32 %v3420, %v3452
    %v3469 = vmul.f32 %v3421, %v3452
    %v3470 = vmul.f32 %v3422, %v3456
    %v3471 = vmul.f32 %v3423, %v3456
    %v3472 = vmul.f32 %v3424, %v3460
    %v3473 = vmul.f32 %v3425, %v3460
    %v3474 = vsel %vm3426, %v3414, %v3462
    %v3475 = vsel %vm3427, %v3415, %v3463
    %v3476 = vsel %vm3428, %v3416, %v3464
    %v3477 = vsel %vm3429, %v3417, %v3465
    %v3478 = vsel %vm3430, %v3418, %v3466
    %v3479 = vsel %vm3431, %v3419, %v3467
    %v3480 = vsel %vm3432, %v3420, %v3468
    %v3481 = vsel %vm3433, %v3421, %v3469
    %v3482 = vsel %vm3434, %v3422, %v3470
    %v3483 = vsel %vm3435, %v3423, %v3471
    %v3484 = vsel %vm3436, %v3424, %v3472
    %v3485 = vsel %vm3437, %v3425, %v3473
    %s3486 = scalar_lea.vmem [#allocation2], 528
    %v3487 = vld [vmem:[%s3486] sm:$0xff]
    %v3488 = vld [vmem:[%s3486 + $0x8] sm:$0xff]
    %v3489 = vld [vmem:[%s3486 + $0x10] sm:$0xff]
    %v3490 = vld [vmem:[%s3486 + $0x18] sm:$0xff]
    %v3491 = vld [vmem:[%s3486 + $0x20] sm:$0xff]
    %v3492 = vld [vmem:[%s3486 + $0x28] sm:$0xff]
    %v3494 = vsel %vm105, %v3487, 0
    %v3497 = vsel %vm105, %v3488, 0
    %v3500 = vsel %vm105, %v3489, 0
    %v3503 = vsel %vm105, %v3490, 0
    %v3506 = vsel %vm105, %v3491, 0
    %v3509 = vsel %vm105, %v3492, 0
    %3511 = vmatprep.subr.mxu0 %v3475
    %3512 = vmatpush1.msra.mxu0 %v3474
    %3513 = vmatprep.subr.mxu0 %v3477
    %3514 = vmatpush1.msra.mxu0 %v3476
    %3515 = vmatprep.subr.mxu0 %v3479
    %3516 = vmatpush1.msra.mxu0 %v3478
    %3517 = vmatprep.subr.mxu0 %v3481
    %3518 = vmatpush1.msra.mxu0 %v3480
    %3519 = vmatprep.subr.mxu0 %v3483
    %3520 = vmatpush1.msra.mxu0 %v3482
    %3521 = vmatprep.subr.mxu0 %v3485
    %3522 = vmatpush1.msra.mxu0 %v3484
    %3523 = vmatprep.subr.mxu0 0.0
    %3524 = vmatpush1.msra.mxu0 0.0
    %3525 = vmatprep.subr.mxu0 0.0
    %3526 = vmatpush1.msra.mxu0 0.0
    %3527 = vmatprep.subr.mxu0 0.0
    %3528 = vmatpush1.msra.mxu0 0.0
    %3529 = vmatprep.subr.mxu0 0.0
    %3530 = vmatpush1.msra.mxu0 0.0
    %3531 = vmatprep.subr.mxu0 0.0
    %3532 = vmatpush1.msra.mxu0 0.0
    %3533 = vmatprep.subr.mxu0 0.0
    %3534 = vmatpush1.msra.mxu0 0.0
    %3535 = vmatprep.subr.mxu0 0.0
    %3536 = vmatpush1.msra.mxu0 0.0
    %3537 = vmatprep.subr.mxu0 0.0
    %3538 = vmatpush1.msra.mxu0 0.0
    %3539 = vmatprep.subr.mxu0 0.0
    %3540 = vmatpush1.msra.mxu0 0.0
    %3541 = vmatprep.subr.mxu0 0.0
    %3542 = vmatpush1.msra.mxu0 0.0
    %3543 = vmatprep.subr.mxu0 0.0
    %3544 = vmatpush1.msra.mxu0 0.0
    %3545 = vmatprep.subr.mxu0 0.0
    %3546 = vmatpush1.msra.mxu0 0.0
    %3547 = vmatprep.subr.mxu0 0.0
    %3548 = vmatpush1.msra.mxu0 0.0
    %3549 = vmatprep.subr.mxu0 0.0
    %3550 = vmatpush1.msra.mxu0 0.0
    %3551 = vmatprep.subr.mxu0 0.0
    %3552 = vmatpush1.msra.mxu0 0.0
    %3553 = vmatprep.subr.mxu0 0.0
    %3554 = vmatpush1.msra.mxu0 0.0
    %3555 = vmatprep.subr.mxu0 0.0
    %3556 = vmatpush1.msra.mxu0 0.0
    %3557 = vmatprep.subr.mxu0 0.0
    %3558 = vmatpush1.msra.mxu0 0.0
    %3559 = vmatprep.subr.mxu0 0.0
    %3560 = vmatpush1.msra.mxu0 0.0
    %3561 = vmatprep.subr.mxu0 0.0
    %3562 = vmatpush1.msra.mxu0 0.0
    %3563 = vmatprep.subr.mxu0 0.0
    %3564 = vmatpush1.msra.mxu0 0.0
    %3565 = vmatprep.subr.mxu0 0.0
    %3566 = vmatpush1.msra.mxu0 0.0
    %3567 = vmatprep.subr.mxu0 0.0
    %3568 = vmatpush1.msra.mxu0 0.0
    %3569 = vmatprep.subr.mxu0 0.0
    %3570 = vmatpush1.msra.mxu0 0.0
    %3571 = vmatprep.subr.mxu0 0.0
    %3572 = vmatpush1.msra.mxu0 0.0
    %3573 = vmatprep.subr.mxu0 0.0
    %3574 = vmatpush1.msra.mxu0 0.0
    %3575 = vmatprep.mubr.f32.mxu0 0.0
    %3576 = vmatmul.mubr.f32.gmra.mrb[0].mxu0 %v3494
    %v3577 = vpop.f32.mrb[0].mxu0
    %v3578 = vadd.f32 0.0, %v3577
    %v3579 = vpop.f32.mrb[0].mxu0
    %v3580 = vadd.f32 0.0, %v3579
    %3581 = vmatprep.mubr.f32.mxu0 0.0
    %3582 = vmatmul.mubr.f32.gmra.mrb[0].mxu0 %v3497
    %v3583 = vpop.f32.mrb[0].mxu0
    %v3584 = vadd.f32 0.0, %v3583
    %v3585 = vpop.f32.mrb[0].mxu0
    %v3586 = vadd.f32 0.0, %v3585
    %3587 = vmatprep.mubr.f32.mxu0 0.0
    %3588 = vmatmul.mubr.f32.gmra.mrb[0].mxu0 %v3500
    %v3589 = vpop.f32.mrb[0].mxu0
    %v3590 = vadd.f32 0.0, %v3589
    %v3591 = vpop.f32.mrb[0].mxu0
    %v3592 = vadd.f32 0.0, %v3591
    %3593 = vmatprep.mubr.f32.mxu0 0.0
    %3594 = vmatmul.mubr.f32.gmra.mrb[0].mxu0 %v3503
    %v3595 = vpop.f32.mrb[0].mxu0
    %v3596 = vadd.f32 0.0, %v3595
    %v3597 = vpop.f32.mrb[0].mxu0
    %v3598 = vadd.f32 0.0, %v3597
    %3599 = vmatprep.mubr.f32.mxu0 0.0
    %3600 = vmatmul.mubr.f32.gmra.mrb[0].mxu0 %v3506
    %v3601 = vpop.f32.mrb[0].mxu0
    %v3602 = vadd.f32 0.0, %v3601
    %v3603 = vpop.f32.mrb[0].mxu0
    %v3604 = vadd.f32 0.0, %v3603
    %3605 = vmatprep.mubr.f32.mxu0 0.0
    %3606 = vmatmul.mubr.f32.gmra.mrb[0].mxu0 %v3509
    %v3607 = vpop.f32.mrb[0].mxu0
    %v3608 = vadd.f32 0.0, %v3607
    %v3609 = vpop.f32.mrb[0].mxu0
    %v3610 = vadd.f32 0.0, %v3609
    %3611 = vdwg.mxu0
    %v3612 = vadd.f32 %v3132, %v3578
    %v3613 = vadd.f32 %v3133, %v3580
    %v3614 = vadd.f32 %v3134, %v3584
    %v3615 = vadd.f32 %v3135, %v3586
    %v3616 = vadd.f32 %v3136, %v3590
    %v3617 = vadd.f32 %v3137, %v3592
    %v3618 = vadd.f32 %v3138, %v3596
    %v3619 = vadd.f32 %v3139, %v3598
    %v3620 = vadd.f32 %v3140, %v3602
    %v3621 = vadd.f32 %v3141, %v3604
    %v3622 = vadd.f32 %v3142, %v3608
    %v3623 = vadd.f32 %v3143, %v3610
    %3624 = vset.pattern.permute.xlu0 47
    %3625 = vperm.xlu0 %3624, %v69
    %v3626 = vpop.permute.xlu0 %3625
    %3628 = vset.pattern.permute.xlu0 47
    %3629 = vperm.xlu0 %3628, %v70
    %v3630 = vpop.permute.xlu0 %3629
    %3632 = vset.pattern.permute.xlu0 47
    %3633 = vperm.xlu0 %3632, %v71
    %v3634 = vpop.permute.xlu0 %3633
    %3636 = vset.pattern.permute.xlu0 47
    %3637 = vperm.xlu0 %3636, %v72
    %v3638 = vpop.permute.xlu0 %3637
    %3640 = vset.pattern.permute.xlu0 47
    %3641 = vperm.xlu0 %3640, %v73
    %v3642 = vpop.permute.xlu0 %3641
    %3644 = vset.pattern.permute.xlu0 47
    %3645 = vperm.xlu0 %3644, %v74
    %v3646 = vpop.permute.xlu0 %3645
    %v3648 = vadd.f32 %v3612, %v3626
    %v3649 = vadd.f32 %v3613, %v3626
    %v3650 = vadd.f32 %v3614, %v3630
    %v3651 = vadd.f32 %v3615, %v3630
    %v3652 = vadd.f32 %v3616, %v3634
    %v3653 = vadd.f32 %v3617, %v3634
    %v3654 = vadd.f32 %v3618, %v3638
    %v3655 = vadd.f32 %v3619, %v3638
    %v3656 = vadd.f32 %v3620, %v3642
    %v3657 = vadd.f32 %v3621, %v3642
    %v3658 = vadd.f32 %v3622, %v3646
    %v3659 = vadd.f32 %v3623, %v3646
    %v3660 = vadd.f32 %v3648, %v3652
    %v3661 = vadd.f32 %v3649, %v3653
    %v3662 = vadd.f32 %v3650, %v3654
    %v3663 = vadd.f32 %v3651, %v3655
    %v3664 = vadd.f32 %v3660, %v3656
    %v3665 = vadd.f32 %v3661, %v3657
    %v3666 = vadd.f32 %v3662, %v3658
    %v3667 = vadd.f32 %v3663, %v3659
    %v3668 = vld [vmem:[%s3] sm:$0xff]
    %v3669 = vld [vmem:[%s3 + $0x8] sm:$0xff]
    %v3670 = vld [vmem:[%s2] sm:$0xff]
    %v3671 = vld [vmem:[%s2 + $0x8] sm:$0xff]
    %3673 = vset.pattern.permute.xlu0 48
    %3674 = vperm.xlu0 %3673, %v3670
    %v3675 = vpop.permute.xlu0 %3674
    %3678 = vset.pattern.permute.xlu0 48
    %3679 = vperm.xlu0 %3678, %v3671
    %v3680 = vpop.permute.xlu0 %3679
    %vm3682 = vcmask 130048
    %v3684 = vsel %vm3682, %v3668, 0
    %v3687 = vsel %vm3682, %v3669, 0
    %3689 = vmatprep.subr.mxu0 %v3665
    %3690 = vmatpush1.msra.mxu0 %v3664
    %3691 = vmatprep.subr.mxu0 %v3667
    %3692 = vmatpush1.msra.mxu0 %v3666
    %3693 = vmatprep.subr.mxu0 0.0
    %3694 = vmatpush1.msra.mxu0 0.0
    %3695 = vmatprep.subr.mxu0 0.0
    %3696 = vmatpush1.msra.mxu0 0.0
    %3697 = vmatprep.subr.mxu0 0.0
    %3698 = vmatpush1.msra.mxu0 0.0
    %3699 = vmatprep.subr.mxu0 0.0
    %3700 = vmatpush1.msra.mxu0 0.0
    %3701 = vmatprep.subr.mxu0 0.0
    %3702 = vmatpush1.msra.mxu0 0.0
    %3703 = vmatprep.subr.mxu0 0.0
    %3704 = vmatpush1.msra.mxu0 0.0
    %3705 = vmatprep.subr.mxu0 0.0
    %3706 = vmatpush1.msra.mxu0 0.0
    %3707 = vmatprep.subr.mxu0 0.0
    %3708 = vmatpush1.msra.mxu0 0.0
    %3709 = vmatprep.subr.mxu0 0.0
    %3710 = vmatpush1.msra.mxu0 0.0
    %3711 = vmatprep.subr.mxu0 0.0
    %3712 = vmatpush1.msra.mxu0 0.0
    %3713 = vmatprep.subr.mxu0 0.0
    %3714 = vmatpush1.msra.mxu0 0.0
    %3715 = vmatprep.subr.mxu0 0.0
    %3716 = vmatpush1.msra.mxu0 0.0
    %3717 = vmatprep.subr.mxu0 0.0
    %3718 = vmatpush1.msra.mxu0 0.0
    %3719 = vmatprep.subr.mxu0 0.0
    %3720 = vmatpush1.msra.mxu0 0.0
    %3721 = vmatprep.subr.mxu0 0.0
    %3722 = vmatpush1.msra.mxu0 0.0
    %3723 = vmatprep.subr.mxu0 0.0
    %3724 = vmatpush1.msra.mxu0 0.0
    %3725 = vmatprep.subr.mxu0 0.0
    %3726 = vmatpush1.msra.mxu0 0.0
    %3727 = vmatprep.subr.mxu0 0.0
    %3728 = vmatpush1.msra.mxu0 0.0
    %3729 = vmatprep.subr.mxu0 0.0
    %3730 = vmatpush1.msra.mxu0 0.0
    %3731 = vmatprep.subr.mxu0 0.0
    %3732 = vmatpush1.msra.mxu0 0.0
    %3733 = vmatprep.subr.mxu0 0.0
    %3734 = vmatpush1.msra.mxu0 0.0
    %3735 = vmatprep.subr.mxu0 0.0
    %3736 = vmatpush1.msra.mxu0 0.0
    %3737 = vmatprep.subr.mxu0 0.0
    %3738 = vmatpush1.msra.mxu0 0.0
    %3739 = vmatprep.subr.mxu0 0.0
    %3740 = vmatpush1.msra.mxu0 0.0
    %3741 = vmatprep.subr.mxu0 0.0
    %3742 = vmatpush1.msra.mxu0 0.0
    %3743 = vmatprep.subr.mxu0 0.0
    %3744 = vmatpush1.msra.mxu0 0.0
    %3745 = vmatprep.subr.mxu0 0.0
    %3746 = vmatpush1.msra.mxu0 0.0
    %3747 = vmatprep.subr.mxu0 0.0
    %3748 = vmatpush1.msra.mxu0 0.0
    %3749 = vmatprep.subr.mxu0 0.0
    %3750 = vmatpush1.msra.mxu0 0.0
    %3751 = vmatprep.subr.mxu0 0.0
    %3752 = vmatpush1.msra.mxu0 0.0
    %3753 = vmatprep.mubr.f32.mxu0 0.0
    %3754 = vmatmul.mubr.f32.gmra.mrb[0].mxu0 %v3684
    %v3755 = vpop.f32.mrb[0].mxu0
    %v3756 = vadd.f32 %v3675, %v3755
    %v3757 = vpop.f32.mrb[0].mxu0
    %v3758 = vadd.f32 %v3675, %v3757
    %3759 = vmatprep.mubr.f32.mxu0 0.0
    %3760 = vmatmul.mubr.f32.gmra.mrb[0].mxu0 %v3687
    %v3761 = vpop.f32.mrb[0].mxu0
    %v3762 = vadd.f32 %v3680, %v3761
    %v3763 = vpop.f32.mrb[0].mxu0
    %v3764 = vadd.f32 %v3680, %v3763
    %3765 = vdwg.mxu0
    %3766 = vst [vmem:[%s4] sm:$0xff] %v3756
    %3767 = vst [vmem:[%s4 + $0x8] sm:$0xff] %v3762
    %s3768 = scalar_lea.vmem %s4, 16
    %3769 = vst [vmem:[%s3768] sm:$0xff] %v3758
    %3770 = vst [vmem:[%s3768 + $0x8] sm:$0xff] %v3764
    // Predicated region
    $region22: #{mff_forward_pallas.1} parent=1 // pred_check
      _
    $region23: #{mff_forward_pallas.1} parent=1 // pred_check_branch
      %3772 = sbr.rel (0) target = $region25
    $region24: #{mff_forward_pallas.1} parent=1 // pred_region
      _
    $region25: #{mff_forward_pallas.1} parent=1 // pred_fallthru
      _
    // Predicated region
    $region26: #{mff_forward_pallas.1} parent=1 // pred_check
      _
    $region27: #{mff_forward_pallas.1} parent=1 // pred_check_branch
      %3774 = sbr.rel (0) target = $region29
    $region28: #{mff_forward_pallas.1} parent=1 // pred_region
      _
    $region29: #{mff_forward_pallas.1} parent=1 // pred_fallthru
      _
    %3775 = vsyncpa [#allocation3], 1

</llo_original>
